<compile_context>
chip_gen: v7x
topology: tpu7x:2x2x1
jax: 0.10.0
libtpu: 0.0.40
codegen_flags: <defaults>
</compile_context>

<pallas_src>
import jax
import jax.numpy as jnp
import numpy as np
from jax.experimental import pallas as pl
from jax.experimental.pallas import tpu as pltpu

IMG = 28
D_IN = IMG * IMG            # 784
D_IN_PAD = 896              # 7 * 128: lane-aligned fc1 contraction dim
D_H1 = 512
D_H2 = 256
D_H3 = 128
D_OUT = 10
D_OUT_PAD = 128             # lane-dense padded output width


def _round_up(x, m):
    return ((x + m - 1) // m) * m


# ----------------------------- Pallas kernel --------------------------------

def deep_mlp_kernel(x_ref, w1_ref, b1_ref, w2_ref, b2_ref,
                    w3_ref, b3_ref, w4_ref, b4_ref, o_ref):
    """Fused fc1+ReLU -> fc2+ReLU -> fc3+ReLU -> fc4 for one batch tile.

    x_ref : (TB, 896)  bf16 flattened input tile (cols 784..895 are zero)
    wN_ref: (in, out)  bf16 pre-transposed weights (resident across grid)
    bN_ref: (1, out)   f32 biases
    o_ref : (TB, 128)  f32 fc4 output padded to 128 lanes (cols 10..127 = 0)

    All four matmuls run on the MXU in bf16 with f32 accumulation.
    """
    h = jnp.dot(x_ref[...], w1_ref[...], preferred_element_type=jnp.float32)
    h = jnp.maximum(h + b1_ref[...], 0.0)
    h = jnp.dot(h.astype(jnp.bfloat16), w2_ref[...],
                preferred_element_type=jnp.float32)
    h = jnp.maximum(h + b2_ref[...], 0.0)
    h = jnp.dot(h.astype(jnp.bfloat16), w3_ref[...],
                preferred_element_type=jnp.float32)
    h = jnp.maximum(h + b3_ref[...], 0.0)
    o_ref[...] = jnp.dot(h.astype(jnp.bfloat16), w4_ref[...],
                         preferred_element_type=jnp.float32) + b4_ref[...]


# --------------------------- one-time preprocessing --------------------------
# (hoisted out of the per-forward path: pure weight re-layout, no hot compute)

def preprocess_params(params):
    """Transpose weights to (in, out), pad fc1 rows 784->896 and fc4 cols
    10->128, and store weights as bf16 (MXU-native; halves weight DMA).
    Biases stay f32 (tiny; added to the f32 accumulator)."""
    w1, b1, w2, b2, w3, b3, w4, b4 = params
    f32, bf16 = jnp.float32, jnp.bfloat16
    w1t = (jnp.zeros((D_IN_PAD, D_H1), f32)
           .at[:D_IN, :].set(jnp.asarray(w1, f32).T)).astype(bf16)   # (896,512)
    w2t = jnp.asarray(w2, f32).T.astype(bf16)                        # (512,256)
    w3t = jnp.asarray(w3, f32).T.astype(bf16)                        # (256,128)
    w4p = (jnp.zeros((D_H3, D_OUT_PAD), f32)
           .at[:, :D_OUT].set(jnp.asarray(w4, f32).T)).astype(bf16)  # (128,128)
    b1r = jnp.asarray(b1, f32).reshape(1, D_H1)
    b2r = jnp.asarray(b2, f32).reshape(1, D_H2)
    b3r = jnp.asarray(b3, f32).reshape(1, D_H3)
    b4p = jnp.zeros((1, D_OUT_PAD), f32).at[:, :D_OUT].set(jnp.asarray(b4, f32))
    return (w1t, b1r, w2t, b2r, w3t, b3r, w4p, b4p)


# ------------------------------ forward wrapper ------------------------------

def _const_idx(i):
    return (0, 0)


def _resident_spec(shape, single_buffer):
    # Constant-index inputs stay resident in VMEM across grid steps; the
    # second pipeline buffer for them is pure VMEM waste -> single-buffer.
    if single_buffer:
        return pl.BlockSpec(shape, _const_idx, pipeline_mode=pl.Buffered(1))
    return pl.BlockSpec(shape, _const_idx)


def _batch_tiling(B):
    """Pick (TB, Bp): 16-row-aligned tiles, cap 256, >=2 grid steps for B>16
    (so both v7x TensorCores get work for mid-size batches)."""
    if B <= 16:
        TB = _round_up(max(B, 8), 8)            # single tile == full array
        return TB, TB
    TB = min(256, _round_up(-(-B // 2), 16))     # at least 2 tiles
    return TB, _round_up(B, TB)


def deep_forward(x, prep, *, single_buffer_weights=True):
    """x: (B, 1, 28, 28) (or (B, 784)) float32; prep = preprocess_params(...)."""
    w1t, b1r, w2t, b2r, w3t, b3r, w4p, b4p = prep
    B = x.shape[0]
    TB, Bp = _batch_tiling(B)

    # Single wrapper-side op: flatten, cast to bf16 (halves input DMA), and
    # pad batch -> Bp and K 784 -> 896 together (one copy, not two).
    flat = x.reshape(B, D_IN).astype(jnp.bfloat16)
    flat = jnp.pad(flat, ((0, Bp - B), (0, D_IN_PAD - D_IN)))

    grid = (Bp // TB,)

    cost = pl.CostEstimate(
        flops=2 * Bp * (D_IN_PAD * D_H1 + D_H1 * D_H2
                        + D_H2 * D_H3 + D_H3 * D_OUT_PAD),
        transcendentals=0,
        bytes_accessed=(2 * (D_IN_PAD * D_H1 + D_H1 * D_H2
                             + D_H2 * D_H3 + D_H3 * D_OUT_PAD)   # bf16 weights
                        + 4 * (D_H1 + D_H2 + D_H3 + D_OUT_PAD)   # f32 biases
                        + Bp * (2 * D_IN_PAD + 4 * D_OUT_PAD)),  # x in, o out
    )

    out_pad = pl.pallas_call(
        deep_mlp_kernel,
        out_shape=jax.ShapeDtypeStruct((Bp, D_OUT_PAD), jnp.float32),
        grid=grid,
        in_specs=[
            pl.BlockSpec((TB, D_IN_PAD), lambda i: (i, 0)),
            _resident_spec((D_IN_PAD, D_H1), single_buffer_weights),
            _resident_spec((1, D_H1), single_buffer_weights),
            _resident_spec((D_H1, D_H2), single_buffer_weights),
            _resident_spec((1, D_H2), single_buffer_weights),
            _resident_spec((D_H2, D_H3), single_buffer_weights),
            _resident_spec((1, D_H3), single_buffer_weights),
            _resident_spec((D_H3, D_OUT_PAD), single_buffer_weights),
            _resident_spec((1, D_OUT_PAD), single_buffer_weights),
        ],
        out_specs=pl.BlockSpec((TB, D_OUT_PAD), lambda i: (i, 0)),
        compiler_params=pltpu.CompilerParams(
            dimension_semantics=("parallel",)),
        cost_estimate=cost,
    )(flat, w1t, b1r, w2t, b2r, w3t, b3r, w4p, b4p)

    return out_pad[:B, :D_OUT]


# ------------------------------ pure-JAX reference ---------------------------

def deep_reference(x, params):
    w1, b1, w2, b2, w3, b3, w4, b4 = params
    B = x.shape[0]
    h = x.reshape(B, D_IN)
    h = jnp.maximum(h @ w1.T + b1, 0.0)
    h = jnp.maximum(h @ w2.T + b2, 0.0)
    h = jnp.maximum(h @ w3.T + b3, 0.0)
    return h @ w4.T + b4


# ---------------------------------- main -------------------------------------

if __name__ == "__main__":
    key = jax.random.PRNGKey(0)
    kx, k1, k2, k3, k4, k5, k6, k7, k8 = jax.random.split(key, 9)

    B = 2
    x = jax.random.normal(kx, (B, 1, IMG, IMG), dtype=jnp.float32)

    w1 = 0.03 * jax.random.normal(k1, (D_H1, D_IN), dtype=jnp.float32)
    b1 = 0.03 * jax.random.normal(k2, (D_H1,), dtype=jnp.float32)
    w2 = 0.05 * jax.random.normal(k3, (D_H2, D_H1), dtype=jnp.float32)
    b2 = 0.05 * jax.random.normal(k4, (D_H2,), dtype=jnp.float32)
    w3 = 0.05 * jax.random.normal(k5, (D_H3, D_H2), dtype=jnp.float32)
    b3 = 0.05 * jax.random.normal(k6, (D_H3,), dtype=jnp.float32)
    w4 = 0.08 * jax.random.normal(k7, (D_OUT, D_H3), dtype=jnp.float32)
    b4 = 0.08 * jax.random.normal(k8, (D_OUT,), dtype=jnp.float32)
    params = (w1, b1, w2, b2, w3, b3, w4, b4)

    # one-time weight re-layout / bf16 cast (outside the jit'd hot path)
    prep = jax.tree_util.tree_map(jax.block_until_ready,
                                  preprocess_params(params))

    fwd = jax.jit(deep_forward)
    try:
        out = jax.block_until_ready(fwd(x, prep))
    except Exception:
        # Fallback if this JAX build rejects pl.Buffered(1) single-buffering
        # on the resident weight/bias BlockSpecs.
        fwd = jax.jit(lambda xx, pp: deep_forward(
            xx, pp, single_buffer_weights=False))
        out = jax.block_until_ready(fwd(x, prep))

    ref = jax.block_until_ready(deep_reference(x, params))
    # bf16 MXU compute with f32 accumulation: compare against the f32
    # reference at bf16-level tolerance (the old 1e-4 check only holds for
    # full-f32 math, as noted in the performance review).
    np.testing.assert_allclose(np.asarray(out), np.asarray(ref),
                               rtol=2e-2, atol=2e-2)

    print("KERNEL_OK")
</pallas_src>

<mosaic_0001>
module attributes {stable_mosaic.version = 11 : i64} {
  func.func @deep_mlp_kernel(%arg0: i32, %arg1: memref<8x896xbf16, #tpu.memory_space<vmem>>, %arg2: memref<896x512xbf16, #tpu.memory_space<vmem>>, %arg3: memref<1x512xf32, #tpu.memory_space<vmem>>, %arg4: memref<512x256xbf16, #tpu.memory_space<vmem>>, %arg5: memref<1x256xf32, #tpu.memory_space<vmem>>, %arg6: memref<256x128xbf16, #tpu.memory_space<vmem>>, %arg7: memref<1x128xf32, #tpu.memory_space<vmem>>, %arg8: memref<128x128xbf16, #tpu.memory_space<vmem>>, %arg9: memref<1x128xf32, #tpu.memory_space<vmem>>, %arg10: memref<8x128xf32, #tpu.memory_space<vmem>>) attributes {dimension_semantics = [#tpu.dimension_semantics<parallel>], iteration_bounds = array<i64: 1>, scalar_prefetch = 0 : i64, scratch_operands = 0 : i64, tpu.core_type = #tpu.core_type<tc>, window_params = [{transform_indices = @transform_0, window_bounds = array<i64: 8, 896>}, {pipeline_mode = #tpu.pipeline_mode<synchronous>, transform_indices = @transform_1, window_bounds = array<i64: 896, 512>}, {pipeline_mode = #tpu.pipeline_mode<synchronous>, transform_indices = @transform_2, window_bounds = array<i64: 1, 512>}, {pipeline_mode = #tpu.pipeline_mode<synchronous>, transform_indices = @transform_3, window_bounds = array<i64: 512, 256>}, {pipeline_mode = #tpu.pipeline_mode<synchronous>, transform_indices = @transform_4, window_bounds = array<i64: 1, 256>}, {pipeline_mode = #tpu.pipeline_mode<synchronous>, transform_indices = @transform_5, window_bounds = array<i64: 256, 128>}, {pipeline_mode = #tpu.pipeline_mode<synchronous>, transform_indices = @transform_6, window_bounds = array<i64: 1, 128>}, {pipeline_mode = #tpu.pipeline_mode<synchronous>, transform_indices = @transform_7, window_bounds = array<i64: 128, 128>}, {pipeline_mode = #tpu.pipeline_mode<synchronous>, transform_indices = @transform_8, window_bounds = array<i64: 1, 128>}, {transform_indices = @transform_9, window_bounds = array<i64: 8, 128>}]} {
    %c0 = arith.constant 0 : index
    %c0_0 = arith.constant 0 : index
    %0 = vector.load %arg1[%c0, %c0_0] : memref<8x896xbf16, #tpu.memory_space<vmem>>, vector<8x896xbf16>
    %c0_1 = arith.constant 0 : index
    %c0_2 = arith.constant 0 : index
    %1 = vector.load %arg2[%c0_1, %c0_2] : memref<896x512xbf16, #tpu.memory_space<vmem>>, vector<896x512xbf16>
    %cst = arith.constant dense<0.000000e+00> : vector<8x512xf32>
    %2 = tpu.matmul %0, %1, %cst {dimension_numbers = #tpu.dot_dimension_numbers<[1], [0], [0], [1], [0, 0, 1, 1], [], []>} : vector<8x896xbf16>, vector<896x512xbf16>, vector<8x512xf32> -> vector<8x512xf32>
    %c0_3 = arith.constant 0 : index
    %c0_4 = arith.constant 0 : index
    %3 = vector.load %arg3[%c0_3, %c0_4] : memref<1x512xf32, #tpu.memory_space<vmem>>, vector<1x512xf32>
    %4 = vector.broadcast %3 : vector<1x512xf32> to vector<8x512xf32>
    %5 = arith.addf %2, %4 : vector<8x512xf32>
    %cst_5 = arith.constant 0.000000e+00 : f32
    %6 = vector.broadcast %cst_5 : f32 to vector<8x512xf32>
    %7 = arith.maximumf %5, %6 : vector<8x512xf32>
    %8 = arith.truncf %7 : vector<8x512xf32> to vector<8x512xbf16>
    %c0_6 = arith.constant 0 : index
    %c0_7 = arith.constant 0 : index
    %9 = vector.load %arg4[%c0_6, %c0_7] : memref<512x256xbf16, #tpu.memory_space<vmem>>, vector<512x256xbf16>
    %cst_8 = arith.constant dense<0.000000e+00> : vector<8x256xf32>
    %10 = tpu.matmul %8, %9, %cst_8 {dimension_numbers = #tpu.dot_dimension_numbers<[1], [0], [0], [1], [0, 0, 1, 1], [], []>} : vector<8x512xbf16>, vector<512x256xbf16>, vector<8x256xf32> -> vector<8x256xf32>
    %c0_9 = arith.constant 0 : index
    %c0_10 = arith.constant 0 : index
    %11 = vector.load %arg5[%c0_9, %c0_10] : memref<1x256xf32, #tpu.memory_space<vmem>>, vector<1x256xf32>
    %12 = vector.broadcast %11 : vector<1x256xf32> to vector<8x256xf32>
    %13 = arith.addf %10, %12 : vector<8x256xf32>
    %cst_11 = arith.constant 0.000000e+00 : f32
    %14 = vector.broadcast %cst_11 : f32 to vector<8x256xf32>
    %15 = arith.maximumf %13, %14 : vector<8x256xf32>
    %16 = arith.truncf %15 : vector<8x256xf32> to vector<8x256xbf16>
    %c0_12 = arith.constant 0 : index
    %c0_13 = arith.constant 0 : index
    %17 = vector.load %arg6[%c0_12, %c0_13] : memref<256x128xbf16, #tpu.memory_space<vmem>>, vector<256x128xbf16>
    %cst_14 = arith.constant dense<0.000000e+00> : vector<8x128xf32>
    %18 = tpu.matmul %16, %17, %cst_14 {dimension_numbers = #tpu.dot_dimension_numbers<[1], [0], [0], [1], [0, 0, 1, 1], [], []>} : vector<8x256xbf16>, vector<256x128xbf16>, vector<8x128xf32> -> vector<8x128xf32>
    %c0_15 = arith.constant 0 : index
    %c0_16 = arith.constant 0 : index
    %19 = vector.load %arg7[%c0_15, %c0_16] : memref<1x128xf32, #tpu.memory_space<vmem>>, vector<1x128xf32>
    %20 = vector.broadcast %19 : vector<1x128xf32> to vector<8x128xf32>
    %21 = arith.addf %18, %20 : vector<8x128xf32>
    %cst_17 = arith.constant 0.000000e+00 : f32
    %22 = vector.broadcast %cst_17 : f32 to vector<8x128xf32>
    %23 = arith.maximumf %21, %22 : vector<8x128xf32>
    %24 = arith.truncf %23 : vector<8x128xf32> to vector<8x128xbf16>
    %c0_18 = arith.constant 0 : index
    %c0_19 = arith.constant 0 : index
    %25 = vector.load %arg8[%c0_18, %c0_19] : memref<128x128xbf16, #tpu.memory_space<vmem>>, vector<128x128xbf16>
    %cst_20 = arith.constant dense<0.000000e+00> : vector<8x128xf32>
    %26 = tpu.matmul %24, %25, %cst_20 {dimension_numbers = #tpu.dot_dimension_numbers<[1], [0], [0], [1], [0, 0, 1, 1], [], []>} : vector<8x128xbf16>, vector<128x128xbf16>, vector<8x128xf32> -> vector<8x128xf32>
    %c0_21 = arith.constant 0 : index
    %c0_22 = arith.constant 0 : index
    %27 = vector.load %arg9[%c0_21, %c0_22] : memref<1x128xf32, #tpu.memory_space<vmem>>, vector<1x128xf32>
    %28 = vector.broadcast %27 : vector<1x128xf32> to vector<8x128xf32>
    %29 = arith.addf %26, %28 : vector<8x128xf32>
    %c0_23 = arith.constant 0 : index
    %c0_24 = arith.constant 0 : index
    %30 = vector.load %arg10[%c0_23, %c0_24] : memref<8x128xf32, #tpu.memory_space<vmem>>, vector<8x128xf32>
    tpu.vector_store %arg10[%c0_23, %c0_24], %29 {strides = array<i32>} : memref<8x128xf32, #tpu.memory_space<vmem>>, vector<8x128xf32>,
    return
  }
  func.func @transform_0(%arg0: i32) -> (i32, i32) {
    %c0_i32 = arith.constant 0 : i32
    %c0_i32_0 = arith.constant 0 : i32
    return %arg0, %c0_i32 : i32, i32
  }
  func.func @transform_1(%arg0: i32) -> (i32, i32) {
    %c0_i32 = arith.constant 0 : i32
    %c0_i32_0 = arith.constant 0 : i32
    %c0_i32_1 = arith.constant 0 : i32
    return %c0_i32, %c0_i32_0 : i32, i32
  }
  func.func @transform_2(%arg0: i32) -> (i32, i32) {
    %c0_i32 = arith.constant 0 : i32
    %c0_i32_0 = arith.constant 0 : i32
    %c0_i32_1 = arith.constant 0 : i32
    return %c0_i32, %c0_i32_0 : i32, i32
  }
  func.func @transform_3(%arg0: i32) -> (i32, i32) {
    %c0_i32 = arith.constant 0 : i32
    %c0_i32_0 = arith.constant 0 : i32
    %c0_i32_1 = arith.constant 0 : i32
    return %c0_i32, %c0_i32_0 : i32, i32
  }
  func.func @transform_4(%arg0: i32) -> (i32, i32) {
    %c0_i32 = arith.constant 0 : i32
    %c0_i32_0 = arith.constant 0 : i32
    %c0_i32_1 = arith.constant 0 : i32
    return %c0_i32, %c0_i32_0 : i32, i32
  }
  func.func @transform_5(%arg0: i32) -> (i32, i32) {
    %c0_i32 = arith.constant 0 : i32
    %c0_i32_0 = arith.constant 0 : i32
    %c0_i32_1 = arith.constant 0 : i32
    return %c0_i32, %c0_i32_0 : i32, i32
  }
  func.func @transform_6(%arg0: i32) -> (i32, i32) {
    %c0_i32 = arith.constant 0 : i32
    %c0_i32_0 = arith.constant 0 : i32
    %c0_i32_1 = arith.constant 0 : i32
    return %c0_i32, %c0_i32_0 : i32, i32
  }
  func.func @transform_7(%arg0: i32) -> (i32, i32) {
    %c0_i32 = arith.constant 0 : i32
    %c0_i32_0 = arith.constant 0 : i32
    %c0_i32_1 = arith.constant 0 : i32
    return %c0_i32, %c0_i32_0 : i32, i32
  }
  func.func @transform_8(%arg0: i32) -> (i32, i32) {
    %c0_i32 = arith.constant 0 : i32
    %c0_i32_0 = arith.constant 0 : i32
    %c0_i32_1 = arith.constant 0 : i32
    return %c0_i32, %c0_i32_0 : i32, i32
  }
  func.func @transform_9(%arg0: i32) -> (i32, i32) {
    %c0_i32 = arith.constant 0 : i32
    %c0_i32_0 = arith.constant 0 : i32
    return %arg0, %c0_i32 : i32, i32
  }
}

module attributes {stable_mosaic.version = 11 : i64} {
  func.func @deep_mlp_kernel(%arg0: i32, %arg1: memref<8x896xbf16, #tpu.memory_space<vmem>>, %arg2: memref<896x512xbf16, #tpu.memory_space<vmem>>, %arg3: memref<1x512xf32, #tpu.memory_space<vmem>>, %arg4: memref<512x256xbf16, #tpu.memory_space<vmem>>, %arg5: memref<1x256xf32, #tpu.memory_space<vmem>>, %arg6: memref<256x128xbf16, #tpu.memory_space<vmem>>, %arg7: memref<1x128xf32, #tpu.memory_space<vmem>>, %arg8: memref<128x128xbf16, #tpu.memory_space<vmem>>, %arg9: memref<1x128xf32, #tpu.memory_space<vmem>>, %arg10: memref<8x128xf32, #tpu.memory_space<vmem>>) attributes {dimension_semantics = [#tpu.dimension_semantics<parallel>], iteration_bounds = array<i64: 1>, scalar_prefetch = 0 : i64, scratch_operands = 0 : i64, tpu.core_type = #tpu.core_type<tc>, window_params = [{transform_indices = @transform_0, window_bounds = array<i64: 8, 896>}, {pipeline_mode = #tpu.pipeline_mode<synchronous>, transform_indices = @transform_1, window_bounds = array<i64: 896, 512>}, {pipeline_mode = #tpu.pipeline_mode<synchronous>, transform_indices = @transform_2, window_bounds = array<i64: 1, 512>}, {pipeline_mode = #tpu.pipeline_mode<synchronous>, transform_indices = @transform_3, window_bounds = array<i64: 512, 256>}, {pipeline_mode = #tpu.pipeline_mode<synchronous>, transform_indices = @transform_4, window_bounds = array<i64: 1, 256>}, {pipeline_mode = #tpu.pipeline_mode<synchronous>, transform_indices = @transform_5, window_bounds = array<i64: 256, 128>}, {pipeline_mode = #tpu.pipeline_mode<synchronous>, transform_indices = @transform_6, window_bounds = array<i64: 1, 128>}, {pipeline_mode = #tpu.pipeline_mode<synchronous>, transform_indices = @transform_7, window_bounds = array<i64: 128, 128>}, {pipeline_mode = #tpu.pipeline_mode<synchronous>, transform_indices = @transform_8, window_bounds = array<i64: 1, 128>}, {transform_indices = @transform_9, window_bounds = array<i64: 8, 128>}]} {
    %c0 = arith.constant 0 : index
    %c0_0 = arith.constant 0 : index
    %0 = vector.load %arg1[%c0, %c0_0] : memref<8x896xbf16, #tpu.memory_space<vmem>>, vector<8x896xbf16>
    %c0_1 = arith.constant 0 : index
    %c0_2 = arith.constant 0 : index
    %1 = vector.load %arg2[%c0_1, %c0_2] : memref<896x512xbf16, #tpu.memory_space<vmem>>, vector<896x512xbf16>
    %cst = arith.constant dense<0.000000e+00> : vector<8x512xf32>
    %2 = tpu.matmul %0, %1, %cst {dimension_numbers = #tpu.dot_dimension_numbers<[1], [0], [0], [1], [0, 0, 1, 1], [], []>} : vector<8x896xbf16>, vector<896x512xbf16>, vector<8x512xf32> -> vector<8x512xf32>
    %c0_3 = arith.constant 0 : index
    %c0_4 = arith.constant 0 : index
    %3 = vector.load %arg3[%c0_3, %c0_4] : memref<1x512xf32, #tpu.memory_space<vmem>>, vector<1x512xf32>
    %4 = vector.broadcast %3 : vector<1x512xf32> to vector<8x512xf32>
    %5 = arith.addf %2, %4 : vector<8x512xf32>
    %cst_5 = arith.constant 0.000000e+00 : f32
    %6 = vector.broadcast %cst_5 : f32 to vector<8x512xf32>
    %7 = arith.maximumf %5, %6 : vector<8x512xf32>
    %8 = arith.truncf %7 : vector<8x512xf32> to vector<8x512xbf16>
    %c0_6 = arith.constant 0 : index
    %c0_7 = arith.constant 0 : index
    %9 = vector.load %arg4[%c0_6, %c0_7] : memref<512x256xbf16, #tpu.memory_space<vmem>>, vector<512x256xbf16>
    %cst_8 = arith.constant dense<0.000000e+00> : vector<8x256xf32>
    %10 = tpu.matmul %8, %9, %cst_8 {dimension_numbers = #tpu.dot_dimension_numbers<[1], [0], [0], [1], [0, 0, 1, 1], [], []>} : vector<8x512xbf16>, vector<512x256xbf16>, vector<8x256xf32> -> vector<8x256xf32>
    %c0_9 = arith.constant 0 : index
    %c0_10 = arith.constant 0 : index
    %11 = vector.load %arg5[%c0_9, %c0_10] : memref<1x256xf32, #tpu.memory_space<vmem>>, vector<1x256xf32>
    %12 = vector.broadcast %11 : vector<1x256xf32> to vector<8x256xf32>
    %13 = arith.addf %10, %12 : vector<8x256xf32>
    %cst_11 = arith.constant 0.000000e+00 : f32
    %14 = vector.broadcast %cst_11 : f32 to vector<8x256xf32>
    %15 = arith.maximumf %13, %14 : vector<8x256xf32>
    %16 = arith.truncf %15 : vector<8x256xf32> to vector<8x256xbf16>
    %c0_12 = arith.constant 0 : index
    %c0_13 = arith.constant 0 : index
    %17 = vector.load %arg6[%c0_12, %c0_13] : memref<256x128xbf16, #tpu.memory_space<vmem>>, vector<256x128xbf16>
    %cst_14 = arith.constant dense<0.000000e+00> : vector<8x128xf32>
    %18 = tpu.matmul %16, %17, %cst_14 {dimension_numbers = #tpu.dot_dimension_numbers<[1], [0], [0], [1], [0, 0, 1, 1], [], []>} : vector<8x256xbf16>, vector<256x128xbf16>, vector<8x128xf32> -> vector<8x128xf32>
    %c0_15 = arith.constant 0 : index
    %c0_16 = arith.constant 0 : index
    %19 = vector.load %arg7[%c0_15, %c0_16] : memref<1x128xf32, #tpu.memory_space<vmem>>, vector<1x128xf32>
    %20 = vector.broadcast %19 : vector<1x128xf32> to vector<8x128xf32>
    %21 = arith.addf %18, %20 : vector<8x128xf32>
    %cst_17 = arith.constant 0.000000e+00 : f32
    %22 = vector.broadcast %cst_17 : f32 to vector<8x128xf32>
    %23 = arith.maximumf %21, %22 : vector<8x128xf32>
    %24 = arith.truncf %23 : vector<8x128xf32> to vector<8x128xbf16>
    %c0_18 = arith.constant 0 : index
    %c0_19 = arith.constant 0 : index
    %25 = vector.load %arg8[%c0_18, %c0_19] : memref<128x128xbf16, #tpu.memory_space<vmem>>, vector<128x128xbf16>
    %cst_20 = arith.constant dense<0.000000e+00> : vector<8x128xf32>
    %26 = tpu.matmul %24, %25, %cst_20 {dimension_numbers = #tpu.dot_dimension_numbers<[1], [0], [0], [1], [0, 0, 1, 1], [], []>} : vector<8x128xbf16>, vector<128x128xbf16>, vector<8x128xf32> -> vector<8x128xf32>
    %c0_21 = arith.constant 0 : index
    %c0_22 = arith.constant 0 : index
    %27 = vector.load %arg9[%c0_21, %c0_22] : memref<1x128xf32, #tpu.memory_space<vmem>>, vector<1x128xf32>
    %28 = vector.broadcast %27 : vector<1x128xf32> to vector<8x128xf32>
    %29 = arith.addf %26, %28 : vector<8x128xf32>
    %c0_23 = arith.constant 0 : index
    %c0_24 = arith.constant 0 : index
    %30 = vector.load %arg10[%c0_23, %c0_24] : memref<8x128xf32, #tpu.memory_space<vmem>>, vector<8x128xf32>
    tpu.vector_store %arg10[%c0_23, %c0_24], %29 {strides = array<i32>} : memref<8x128xf32, #tpu.memory_space<vmem>>, vector<8x128xf32>,
    return
  }
  func.func @transform_0(%arg0: i32) -> (i32, i32) {
    %c0_i32 = arith.constant 0 : i32
    %c0_i32_0 = arith.constant 0 : i32
    return %arg0, %c0_i32 : i32, i32
  }
  func.func @transform_1(%arg0: i32) -> (i32, i32) {
    %c0_i32 = arith.constant 0 : i32
    %c0_i32_0 = arith.constant 0 : i32
    %c0_i32_1 = arith.constant 0 : i32
    return %c0_i32, %c0_i32_0 : i32, i32
  }
  func.func @transform_2(%arg0: i32) -> (i32, i32) {
    %c0_i32 = arith.constant 0 : i32
    %c0_i32_0 = arith.constant 0 : i32
    %c0_i32_1 = arith.constant 0 : i32
    return %c0_i32, %c0_i32_0 : i32, i32
  }
  func.func @transform_3(%arg0: i32) -> (i32, i32) {
    %c0_i32 = arith.constant 0 : i32
    %c0_i32_0 = arith.constant 0 : i32
    %c0_i32_1 = arith.constant 0 : i32
    return %c0_i32, %c0_i32_0 : i32, i32
  }
  func.func @transform_4(%arg0: i32) -> (i32, i32) {
    %c0_i32 = arith.constant 0 : i32
    %c0_i32_0 = arith.constant 0 : i32
    %c0_i32_1 = arith.constant 0 : i32
    return %c0_i32, %c0_i32_0 : i32, i32
  }
  func.func @transform_5(%arg0: i32) -> (i32, i32) {
    %c0_i32 = arith.constant 0 : i32
    %c0_i32_0 = arith.constant 0 : i32
    %c0_i32_1 = arith.constant 0 : i32
    return %c0_i32, %c0_i32_0 : i32, i32
  }
  func.func @transform_6(%arg0: i32) -> (i32, i32) {
    %c0_i32 = arith.constant 0 : i32
    %c0_i32_0 = arith.constant 0 : i32
    %c0_i32_1 = arith.constant 0 : i32
    return %c0_i32, %c0_i32_0 : i32, i32
  }
  func.func @transform_7(%arg0: i32) -> (i32, i32) {
    %c0_i32 = arith.constant 0 : i32
    %c0_i32_0 = arith.constant 0 : i32
    %c0_i32_1 = arith.constant 0 : i32
    return %c0_i32, %c0_i32_0 : i32, i32
  }
  func.func @transform_8(%arg0: i32) -> (i32, i32) {
    %c0_i32 = arith.constant 0 : i32
    %c0_i32_0 = arith.constant 0 : i32
    %c0_i32_1 = arith.constant 0 : i32
    return %c0_i32, %c0_i32_0 : i32, i32
  }
  func.func @transform_9(%arg0: i32) -> (i32, i32) {
    %c0_i32 = arith.constant 0 : i32
    %c0_i32_0 = arith.constant 0 : i32
    return %arg0, %c0_i32 : i32, i32
  }
}

</mosaic_0001>

<llo_original>
// kernel: deep_forward.1
$region0: #{deep_forward.1}
  #allocation0 [shape = 'u32[]', space=smem, size = 0x4, offset = 0x4, fixed_abs, tag = 'smem constant byte address 0x4 - core index']
  #allocation1 [shape = 'u32[144,128]{1,0:T(1,128)}', space=vmem, size = 0x12000, scoped, tag = 'internal scratch']
  %s0 = inlined_call_operand.vmem [shape: bf16[8,896], index: 0, kind: input, shape index: {}]
  %s1 = inlined_call_operand.hbm [shape: bf16[896,512], index: 1, kind: input, shape index: {}]
  %s2 = inlined_call_operand.vmem [shape: f32[1,512], index: 2, kind: input, shape index: {}]
  %s3 = inlined_call_operand.hbm [shape: bf16[512,256], index: 3, kind: input, shape index: {}]
  %s4 = inlined_call_operand.vmem [shape: f32[1,256], index: 4, kind: input, shape index: {}]
  %s5 = inlined_call_operand.vmem [shape: bf16[256,128], index: 5, kind: input, shape index: {}]
  %s6 = inlined_call_operand.vmem [shape: f32[1,128], index: 6, kind: input, shape index: {}]
  %s7 = inlined_call_operand.hbm [shape: bf16[128,128], index: 7, kind: input, shape index: {}]
  %s8 = inlined_call_operand.vmem [shape: f32[1,128], index: 8, kind: input, shape index: {}]
  %s9 = inlined_call_operand.vmem [shape: f32[8,128], index: 9, kind: output, shape index: {}]
  %s10 = sld [smem:[#allocation0]]
  $region58: #{deep_forward.1} parent=0
    _
  %s12 = ssub.s32 1, %s10
  %s13 = scalar_select 0, %s12, %s10
  $region1: #{deep_forward.1} parent=0
    #allocation2 [shape = 'u8[917504]{0}', space=vmem, size = 0xe0000, scoped, tag = 'input window, operand 1, single buffered']
    #allocation3 [shape = 's32[1]{0}', space=sflag, size = 0x4, scoped, tag = 'scoped memory for deep_forward.1']
    #allocation4 [shape = 'u8[262144]{0}', space=vmem, size = 0x40000, scoped, tag = 'input window, operand 3, single buffered']
    #allocation5 [shape = 's32[1]{0}', space=sflag, size = 0x4, scoped, tag = 'scoped memory for deep_forward.1']
    #allocation6 [shape = 'u8[32768]{0}', space=vmem, size = 0x8000, scoped, tag = 'input window, operand 7, single buffered']
    %14 = vsyncpa [#allocation3], 0
    %15 = vsyncpa [#allocation5], 0
    // Predicated region
    $region2: #{deep_forward.1} parent=1 // pred_check
      _
    $region3: #{deep_forward.1} parent=1 // pred_check_branch
      %17 = sbr.rel (0) target = $region5
    $region4: #{deep_forward.1} parent=1 // pred_region
      _
    $region5: #{deep_forward.1} parent=1 // pred_fallthru
      _
    // Predicated region
    $region6: #{deep_forward.1} parent=1 // pred_check
      _
    $region7: #{deep_forward.1} parent=1 // pred_check_branch
      %19 = sbr.rel (0) target = $region9
    $region8: #{deep_forward.1} parent=1 // pred_region
      %s21 = ssub.s32 28672, 28672
      %22 = vsyncadd [#allocation3], %s21
      %s23 = sshll.u32 [#allocation2], 4
      %s24 = int_to_ptr.vmem [resolvable:$true] %s23
      %29 = dma.hbm_to_vmem [thread:$0]  %s1, 28672, %s24, [#allocation3], 256, 256, 16
    $region9: #{deep_forward.1} parent=1 // pred_fallthru
      _
    // Predicated region
    $region10: #{deep_forward.1} parent=1 // pred_check
      _
    $region11: #{deep_forward.1} parent=1 // pred_check_branch
      %31 = sbr.rel (0) target = $region13
    $region12: #{deep_forward.1} parent=1 // pred_region
      _
    $region13: #{deep_forward.1} parent=1 // pred_fallthru
      _
    // Predicated region
    $region14: #{deep_forward.1} parent=1 // pred_check
      _
    $region15: #{deep_forward.1} parent=1 // pred_check_branch
      %33 = sbr.rel (0) target = $region17
    $region16: #{deep_forward.1} parent=1 // pred_region
      %s35 = ssub.s32 8192, 8192
      %36 = vsyncadd [#allocation5], %s35
      %s37 = sshll.u32 [#allocation4], 4
      %s38 = int_to_ptr.vmem [resolvable:$true] %s37
      %43 = dma.hbm_to_vmem [thread:$0]  %s3, 8192, %s38, [#allocation5], 128, 128, 8
    $region17: #{deep_forward.1} parent=1 // pred_fallthru
      _
    // Predicated region
    $region18: #{deep_forward.1} parent=1 // pred_check
      _
    $region19: #{deep_forward.1} parent=1 // pred_check_branch
      %45 = sbr.rel (0) target = $region21
    $region20: #{deep_forward.1} parent=1 // pred_region
      _
    $region21: #{deep_forward.1} parent=1 // pred_fallthru
      _
    // Predicated region
    $region22: #{deep_forward.1} parent=1 // pred_check
      _
    $region23: #{deep_forward.1} parent=1 // pred_check_branch
      %47 = sbr.rel (0) target = $region25
    $region24: #{deep_forward.1} parent=1 // pred_region
      _
    $region25: #{deep_forward.1} parent=1 // pred_fallthru
      _
    // Predicated region
    $region26: #{deep_forward.1} parent=1 // pred_check
      _
    $region27: #{deep_forward.1} parent=1 // pred_check_branch
      %49 = sbr.rel (0) target = $region29
    $region28: #{deep_forward.1} parent=1 // pred_region
      _
    $region29: #{deep_forward.1} parent=1 // pred_fallthru
      _
    // Predicated region
    $region30: #{deep_forward.1} parent=1 // pred_check
      _
    $region31: #{deep_forward.1} parent=1 // pred_check_branch
      %51 = sbr.rel (0) target = $region33
    $region32: #{deep_forward.1} parent=1 // pred_region
      %s53 = ssub.s32 1024, 1024
      %54 = vsyncadd [#allocation5], %s53
      %s55 = sshll.u32 [#allocation6], 4
      %s56 = int_to_ptr.vmem [resolvable:$true] %s55
      %61 = dma.hbm_to_vmem [thread:$0]  %s7, 1024, %s56, [#allocation5], 64, 64, 4
    $region33: #{deep_forward.1} parent=1 // pred_fallthru
      _
    // Predicated region
    $region34: #{deep_forward.1} parent=1 // pred_check
      _
    $region35: #{deep_forward.1} parent=1 // pred_check_branch
      %63 = sbr.rel (0) target = $region37
    $region36: #{deep_forward.1} parent=1 // pred_region
      _
    $region37: #{deep_forward.1} parent=1 // pred_fallthru
      _
    // Predicated region
    $region38: #{deep_forward.1} parent=1 // pred_check
      _
    $region39: #{deep_forward.1} parent=1 // pred_check_branch
      %65 = sbr.rel (0) target = $region41
    $region40: #{deep_forward.1} parent=1 // pred_region
      %66 = dma.done [#allocation3], 28672
    $region41: #{deep_forward.1} parent=1 // pred_fallthru
      _
    // Predicated region
    $region42: #{deep_forward.1} parent=1 // pred_check
      _
    $region43: #{deep_forward.1} parent=1 // pred_check_branch
      %68 = sbr.rel (0) target = $region45
    $region44: #{deep_forward.1} parent=1 // pred_region
      %69 = dma.done [#allocation5], 8192
    $region45: #{deep_forward.1} parent=1 // pred_fallthru
      _
    // Predicated region
    $region46: #{deep_forward.1} parent=1 // pred_check
      _
    $region47: #{deep_forward.1} parent=1 // pred_check_branch
      %71 = sbr.rel (0) target = $region49
    $region48: #{deep_forward.1} parent=1 // pred_region
      %72 = dma.done [#allocation5], 1024
    $region49: #{deep_forward.1} parent=1 // pred_fallthru
      _
    %v74 = vld [vmem:[%s0] sm:$0xff]
    %v75 = vld [vmem:[%s0 + $0x8] sm:$0xff]
    %v76 = vld [vmem:[%s0 + $0x10] sm:$0xff]
    %v77 = vld [vmem:[%s0 + $0x18] sm:$0xf]
    %v78 = vld [vmem:[#allocation2] sm:$0xff]
    %v79 = vld [vmem:[#allocation2 + $0x8] sm:$0xff]
    %v80 = vld [vmem:[#allocation2 + $0x10] sm:$0xff]
    %v81 = vld [vmem:[#allocation2 + $0x18] sm:$0xff]
    %v82 = vld [vmem:[#allocation2 + $0x20] sm:$0xff]
    %v83 = vld [vmem:[#allocation2 + $0x28] sm:$0xff]
    %v84 = vld [vmem:[#allocation2 + $0x30] sm:$0xff]
    %v85 = vld [vmem:[#allocation2 + $0x38] sm:$0xff]
    %v86 = vld [vmem:[#allocation2 + $0x40] sm:$0xff]
    %v87 = vld [vmem:[#allocation2 + $0x48] sm:$0xff]
    %v88 = vld [vmem:[#allocation2 + $0x50] sm:$0xff]
    %v89 = vld [vmem:[#allocation2 + $0x58] sm:$0xff]
    %v90 = vld [vmem:[#allocation2 + $0x60] sm:$0xff]
    %v91 = vld [vmem:[#allocation2 + $0x68] sm:$0xff]
    %v92 = vld [vmem:[#allocation2 + $0x70] sm:$0xff]
    %v93 = vld [vmem:[#allocation2 + $0x78] sm:$0xff]
    %v94 = vld [vmem:[#allocation2 + $0x80] sm:$0xff]
    %v95 = vld [vmem:[#allocation2 + $0x88] sm:$0xff]
    %v96 = vld [vmem:[#allocation2 + $0x90] sm:$0xff]
    %v97 = vld [vmem:[#allocation2 + $0x98] sm:$0xff]
    %v98 = vld [vmem:[#allocation2 + $0xa0] sm:$0xff]
    %v99 = vld [vmem:[#allocation2 + $0xa8] sm:$0xff]
    %v100 = vld [vmem:[#allocation2 + $0xb0] sm:$0xff]
    %v101 = vld [vmem:[#allocation2 + $0xb8] sm:$0xff]
    %v102 = vld [vmem:[#allocation2 + $0xc0] sm:$0xff]
    %v103 = vld [vmem:[#allocation2 + $0xc8] sm:$0xff]
    %v104 = vld [vmem:[#allocation2 + $0xd0] sm:$0xff]
    %v105 = vld [vmem:[#allocation2 + $0xd8] sm:$0xff]
    %v106 = vld [vmem:[#allocation2 + $0xe0] sm:$0xff]
    %v107 = vld [vmem:[#allocation2 + $0xe8] sm:$0xff]
    %v108 = vld [vmem:[#allocation2 + $0xf0] sm:$0xff]
    %v109 = vld [vmem:[#allocation2 + $0xf8] sm:$0xff]
    %v110 = vld [vmem:[#allocation2 + $0x100] sm:$0xff]
    %v111 = vld [vmem:[#allocation2 + $0x108] sm:$0xff]
    %v112 = vld [vmem:[#allocation2 + $0x110] sm:$0xff]
    %v113 = vld [vmem:[#allocation2 + $0x118] sm:$0xff]
    %v114 = vld [vmem:[#allocation2 + $0x120] sm:$0xff]
    %v115 = vld [vmem:[#allocation2 + $0x128] sm:$0xff]
    %v116 = vld [vmem:[#allocation2 + $0x130] sm:$0xff]
    %v117 = vld [vmem:[#allocation2 + $0x138] sm:$0xff]
    %v118 = vld [vmem:[#allocation2 + $0x140] sm:$0xff]
    %v119 = vld [vmem:[#allocation2 + $0x148] sm:$0xff]
    %v120 = vld [vmem:[#allocation2 + $0x150] sm:$0xff]
    %v121 = vld [vmem:[#allocation2 + $0x158] sm:$0xff]
    %v122 = vld [vmem:[#allocation2 + $0x160] sm:$0xff]
    %v123 = vld [vmem:[#allocation2 + $0x168] sm:$0xff]
    %v124 = vld [vmem:[#allocation2 + $0x170] sm:$0xff]
    %v125 = vld [vmem:[#allocation2 + $0x178] sm:$0xff]
    %v126 = vld [vmem:[#allocation2 + $0x180] sm:$0xff]
    %v127 = vld [vmem:[#allocation2 + $0x188] sm:$0xff]
    %v128 = vld [vmem:[#allocation2 + $0x190] sm:$0xff]
    %v129 = vld [vmem:[#allocation2 + $0x198] sm:$0xff]
    %v130 = vld [vmem:[#allocation2 + $0x1a0] sm:$0xff]
    %v131 = vld [vmem:[#allocation2 + $0x1a8] sm:$0xff]
    %v132 = vld [vmem:[#allocation2 + $0x1b0] sm:$0xff]
    %v133 = vld [vmem:[#allocation2 + $0x1b8] sm:$0xff]
    %v134 = vld [vmem:[#allocation2 + $0x1c0] sm:$0xff]
    %v135 = vld [vmem:[#allocation2 + $0x1c8] sm:$0xff]
    %v136 = vld [vmem:[#allocation2 + $0x1d0] sm:$0xff]
    %v137 = vld [vmem:[#allocation2 + $0x1d8] sm:$0xff]
    %v138 = vld [vmem:[#allocation2 + $0x1e0] sm:$0xff]
    %v139 = vld [vmem:[#allocation2 + $0x1e8] sm:$0xff]
    %v140 = vld [vmem:[#allocation2 + $0x1f0] sm:$0xff]
    %v141 = vld [vmem:[#allocation2 + $0x1f8] sm:$0xff]
    %v142 = vld [vmem:[#allocation2 + $0x200] sm:$0xff]
    %v143 = vld [vmem:[#allocation2 + $0x208] sm:$0xff]
    %v144 = vld [vmem:[#allocation2 + $0x210] sm:$0xff]
    %v145 = vld [vmem:[#allocation2 + $0x218] sm:$0xff]
    %v146 = vld [vmem:[#allocation2 + $0x220] sm:$0xff]
    %v147 = vld [vmem:[#allocation2 + $0x228] sm:$0xff]
    %v148 = vld [vmem:[#allocation2 + $0x230] sm:$0xff]
    %v149 = vld [vmem:[#allocation2 + $0x238] sm:$0xff]
    %v150 = vld [vmem:[#allocation2 + $0x240] sm:$0xff]
    %v151 = vld [vmem:[#allocation2 + $0x248] sm:$0xff]
    %v152 = vld [vmem:[#allocation2 + $0x250] sm:$0xff]
    %v153 = vld [vmem:[#allocation2 + $0x258] sm:$0xff]
    %v154 = vld [vmem:[#allocation2 + $0x260] sm:$0xff]
    %v155 = vld [vmem:[#allocation2 + $0x268] sm:$0xff]
    %v156 = vld [vmem:[#allocation2 + $0x270] sm:$0xff]
    %v157 = vld [vmem:[#allocation2 + $0x278] sm:$0xff]
    %v158 = vld [vmem:[#allocation2 + $0x280] sm:$0xff]
    %v159 = vld [vmem:[#allocation2 + $0x288] sm:$0xff]
    %v160 = vld [vmem:[#allocation2 + $0x290] sm:$0xff]
    %v161 = vld [vmem:[#allocation2 + $0x298] sm:$0xff]
    %v162 = vld [vmem:[#allocation2 + $0x2a0] sm:$0xff]
    %v163 = vld [vmem:[#allocation2 + $0x2a8] sm:$0xff]
    %v164 = vld [vmem:[#allocation2 + $0x2b0] sm:$0xff]
    %v165 = vld [vmem:[#allocation2 + $0x2b8] sm:$0xff]
    %v166 = vld [vmem:[#allocation2 + $0x2c0] sm:$0xff]
    %v167 = vld [vmem:[#allocation2 + $0x2c8] sm:$0xff]
    %v168 = vld [vmem:[#allocation2 + $0x2d0] sm:$0xff]
    %v169 = vld [vmem:[#allocation2 + $0x2d8] sm:$0xff]
    %v170 = vld [vmem:[#allocation2 + $0x2e0] sm:$0xff]
    %v171 = vld [vmem:[#allocation2 + $0x2e8] sm:$0xff]
    %v172 = vld [vmem:[#allocation2 + $0x2f0] sm:$0xff]
    %v173 = vld [vmem:[#allocation2 + $0x2f8] sm:$0xff]
    %v174 = vld [vmem:[#allocation2 + $0x300] sm:$0xff]
    %v175 = vld [vmem:[#allocation2 + $0x308] sm:$0xff]
    %v176 = vld [vmem:[#allocation2 + $0x310] sm:$0xff]
    %v177 = vld [vmem:[#allocation2 + $0x318] sm:$0xff]
    %v178 = vld [vmem:[#allocation2 + $0x320] sm:$0xff]
    %v179 = vld [vmem:[#allocation2 + $0x328] sm:$0xff]
    %v180 = vld [vmem:[#allocation2 + $0x330] sm:$0xff]
    %v181 = vld [vmem:[#allocation2 + $0x338] sm:$0xff]
    %v182 = vld [vmem:[#allocation2 + $0x340] sm:$0xff]
    %v183 = vld [vmem:[#allocation2 + $0x348] sm:$0xff]
    %v184 = vld [vmem:[#allocation2 + $0x350] sm:$0xff]
    %v185 = vld [vmem:[#allocation2 + $0x358] sm:$0xff]
    %v186 = vld [vmem:[#allocation2 + $0x360] sm:$0xff]
    %v187 = vld [vmem:[#allocation2 + $0x368] sm:$0xff]
    %v188 = vld [vmem:[#allocation2 + $0x370] sm:$0xff]
    %v189 = vld [vmem:[#allocation2 + $0x378] sm:$0xff]
    %v190 = vld [vmem:[#allocation2 + $0x380] sm:$0xff]
    %v191 = vld [vmem:[#allocation2 + $0x388] sm:$0xff]
    %v192 = vld [vmem:[#allocation2 + $0x390] sm:$0xff]
    %v193 = vld [vmem:[#allocation2 + $0x398] sm:$0xff]
    %v194 = vld [vmem:[#allocation2 + $0x3a0] sm:$0xff]
    %v195 = vld [vmem:[#allocation2 + $0x3a8] sm:$0xff]
    %v196 = vld [vmem:[#allocation2 + $0x3b0] sm:$0xff]
    %v197 = vld [vmem:[#allocation2 + $0x3b8] sm:$0xff]
    %v198 = vld [vmem:[#allocation2 + $0x3c0] sm:$0xff]
    %v199 = vld [vmem:[#allocation2 + $0x3c8] sm:$0xff]
    %v200 = vld [vmem:[#allocation2 + $0x3d0] sm:$0xff]
    %v201 = vld [vmem:[#allocation2 + $0x3d8] sm:$0xff]
    %v202 = vld [vmem:[#allocation2 + $0x3e0] sm:$0xff]
    %v203 = vld [vmem:[#allocation2 + $0x3e8] sm:$0xff]
    %v204 = vld [vmem:[#allocation2 + $0x3f0] sm:$0xff]
    %v205 = vld [vmem:[#allocation2 + $0x3f8] sm:$0xff]
    %v206 = vld [vmem:[#allocation2 + $0x400] sm:$0xff]
    %v207 = vld [vmem:[#allocation2 + $0x408] sm:$0xff]
    %v208 = vld [vmem:[#allocation2 + $0x410] sm:$0xff]
    %v209 = vld [vmem:[#allocation2 + $0x418] sm:$0xff]
    %v210 = vld [vmem:[#allocation2 + $0x420] sm:$0xff]
    %v211 = vld [vmem:[#allocation2 + $0x428] sm:$0xff]
    %v212 = vld [vmem:[#allocation2 + $0x430] sm:$0xff]
    %v213 = vld [vmem:[#allocation2 + $0x438] sm:$0xff]
    %v214 = vld [vmem:[#allocation2 + $0x440] sm:$0xff]
    %v215 = vld [vmem:[#allocation2 + $0x448] sm:$0xff]
    %v216 = vld [vmem:[#allocation2 + $0x450] sm:$0xff]
    %v217 = vld [vmem:[#allocation2 + $0x458] sm:$0xff]
    %v218 = vld [vmem:[#allocation2 + $0x460] sm:$0xff]
    %v219 = vld [vmem:[#allocation2 + $0x468] sm:$0xff]
    %v220 = vld [vmem:[#allocation2 + $0x470] sm:$0xff]
    %v221 = vld [vmem:[#allocation2 + $0x478] sm:$0xff]
    %v222 = vld [vmem:[#allocation2 + $0x480] sm:$0xff]
    %v223 = vld [vmem:[#allocation2 + $0x488] sm:$0xff]
    %v224 = vld [vmem:[#allocation2 + $0x490] sm:$0xff]
    %v225 = vld [vmem:[#allocation2 + $0x498] sm:$0xff]
    %v226 = vld [vmem:[#allocation2 + $0x4a0] sm:$0xff]
    %v227 = vld [vmem:[#allocation2 + $0x4a8] sm:$0xff]
    %v228 = vld [vmem:[#allocation2 + $0x4b0] sm:$0xff]
    %v229 = vld [vmem:[#allocation2 + $0x4b8] sm:$0xff]
    %v230 = vld [vmem:[#allocation2 + $0x4c0] sm:$0xff]
    %v231 = vld [vmem:[#allocation2 + $0x4c8] sm:$0xff]
    %v232 = vld [vmem:[#allocation2 + $0x4d0] sm:$0xff]
    %v233 = vld [vmem:[#allocation2 + $0x4d8] sm:$0xff]
    %v234 = vld [vmem:[#allocation2 + $0x4e0] sm:$0xff]
    %v235 = vld [vmem:[#allocation2 + $0x4e8] sm:$0xff]
    %v236 = vld [vmem:[#allocation2 + $0x4f0] sm:$0xff]
    %v237 = vld [vmem:[#allocation2 + $0x4f8] sm:$0xff]
    %v238 = vld [vmem:[#allocation2 + $0x500] sm:$0xff]
    %v239 = vld [vmem:[#allocation2 + $0x508] sm:$0xff]
    %v240 = vld [vmem:[#allocation2 + $0x510] sm:$0xff]
    %v241 = vld [vmem:[#allocation2 + $0x518] sm:$0xff]
    %v242 = vld [vmem:[#allocation2 + $0x520] sm:$0xff]
    %v243 = vld [vmem:[#allocation2 + $0x528] sm:$0xff]
    %v244 = vld [vmem:[#allocation2 + $0x530] sm:$0xff]
    %v245 = vld [vmem:[#allocation2 + $0x538] sm:$0xff]
    %v246 = vld [vmem:[#allocation2 + $0x540] sm:$0xff]
    %v247 = vld [vmem:[#allocation2 + $0x548] sm:$0xff]
    %v248 = vld [vmem:[#allocation2 + $0x550] sm:$0xff]
    %v249 = vld [vmem:[#allocation2 + $0x558] sm:$0xff]
    %v250 = vld [vmem:[#allocation2 + $0x560] sm:$0xff]
    %v251 = vld [vmem:[#allocation2 + $0x568] sm:$0xff]
    %v252 = vld [vmem:[#allocation2 + $0x570] sm:$0xff]
    %v253 = vld [vmem:[#allocation2 + $0x578] sm:$0xff]
    %v254 = vld [vmem:[#allocation2 + $0x580] sm:$0xff]
    %v255 = vld [vmem:[#allocation2 + $0x588] sm:$0xff]
    %v256 = vld [vmem:[#allocation2 + $0x590] sm:$0xff]
    %v257 = vld [vmem:[#allocation2 + $0x598] sm:$0xff]
    %v258 = vld [vmem:[#allocation2 + $0x5a0] sm:$0xff]
    %v259 = vld [vmem:[#allocation2 + $0x5a8] sm:$0xff]
    %v260 = vld [vmem:[#allocation2 + $0x5b0] sm:$0xff]
    %v261 = vld [vmem:[#allocation2 + $0x5b8] sm:$0xff]
    %v262 = vld [vmem:[#allocation2 + $0x5c0] sm:$0xff]
    %v263 = vld [vmem:[#allocation2 + $0x5c8] sm:$0xff]
    %v264 = vld [vmem:[#allocation2 + $0x5d0] sm:$0xff]
    %v265 = vld [vmem:[#allocation2 + $0x5d8] sm:$0xff]
    %v266 = vld [vmem:[#allocation2 + $0x5e0] sm:$0xff]
    %v267 = vld [vmem:[#allocation2 + $0x5e8] sm:$0xff]
    %v268 = vld [vmem:[#allocation2 + $0x5f0] sm:$0xff]
    %v269 = vld [vmem:[#allocation2 + $0x5f8] sm:$0xff]
    %v270 = vld [vmem:[#allocation2 + $0x600] sm:$0xff]
    %v271 = vld [vmem:[#allocation2 + $0x608] sm:$0xff]
    %v272 = vld [vmem:[#allocation2 + $0x610] sm:$0xff]
    %v273 = vld [vmem:[#allocation2 + $0x618] sm:$0xff]
    %v274 = vld [vmem:[#allocation2 + $0x620] sm:$0xff]
    %v275 = vld [vmem:[#allocation2 + $0x628] sm:$0xff]
    %v276 = vld [vmem:[#allocation2 + $0x630] sm:$0xff]
    %v277 = vld [vmem:[#allocation2 + $0x638] sm:$0xff]
    %v278 = vld [vmem:[#allocation2 + $0x640] sm:$0xff]
    %v279 = vld [vmem:[#allocation2 + $0x648] sm:$0xff]
    %v280 = vld [vmem:[#allocation2 + $0x650] sm:$0xff]
    %v281 = vld [vmem:[#allocation2 + $0x658] sm:$0xff]
    %v282 = vld [vmem:[#allocation2 + $0x660] sm:$0xff]
    %v283 = vld [vmem:[#allocation2 + $0x668] sm:$0xff]
    %v284 = vld [vmem:[#allocation2 + $0x670] sm:$0xff]
    %v285 = vld [vmem:[#allocation2 + $0x678] sm:$0xff]
    %v286 = vld [vmem:[#allocation2 + $0x680] sm:$0xff]
    %v287 = vld [vmem:[#allocation2 + $0x688] sm:$0xff]
    %v288 = vld [vmem:[#allocation2 + $0x690] sm:$0xff]
    %v289 = vld [vmem:[#allocation2 + $0x698] sm:$0xff]
    %v290 = vld [vmem:[#allocation2 + $0x6a0] sm:$0xff]
    %v291 = vld [vmem:[#allocation2 + $0x6a8] sm:$0xff]
    %v292 = vld [vmem:[#allocation2 + $0x6b0] sm:$0xff]
    %v293 = vld [vmem:[#allocation2 + $0x6b8] sm:$0xff]
    %v294 = vld [vmem:[#allocation2 + $0x6c0] sm:$0xff]
    %v295 = vld [vmem:[#allocation2 + $0x6c8] sm:$0xff]
    %v296 = vld [vmem:[#allocation2 + $0x6d0] sm:$0xff]
    %v297 = vld [vmem:[#allocation2 + $0x6d8] sm:$0xff]
    %v298 = vld [vmem:[#allocation2 + $0x6e0] sm:$0xff]
    %v299 = vld [vmem:[#allocation2 + $0x6e8] sm:$0xff]
    %v300 = vld [vmem:[#allocation2 + $0x6f0] sm:$0xff]
    %v301 = vld [vmem:[#allocation2 + $0x6f8] sm:$0xff]
    %v302 = vld [vmem:[%s2] sm:$0xf]
    %v304 = vlaneseq
    %v305 = vshrl.u32 %v304, 7
    %v306 = vsub.s32 0, %v305
    %v307 = vrot.slane %v302, %v306
    %v308 = vlaneseq
    %v309 = vshrl.u32 %v308, 7
    %v310 = vsub.s32 1, %v309
    %v311 = vrot.slane %v302, %v310
    %v312 = vlaneseq
    %v313 = vshrl.u32 %v312, 7
    %v314 = vsub.s32 2, %v313
    %v315 = vrot.slane %v302, %v314
    %v316 = vlaneseq
    %v317 = vshrl.u32 %v316, 7
    %v318 = vsub.s32 3, %v317
    %v319 = vrot.slane %v302, %v318
    %v328 = vunpack.c.l.b16 %v74
    %v329 = vunpack.c.h.b16 %v74
    %v330 = vunpack.c.l.b16 %v75
    %v331 = vunpack.c.h.b16 %v75
    %v332 = vunpack.c.l.b16 %v76
    %v333 = vunpack.c.h.b16 %v76
    %v334 = vunpack.c.l.b16 %v77
    %v335 = vpack.c.b16 %v328, %v328
    %v336 = vpack.c.b16 %v329, %v329
    %v337 = vpack.c.b16 %v330, %v330
    %v338 = vpack.c.b16 %v331, %v331
    %v339 = vpack.c.b16 %v332, %v332
    %v340 = vpack.c.b16 %v333, %v333
    %v341 = vpack.c.b16 %v334, %v334
    %v573 = vunpack.c.l.b16 %v78
    %v574 = vunpack.c.h.b16 %v78
    %v575 = vunpack.c.l.b16 %v79
    %v576 = vunpack.c.h.b16 %v79
    %v577 = vunpack.c.l.b16 %v80
    %v578 = vunpack.c.h.b16 %v80
    %v579 = vunpack.c.l.b16 %v81
    %v580 = vunpack.c.h.b16 %v81
    %v581 = vunpack.c.l.b16 %v82
    %v582 = vunpack.c.h.b16 %v82
    %v583 = vunpack.c.l.b16 %v83
    %v584 = vunpack.c.h.b16 %v83
    %v585 = vunpack.c.l.b16 %v84
    %v586 = vunpack.c.h.b16 %v84
    %v587 = vunpack.c.l.b16 %v85
    %v588 = vunpack.c.h.b16 %v85
    %v589 = vunpack.c.l.b16 %v86
    %v590 = vunpack.c.h.b16 %v86
    %v591 = vunpack.c.l.b16 %v87
    %v592 = vunpack.c.h.b16 %v87
    %v593 = vunpack.c.l.b16 %v88
    %v594 = vunpack.c.h.b16 %v88
    %v595 = vunpack.c.l.b16 %v89
    %v596 = vunpack.c.h.b16 %v89
    %v597 = vunpack.c.l.b16 %v90
    %v598 = vunpack.c.h.b16 %v90
    %v599 = vunpack.c.l.b16 %v91
    %v600 = vunpack.c.h.b16 %v91
    %v601 = vunpack.c.l.b16 %v92
    %v602 = vunpack.c.h.b16 %v92
    %v603 = vunpack.c.l.b16 %v93
    %v604 = vunpack.c.h.b16 %v93
    %v605 = vunpack.c.l.b16 %v94
    %v606 = vunpack.c.h.b16 %v94
    %v607 = vunpack.c.l.b16 %v95
    %v608 = vunpack.c.h.b16 %v95
    %v609 = vunpack.c.l.b16 %v96
    %v610 = vunpack.c.h.b16 %v96
    %v611 = vunpack.c.l.b16 %v97
    %v612 = vunpack.c.h.b16 %v97
    %v613 = vunpack.c.l.b16 %v98
    %v614 = vunpack.c.h.b16 %v98
    %v615 = vunpack.c.l.b16 %v99
    %v616 = vunpack.c.h.b16 %v99
    %v617 = vunpack.c.l.b16 %v100
    %v618 = vunpack.c.h.b16 %v100
    %v619 = vunpack.c.l.b16 %v101
    %v620 = vunpack.c.h.b16 %v101
    %v621 = vunpack.c.l.b16 %v102
    %v622 = vunpack.c.h.b16 %v102
    %v623 = vunpack.c.l.b16 %v103
    %v624 = vunpack.c.h.b16 %v103
    %v625 = vunpack.c.l.b16 %v104
    %v626 = vunpack.c.h.b16 %v104
    %v627 = vunpack.c.l.b16 %v105
    %v628 = vunpack.c.h.b16 %v105
    %v629 = vunpack.c.l.b16 %v106
    %v630 = vunpack.c.h.b16 %v106
    %v631 = vunpack.c.l.b16 %v107
    %v632 = vunpack.c.h.b16 %v107
    %v633 = vunpack.c.l.b16 %v108
    %v634 = vunpack.c.h.b16 %v108
    %v635 = vunpack.c.l.b16 %v109
    %v636 = vunpack.c.h.b16 %v109
    %v637 = vunpack.c.l.b16 %v110
    %v638 = vunpack.c.h.b16 %v110
    %v639 = vunpack.c.l.b16 %v111
    %v640 = vunpack.c.h.b16 %v111
    %v641 = vunpack.c.l.b16 %v112
    %v642 = vunpack.c.h.b16 %v112
    %v643 = vunpack.c.l.b16 %v113
    %v644 = vunpack.c.h.b16 %v113
    %v645 = vunpack.c.l.b16 %v114
    %v646 = vunpack.c.h.b16 %v114
    %v647 = vunpack.c.l.b16 %v115
    %v648 = vunpack.c.h.b16 %v115
    %v649 = vunpack.c.l.b16 %v116
    %v650 = vunpack.c.h.b16 %v116
    %v651 = vunpack.c.l.b16 %v117
    %v652 = vunpack.c.h.b16 %v117
    %v653 = vunpack.c.l.b16 %v118
    %v654 = vunpack.c.h.b16 %v118
    %v655 = vunpack.c.l.b16 %v119
    %v656 = vunpack.c.h.b16 %v119
    %v657 = vunpack.c.l.b16 %v120
    %v658 = vunpack.c.h.b16 %v120
    %v659 = vunpack.c.l.b16 %v121
    %v660 = vunpack.c.h.b16 %v121
    %v661 = vunpack.c.l.b16 %v122
    %v662 = vunpack.c.h.b16 %v122
    %v663 = vunpack.c.l.b16 %v123
    %v664 = vunpack.c.h.b16 %v123
    %v665 = vunpack.c.l.b16 %v124
    %v666 = vunpack.c.h.b16 %v124
    %v667 = vunpack.c.l.b16 %v125
    %v668 = vunpack.c.h.b16 %v125
    %v669 = vunpack.c.l.b16 %v126
    %v670 = vunpack.c.h.b16 %v126
    %v671 = vunpack.c.l.b16 %v127
    %v672 = vunpack.c.h.b16 %v127
    %v673 = vunpack.c.l.b16 %v128
    %v674 = vunpack.c.h.b16 %v128
    %v675 = vunpack.c.l.b16 %v129
    %v676 = vunpack.c.h.b16 %v129
    %v677 = vunpack.c.l.b16 %v130
    %v678 = vunpack.c.h.b16 %v130
    %v679 = vunpack.c.l.b16 %v131
    %v680 = vunpack.c.h.b16 %v131
    %v681 = vunpack.c.l.b16 %v132
    %v682 = vunpack.c.h.b16 %v132
    %v683 = vunpack.c.l.b16 %v133
    %v684 = vunpack.c.h.b16 %v133
    %v685 = vunpack.c.l.b16 %v134
    %v686 = vunpack.c.h.b16 %v134
    %v687 = vunpack.c.l.b16 %v135
    %v688 = vunpack.c.h.b16 %v135
    %v689 = vunpack.c.l.b16 %v136
    %v690 = vunpack.c.h.b16 %v136
    %v691 = vunpack.c.l.b16 %v137
    %v692 = vunpack.c.h.b16 %v137
    %v693 = vunpack.c.l.b16 %v138
    %v694 = vunpack.c.h.b16 %v138
    %v695 = vunpack.c.l.b16 %v139
    %v696 = vunpack.c.h.b16 %v139
    %v697 = vunpack.c.l.b16 %v140
    %v698 = vunpack.c.h.b16 %v140
    %v699 = vunpack.c.l.b16 %v141
    %v700 = vunpack.c.h.b16 %v141
    %v701 = vunpack.c.l.b16 %v142
    %v702 = vunpack.c.h.b16 %v142
    %v703 = vunpack.c.l.b16 %v143
    %v704 = vunpack.c.h.b16 %v143
    %v705 = vunpack.c.l.b16 %v144
    %v706 = vunpack.c.h.b16 %v144
    %v707 = vunpack.c.l.b16 %v145
    %v708 = vunpack.c.h.b16 %v145
    %v709 = vunpack.c.l.b16 %v146
    %v710 = vunpack.c.h.b16 %v146
    %v711 = vunpack.c.l.b16 %v147
    %v712 = vunpack.c.h.b16 %v147
    %v713 = vunpack.c.l.b16 %v148
    %v714 = vunpack.c.h.b16 %v148
    %v715 = vunpack.c.l.b16 %v149
    %v716 = vunpack.c.h.b16 %v149
    %v717 = vunpack.c.l.b16 %v150
    %v718 = vunpack.c.h.b16 %v150
    %v719 = vunpack.c.l.b16 %v151
    %v720 = vunpack.c.h.b16 %v151
    %v721 = vunpack.c.l.b16 %v152
    %v722 = vunpack.c.h.b16 %v152
    %v723 = vunpack.c.l.b16 %v153
    %v724 = vunpack.c.h.b16 %v153
    %v725 = vunpack.c.l.b16 %v154
    %v726 = vunpack.c.h.b16 %v154
    %v727 = vunpack.c.l.b16 %v155
    %v728 = vunpack.c.h.b16 %v155
    %v729 = vunpack.c.l.b16 %v156
    %v730 = vunpack.c.h.b16 %v156
    %v731 = vunpack.c.l.b16 %v157
    %v732 = vunpack.c.h.b16 %v157
    %v733 = vunpack.c.l.b16 %v158
    %v734 = vunpack.c.h.b16 %v158
    %v735 = vunpack.c.l.b16 %v159
    %v736 = vunpack.c.h.b16 %v159
    %v737 = vunpack.c.l.b16 %v160
    %v738 = vunpack.c.h.b16 %v160
    %v739 = vunpack.c.l.b16 %v161
    %v740 = vunpack.c.h.b16 %v161
    %v741 = vunpack.c.l.b16 %v162
    %v742 = vunpack.c.h.b16 %v162
    %v743 = vunpack.c.l.b16 %v163
    %v744 = vunpack.c.h.b16 %v163
    %v745 = vunpack.c.l.b16 %v164
    %v746 = vunpack.c.h.b16 %v164
    %v747 = vunpack.c.l.b16 %v165
    %v748 = vunpack.c.h.b16 %v165
    %v749 = vunpack.c.l.b16 %v166
    %v750 = vunpack.c.h.b16 %v166
    %v751 = vunpack.c.l.b16 %v167
    %v752 = vunpack.c.h.b16 %v167
    %v753 = vunpack.c.l.b16 %v168
    %v754 = vunpack.c.h.b16 %v168
    %v755 = vunpack.c.l.b16 %v169
    %v756 = vunpack.c.h.b16 %v169
    %v757 = vunpack.c.l.b16 %v170
    %v758 = vunpack.c.h.b16 %v170
    %v759 = vunpack.c.l.b16 %v171
    %v760 = vunpack.c.h.b16 %v171
    %v761 = vunpack.c.l.b16 %v172
    %v762 = vunpack.c.h.b16 %v172
    %v763 = vunpack.c.l.b16 %v173
    %v764 = vunpack.c.h.b16 %v173
    %v765 = vunpack.c.l.b16 %v174
    %v766 = vunpack.c.h.b16 %v174
    %v767 = vunpack.c.l.b16 %v175
    %v768 = vunpack.c.h.b16 %v175
    %v769 = vunpack.c.l.b16 %v176
    %v770 = vunpack.c.h.b16 %v176
    %v771 = vunpack.c.l.b16 %v177
    %v772 = vunpack.c.h.b16 %v177
    %v773 = vunpack.c.l.b16 %v178
    %v774 = vunpack.c.h.b16 %v178
    %v775 = vunpack.c.l.b16 %v179
    %v776 = vunpack.c.h.b16 %v179
    %v777 = vunpack.c.l.b16 %v180
    %v778 = vunpack.c.h.b16 %v180
    %v779 = vunpack.c.l.b16 %v181
    %v780 = vunpack.c.h.b16 %v181
    %v781 = vunpack.c.l.b16 %v182
    %v782 = vunpack.c.h.b16 %v182
    %v783 = vunpack.c.l.b16 %v183
    %v784 = vunpack.c.h.b16 %v183
    %v785 = vunpack.c.l.b16 %v184
    %v786 = vunpack.c.h.b16 %v184
    %v787 = vunpack.c.l.b16 %v185
    %v788 = vunpack.c.h.b16 %v185
    %v789 = vunpack.c.l.b16 %v186
    %v790 = vunpack.c.h.b16 %v186
    %v791 = vunpack.c.l.b16 %v187
    %v792 = vunpack.c.h.b16 %v187
    %v793 = vunpack.c.l.b16 %v188
    %v794 = vunpack.c.h.b16 %v188
    %v795 = vunpack.c.l.b16 %v189
    %v796 = vunpack.c.h.b16 %v189
    %v797 = vunpack.c.l.b16 %v190
    %v798 = vunpack.c.h.b16 %v190
    %v799 = vunpack.c.l.b16 %v191
    %v800 = vunpack.c.h.b16 %v191
    %v801 = vunpack.c.l.b16 %v192
    %v802 = vunpack.c.h.b16 %v192
    %v803 = vunpack.c.l.b16 %v193
    %v804 = vunpack.c.h.b16 %v193
    %v805 = vunpack.c.l.b16 %v194
    %v806 = vunpack.c.h.b16 %v194
    %v807 = vunpack.c.l.b16 %v195
    %v808 = vunpack.c.h.b16 %v195
    %v809 = vunpack.c.l.b16 %v196
    %v810 = vunpack.c.h.b16 %v196
    %v811 = vunpack.c.l.b16 %v197
    %v812 = vunpack.c.h.b16 %v197
    %v813 = vunpack.c.l.b16 %v198
    %v814 = vunpack.c.h.b16 %v198
    %v815 = vunpack.c.l.b16 %v199
    %v816 = vunpack.c.h.b16 %v199
    %v817 = vunpack.c.l.b16 %v200
    %v818 = vunpack.c.h.b16 %v200
    %v819 = vunpack.c.l.b16 %v201
    %v820 = vunpack.c.h.b16 %v201
    %v821 = vunpack.c.l.b16 %v202
    %v822 = vunpack.c.h.b16 %v202
    %v823 = vunpack.c.l.b16 %v203
    %v824 = vunpack.c.h.b16 %v203
    %v825 = vunpack.c.l.b16 %v204
    %v826 = vunpack.c.h.b16 %v204
    %v827 = vunpack.c.l.b16 %v205
    %v828 = vunpack.c.h.b16 %v205
    %v829 = vunpack.c.l.b16 %v206
    %v830 = vunpack.c.h.b16 %v206
    %v831 = vunpack.c.l.b16 %v207
    %v832 = vunpack.c.h.b16 %v207
    %v833 = vunpack.c.l.b16 %v208
    %v834 = vunpack.c.h.b16 %v208
    %v835 = vunpack.c.l.b16 %v209
    %v836 = vunpack.c.h.b16 %v209
    %v837 = vunpack.c.l.b16 %v210
    %v838 = vunpack.c.h.b16 %v210
    %v839 = vunpack.c.l.b16 %v211
    %v840 = vunpack.c.h.b16 %v211
    %v841 = vunpack.c.l.b16 %v212
    %v842 = vunpack.c.h.b16 %v212
    %v843 = vunpack.c.l.b16 %v213
    %v844 = vunpack.c.h.b16 %v213
    %v845 = vunpack.c.l.b16 %v214
    %v846 = vunpack.c.h.b16 %v214
    %v847 = vunpack.c.l.b16 %v215
    %v848 = vunpack.c.h.b16 %v215
    %v849 = vunpack.c.l.b16 %v216
    %v850 = vunpack.c.h.b16 %v216
    %v851 = vunpack.c.l.b16 %v217
    %v852 = vunpack.c.h.b16 %v217
    %v853 = vunpack.c.l.b16 %v218
    %v854 = vunpack.c.h.b16 %v218
    %v855 = vunpack.c.l.b16 %v219
    %v856 = vunpack.c.h.b16 %v219
    %v857 = vunpack.c.l.b16 %v220
    %v858 = vunpack.c.h.b16 %v220
    %v859 = vunpack.c.l.b16 %v221
    %v860 = vunpack.c.h.b16 %v221
    %v861 = vunpack.c.l.b16 %v222
    %v862 = vunpack.c.h.b16 %v222
    %v863 = vunpack.c.l.b16 %v223
    %v864 = vunpack.c.h.b16 %v223
    %v865 = vunpack.c.l.b16 %v224
    %v866 = vunpack.c.h.b16 %v224
    %v867 = vunpack.c.l.b16 %v225
    %v868 = vunpack.c.h.b16 %v225
    %v869 = vunpack.c.l.b16 %v226
    %v870 = vunpack.c.h.b16 %v226
    %v871 = vunpack.c.l.b16 %v227
    %v872 = vunpack.c.h.b16 %v227
    %v873 = vunpack.c.l.b16 %v228
    %v874 = vunpack.c.h.b16 %v228
    %v875 = vunpack.c.l.b16 %v229
    %v876 = vunpack.c.h.b16 %v229
    %v877 = vunpack.c.l.b16 %v230
    %v878 = vunpack.c.h.b16 %v230
    %v879 = vunpack.c.l.b16 %v231
    %v880 = vunpack.c.h.b16 %v231
    %v881 = vunpack.c.l.b16 %v232
    %v882 = vunpack.c.h.b16 %v232
    %v883 = vunpack.c.l.b16 %v233
    %v884 = vunpack.c.h.b16 %v233
    %v885 = vunpack.c.l.b16 %v234
    %v886 = vunpack.c.h.b16 %v234
    %v887 = vunpack.c.l.b16 %v235
    %v888 = vunpack.c.h.b16 %v235
    %v889 = vunpack.c.l.b16 %v236
    %v890 = vunpack.c.h.b16 %v236
    %v891 = vunpack.c.l.b16 %v237
    %v892 = vunpack.c.h.b16 %v237
    %v893 = vunpack.c.l.b16 %v238
    %v894 = vunpack.c.h.b16 %v238
    %v895 = vunpack.c.l.b16 %v239
    %v896 = vunpack.c.h.b16 %v239
    %v897 = vunpack.c.l.b16 %v240
    %v898 = vunpack.c.h.b16 %v240
    %v899 = vunpack.c.l.b16 %v241
    %v900 = vunpack.c.h.b16 %v241
    %v901 = vunpack.c.l.b16 %v242
    %v902 = vunpack.c.h.b16 %v242
    %v903 = vunpack.c.l.b16 %v243
    %v904 = vunpack.c.h.b16 %v243
    %v905 = vunpack.c.l.b16 %v244
    %v906 = vunpack.c.h.b16 %v244
    %v907 = vunpack.c.l.b16 %v245
    %v908 = vunpack.c.h.b16 %v245
    %v909 = vunpack.c.l.b16 %v246
    %v910 = vunpack.c.h.b16 %v246
    %v911 = vunpack.c.l.b16 %v247
    %v912 = vunpack.c.h.b16 %v247
    %v913 = vunpack.c.l.b16 %v248
    %v914 = vunpack.c.h.b16 %v248
    %v915 = vunpack.c.l.b16 %v249
    %v916 = vunpack.c.h.b16 %v249
    %v917 = vunpack.c.l.b16 %v250
    %v918 = vunpack.c.h.b16 %v250
    %v919 = vunpack.c.l.b16 %v251
    %v920 = vunpack.c.h.b16 %v251
    %v921 = vunpack.c.l.b16 %v252
    %v922 = vunpack.c.h.b16 %v252
    %v923 = vunpack.c.l.b16 %v253
    %v924 = vunpack.c.h.b16 %v253
    %v925 = vunpack.c.l.b16 %v254
    %v926 = vunpack.c.h.b16 %v254
    %v927 = vunpack.c.l.b16 %v255
    %v928 = vunpack.c.h.b16 %v255
    %v929 = vunpack.c.l.b16 %v256
    %v930 = vunpack.c.h.b16 %v256
    %v931 = vunpack.c.l.b16 %v257
    %v932 = vunpack.c.h.b16 %v257
    %v933 = vunpack.c.l.b16 %v258
    %v934 = vunpack.c.h.b16 %v258
    %v935 = vunpack.c.l.b16 %v259
    %v936 = vunpack.c.h.b16 %v259
    %v937 = vunpack.c.l.b16 %v260
    %v938 = vunpack.c.h.b16 %v260
    %v939 = vunpack.c.l.b16 %v261
    %v940 = vunpack.c.h.b16 %v261
    %v941 = vunpack.c.l.b16 %v262
    %v942 = vunpack.c.h.b16 %v262
    %v943 = vunpack.c.l.b16 %v263
    %v944 = vunpack.c.h.b16 %v263
    %v945 = vunpack.c.l.b16 %v264
    %v946 = vunpack.c.h.b16 %v264
    %v947 = vunpack.c.l.b16 %v265
    %v948 = vunpack.c.h.b16 %v265
    %v949 = vunpack.c.l.b16 %v266
    %v950 = vunpack.c.h.b16 %v266
    %v951 = vunpack.c.l.b16 %v267
    %v952 = vunpack.c.h.b16 %v267
    %v953 = vunpack.c.l.b16 %v268
    %v954 = vunpack.c.h.b16 %v268
    %v955 = vunpack.c.l.b16 %v269
    %v956 = vunpack.c.h.b16 %v269
    %v957 = vunpack.c.l.b16 %v270
    %v958 = vunpack.c.h.b16 %v270
    %v959 = vunpack.c.l.b16 %v271
    %v960 = vunpack.c.h.b16 %v271
    %v961 = vunpack.c.l.b16 %v272
    %v962 = vunpack.c.h.b16 %v272
    %v963 = vunpack.c.l.b16 %v273
    %v964 = vunpack.c.h.b16 %v273
    %v965 = vunpack.c.l.b16 %v274
    %v966 = vunpack.c.h.b16 %v274
    %v967 = vunpack.c.l.b16 %v275
    %v968 = vunpack.c.h.b16 %v275
    %v969 = vunpack.c.l.b16 %v276
    %v970 = vunpack.c.h.b16 %v276
    %v971 = vunpack.c.l.b16 %v277
    %v972 = vunpack.c.h.b16 %v277
    %v973 = vunpack.c.l.b16 %v278
    %v974 = vunpack.c.h.b16 %v278
    %v975 = vunpack.c.l.b16 %v279
    %v976 = vunpack.c.h.b16 %v279
    %v977 = vunpack.c.l.b16 %v280
    %v978 = vunpack.c.h.b16 %v280
    %v979 = vunpack.c.l.b16 %v281
    %v980 = vunpack.c.h.b16 %v281
    %v981 = vunpack.c.l.b16 %v282
    %v982 = vunpack.c.h.b16 %v282
    %v983 = vunpack.c.l.b16 %v283
    %v984 = vunpack.c.h.b16 %v283
    %v985 = vunpack.c.l.b16 %v284
    %v986 = vunpack.c.h.b16 %v284
    %v987 = vunpack.c.l.b16 %v285
    %v988 = vunpack.c.h.b16 %v285
    %v989 = vunpack.c.l.b16 %v286
    %v990 = vunpack.c.h.b16 %v286
    %v991 = vunpack.c.l.b16 %v287
    %v992 = vunpack.c.h.b16 %v287
    %v993 = vunpack.c.l.b16 %v288
    %v994 = vunpack.c.h.b16 %v288
    %v995 = vunpack.c.l.b16 %v289
    %v996 = vunpack.c.h.b16 %v289
    %v997 = vunpack.c.l.b16 %v290
    %v998 = vunpack.c.h.b16 %v290
    %v999 = vunpack.c.l.b16 %v291
    %v1000 = vunpack.c.h.b16 %v291
    %v1001 = vunpack.c.l.b16 %v292
    %v1002 = vunpack.c.h.b16 %v292
    %v1003 = vunpack.c.l.b16 %v293
    %v1004 = vunpack.c.h.b16 %v293
    %v1005 = vunpack.c.l.b16 %v294
    %v1006 = vunpack.c.h.b16 %v294
    %v1007 = vunpack.c.l.b16 %v295
    %v1008 = vunpack.c.h.b16 %v295
    %v1009 = vunpack.c.l.b16 %v296
    %v1010 = vunpack.c.h.b16 %v296
    %v1011 = vunpack.c.l.b16 %v297
    %v1012 = vunpack.c.h.b16 %v297
    %v1013 = vunpack.c.l.b16 %v298
    %v1014 = vunpack.c.h.b16 %v298
    %v1015 = vunpack.c.l.b16 %v299
    %v1016 = vunpack.c.h.b16 %v299
    %v1017 = vunpack.c.l.b16 %v300
    %v1018 = vunpack.c.h.b16 %v300
    %v1019 = vunpack.c.l.b16 %v301
    %v1020 = vunpack.c.h.b16 %v301
    %v1021 = vpack.c.b16 %v577, %v573
    %v1022 = vpack.c.b16 %v578, %v574
    %v1023 = vpack.c.b16 %v579, %v575
    %v1024 = vpack.c.b16 %v580, %v576
    %v1025 = vpack.c.b16 %v585, %v581
    %v1026 = vpack.c.b16 %v586, %v582
    %v1027 = vpack.c.b16 %v587, %v583
    %v1028 = vpack.c.b16 %v588, %v584
    %v1029 = vpack.c.b16 %v593, %v589
    %v1030 = vpack.c.b16 %v594, %v590
    %v1031 = vpack.c.b16 %v595, %v591
    %v1032 = vpack.c.b16 %v596, %v592
    %v1033 = vpack.c.b16 %v601, %v597
    %v1034 = vpack.c.b16 %v602, %v598
    %v1035 = vpack.c.b16 %v603, %v599
    %v1036 = vpack.c.b16 %v604, %v600
    %v1037 = vpack.c.b16 %v609, %v605
    %v1038 = vpack.c.b16 %v610, %v606
    %v1039 = vpack.c.b16 %v611, %v607
    %v1040 = vpack.c.b16 %v612, %v608
    %v1041 = vpack.c.b16 %v617, %v613
    %v1042 = vpack.c.b16 %v618, %v614
    %v1043 = vpack.c.b16 %v619, %v615
    %v1044 = vpack.c.b16 %v620, %v616
    %v1045 = vpack.c.b16 %v625, %v621
    %v1046 = vpack.c.b16 %v626, %v622
    %v1047 = vpack.c.b16 %v627, %v623
    %v1048 = vpack.c.b16 %v628, %v624
    %v1049 = vpack.c.b16 %v633, %v629
    %v1050 = vpack.c.b16 %v634, %v630
    %v1051 = vpack.c.b16 %v635, %v631
    %v1052 = vpack.c.b16 %v636, %v632
    %v1053 = vpack.c.b16 %v641, %v637
    %v1054 = vpack.c.b16 %v642, %v638
    %v1055 = vpack.c.b16 %v643, %v639
    %v1056 = vpack.c.b16 %v644, %v640
    %v1057 = vpack.c.b16 %v649, %v645
    %v1058 = vpack.c.b16 %v650, %v646
    %v1059 = vpack.c.b16 %v651, %v647
    %v1060 = vpack.c.b16 %v652, %v648
    %v1061 = vpack.c.b16 %v657, %v653
    %v1062 = vpack.c.b16 %v658, %v654
    %v1063 = vpack.c.b16 %v659, %v655
    %v1064 = vpack.c.b16 %v660, %v656
    %v1065 = vpack.c.b16 %v665, %v661
    %v1066 = vpack.c.b16 %v666, %v662
    %v1067 = vpack.c.b16 %v667, %v663
    %v1068 = vpack.c.b16 %v668, %v664
    %v1069 = vpack.c.b16 %v673, %v669
    %v1070 = vpack.c.b16 %v674, %v670
    %v1071 = vpack.c.b16 %v675, %v671
    %v1072 = vpack.c.b16 %v676, %v672
    %v1073 = vpack.c.b16 %v681, %v677
    %v1074 = vpack.c.b16 %v682, %v678
    %v1075 = vpack.c.b16 %v683, %v679
    %v1076 = vpack.c.b16 %v684, %v680
    %v1077 = vpack.c.b16 %v689, %v685
    %v1078 = vpack.c.b16 %v690, %v686
    %v1079 = vpack.c.b16 %v691, %v687
    %v1080 = vpack.c.b16 %v692, %v688
    %v1081 = vpack.c.b16 %v697, %v693
    %v1082 = vpack.c.b16 %v698, %v694
    %v1083 = vpack.c.b16 %v699, %v695
    %v1084 = vpack.c.b16 %v700, %v696
    %v1085 = vpack.c.b16 %v705, %v701
    %v1086 = vpack.c.b16 %v706, %v702
    %v1087 = vpack.c.b16 %v707, %v703
    %v1088 = vpack.c.b16 %v708, %v704
    %v1089 = vpack.c.b16 %v713, %v709
    %v1090 = vpack.c.b16 %v714, %v710
    %v1091 = vpack.c.b16 %v715, %v711
    %v1092 = vpack.c.b16 %v716, %v712
    %v1093 = vpack.c.b16 %v721, %v717
    %v1094 = vpack.c.b16 %v722, %v718
    %v1095 = vpack.c.b16 %v723, %v719
    %v1096 = vpack.c.b16 %v724, %v720
    %v1097 = vpack.c.b16 %v729, %v725
    %v1098 = vpack.c.b16 %v730, %v726
    %v1099 = vpack.c.b16 %v731, %v727
    %v1100 = vpack.c.b16 %v732, %v728
    %v1101 = vpack.c.b16 %v737, %v733
    %v1102 = vpack.c.b16 %v738, %v734
    %v1103 = vpack.c.b16 %v739, %v735
    %v1104 = vpack.c.b16 %v740, %v736
    %v1105 = vpack.c.b16 %v745, %v741
    %v1106 = vpack.c.b16 %v746, %v742
    %v1107 = vpack.c.b16 %v747, %v743
    %v1108 = vpack.c.b16 %v748, %v744
    %v1109 = vpack.c.b16 %v753, %v749
    %v1110 = vpack.c.b16 %v754, %v750
    %v1111 = vpack.c.b16 %v755, %v751
    %v1112 = vpack.c.b16 %v756, %v752
    %v1113 = vpack.c.b16 %v761, %v757
    %v1114 = vpack.c.b16 %v762, %v758
    %v1115 = vpack.c.b16 %v763, %v759
    %v1116 = vpack.c.b16 %v764, %v760
    %v1117 = vpack.c.b16 %v769, %v765
    %v1118 = vpack.c.b16 %v770, %v766
    %v1119 = vpack.c.b16 %v771, %v767
    %v1120 = vpack.c.b16 %v772, %v768
    %v1121 = vpack.c.b16 %v777, %v773
    %v1122 = vpack.c.b16 %v778, %v774
    %v1123 = vpack.c.b16 %v779, %v775
    %v1124 = vpack.c.b16 %v780, %v776
    %v1125 = vpack.c.b16 %v785, %v781
    %v1126 = vpack.c.b16 %v786, %v782
    %v1127 = vpack.c.b16 %v787, %v783
    %v1128 = vpack.c.b16 %v788, %v784
    %v1129 = vpack.c.b16 %v793, %v789
    %v1130 = vpack.c.b16 %v794, %v790
    %v1131 = vpack.c.b16 %v795, %v791
    %v1132 = vpack.c.b16 %v796, %v792
    %v1133 = vpack.c.b16 %v801, %v797
    %v1134 = vpack.c.b16 %v802, %v798
    %v1135 = vpack.c.b16 %v803, %v799
    %v1136 = vpack.c.b16 %v804, %v800
    %v1137 = vpack.c.b16 %v809, %v805
    %v1138 = vpack.c.b16 %v810, %v806
    %v1139 = vpack.c.b16 %v811, %v807
    %v1140 = vpack.c.b16 %v812, %v808
    %v1141 = vpack.c.b16 %v817, %v813
    %v1142 = vpack.c.b16 %v818, %v814
    %v1143 = vpack.c.b16 %v819, %v815
    %v1144 = vpack.c.b16 %v820, %v816
    %v1145 = vpack.c.b16 %v825, %v821
    %v1146 = vpack.c.b16 %v826, %v822
    %v1147 = vpack.c.b16 %v827, %v823
    %v1148 = vpack.c.b16 %v828, %v824
    %v1149 = vpack.c.b16 %v833, %v829
    %v1150 = vpack.c.b16 %v834, %v830
    %v1151 = vpack.c.b16 %v835, %v831
    %v1152 = vpack.c.b16 %v836, %v832
    %v1153 = vpack.c.b16 %v841, %v837
    %v1154 = vpack.c.b16 %v842, %v838
    %v1155 = vpack.c.b16 %v843, %v839
    %v1156 = vpack.c.b16 %v844, %v840
    %v1157 = vpack.c.b16 %v849, %v845
    %v1158 = vpack.c.b16 %v850, %v846
    %v1159 = vpack.c.b16 %v851, %v847
    %v1160 = vpack.c.b16 %v852, %v848
    %v1161 = vpack.c.b16 %v857, %v853
    %v1162 = vpack.c.b16 %v858, %v854
    %v1163 = vpack.c.b16 %v859, %v855
    %v1164 = vpack.c.b16 %v860, %v856
    %v1165 = vpack.c.b16 %v865, %v861
    %v1166 = vpack.c.b16 %v866, %v862
    %v1167 = vpack.c.b16 %v867, %v863
    %v1168 = vpack.c.b16 %v868, %v864
    %v1169 = vpack.c.b16 %v873, %v869
    %v1170 = vpack.c.b16 %v874, %v870
    %v1171 = vpack.c.b16 %v875, %v871
    %v1172 = vpack.c.b16 %v876, %v872
    %v1173 = vpack.c.b16 %v881, %v877
    %v1174 = vpack.c.b16 %v882, %v878
    %v1175 = vpack.c.b16 %v883, %v879
    %v1176 = vpack.c.b16 %v884, %v880
    %v1177 = vpack.c.b16 %v889, %v885
    %v1178 = vpack.c.b16 %v890, %v886
    %v1179 = vpack.c.b16 %v891, %v887
    %v1180 = vpack.c.b16 %v892, %v888
    %v1181 = vpack.c.b16 %v897, %v893
    %v1182 = vpack.c.b16 %v898, %v894
    %v1183 = vpack.c.b16 %v899, %v895
    %v1184 = vpack.c.b16 %v900, %v896
    %v1185 = vpack.c.b16 %v905, %v901
    %v1186 = vpack.c.b16 %v906, %v902
    %v1187 = vpack.c.b16 %v907, %v903
    %v1188 = vpack.c.b16 %v908, %v904
    %v1189 = vpack.c.b16 %v913, %v909
    %v1190 = vpack.c.b16 %v914, %v910
    %v1191 = vpack.c.b16 %v915, %v911
    %v1192 = vpack.c.b16 %v916, %v912
    %v1193 = vpack.c.b16 %v921, %v917
    %v1194 = vpack.c.b16 %v922, %v918
    %v1195 = vpack.c.b16 %v923, %v919
    %v1196 = vpack.c.b16 %v924, %v920
    %v1197 = vpack.c.b16 %v929, %v925
    %v1198 = vpack.c.b16 %v930, %v926
    %v1199 = vpack.c.b16 %v931, %v927
    %v1200 = vpack.c.b16 %v932, %v928
    %v1201 = vpack.c.b16 %v937, %v933
    %v1202 = vpack.c.b16 %v938, %v934
    %v1203 = vpack.c.b16 %v939, %v935
    %v1204 = vpack.c.b16 %v940, %v936
    %v1205 = vpack.c.b16 %v945, %v941
    %v1206 = vpack.c.b16 %v946, %v942
    %v1207 = vpack.c.b16 %v947, %v943
    %v1208 = vpack.c.b16 %v948, %v944
    %v1209 = vpack.c.b16 %v953, %v949
    %v1210 = vpack.c.b16 %v954, %v950
    %v1211 = vpack.c.b16 %v955, %v951
    %v1212 = vpack.c.b16 %v956, %v952
    %v1213 = vpack.c.b16 %v961, %v957
    %v1214 = vpack.c.b16 %v962, %v958
    %v1215 = vpack.c.b16 %v963, %v959
    %v1216 = vpack.c.b16 %v964, %v960
    %v1217 = vpack.c.b16 %v969, %v965
    %v1218 = vpack.c.b16 %v970, %v966
    %v1219 = vpack.c.b16 %v971, %v967
    %v1220 = vpack.c.b16 %v972, %v968
    %v1221 = vpack.c.b16 %v977, %v973
    %v1222 = vpack.c.b16 %v978, %v974
    %v1223 = vpack.c.b16 %v979, %v975
    %v1224 = vpack.c.b16 %v980, %v976
    %v1225 = vpack.c.b16 %v985, %v981
    %v1226 = vpack.c.b16 %v986, %v982
    %v1227 = vpack.c.b16 %v987, %v983
    %v1228 = vpack.c.b16 %v988, %v984
    %v1229 = vpack.c.b16 %v993, %v989
    %v1230 = vpack.c.b16 %v994, %v990
    %v1231 = vpack.c.b16 %v995, %v991
    %v1232 = vpack.c.b16 %v996, %v992
    %v1233 = vpack.c.b16 %v1001, %v997
    %v1234 = vpack.c.b16 %v1002, %v998
    %v1235 = vpack.c.b16 %v1003, %v999
    %v1236 = vpack.c.b16 %v1004, %v1000
    %v1237 = vpack.c.b16 %v1009, %v1005
    %v1238 = vpack.c.b16 %v1010, %v1006
    %v1239 = vpack.c.b16 %v1011, %v1007
    %v1240 = vpack.c.b16 %v1012, %v1008
    %v1241 = vpack.c.b16 %v1017, %v1013
    %v1242 = vpack.c.b16 %v1018, %v1014
    %v1243 = vpack.c.b16 %v1019, %v1015
    %v1244 = vpack.c.b16 %v1020, %v1016
    %1469 = vmatprep.subr.bf16.mxu0 %v1022
    %1470 = vmatpush1.bf16.msra.mxu0 %v1021
    %1471 = vmatprep.subr.bf16.mxu0 %v1026
    %1472 = vmatpush1.bf16.msra.mxu0 %v1025
    %1473 = vmatprep.subr.bf16.mxu0 %v1030
    %1474 = vmatpush1.bf16.msra.mxu0 %v1029
    %1475 = vmatprep.subr.bf16.mxu0 %v1034
    %1476 = vmatpush1.bf16.msra.mxu0 %v1033
    %1477 = vmatprep.subr.bf16.mxu0 %v1038
    %1478 = vmatpush1.bf16.msra.mxu0 %v1037
    %1479 = vmatprep.subr.bf16.mxu0 %v1042
    %1480 = vmatpush1.bf16.msra.mxu0 %v1041
    %1481 = vmatprep.subr.bf16.mxu0 %v1046
    %1482 = vmatpush1.bf16.msra.mxu0 %v1045
    %1483 = vmatprep.subr.bf16.mxu0 %v1050
    %1484 = vmatpush1.bf16.msra.mxu0 %v1049
    %1485 = vmatprep.subr.bf16.mxu0 %v1054
    %1486 = vmatpush1.bf16.msra.mxu0 %v1053
    %1487 = vmatprep.subr.bf16.mxu0 %v1058
    %1488 = vmatpush1.bf16.msra.mxu0 %v1057
    %1489 = vmatprep.subr.bf16.mxu0 %v1062
    %1490 = vmatpush1.bf16.msra.mxu0 %v1061
    %1491 = vmatprep.subr.bf16.mxu0 %v1066
    %1492 = vmatpush1.bf16.msra.mxu0 %v1065
    %1493 = vmatprep.subr.bf16.mxu0 %v1070
    %1494 = vmatpush1.bf16.msra.mxu0 %v1069
    %1495 = vmatprep.subr.bf16.mxu0 %v1074
    %1496 = vmatpush1.bf16.msra.mxu0 %v1073
    %1497 = vmatprep.subr.bf16.mxu0 %v1078
    %1498 = vmatpush1.bf16.msra.mxu0 %v1077
    %1499 = vmatprep.subr.bf16.mxu0 %v1082
    %1500 = vmatpush1.bf16.msra.mxu0 %v1081
    %1501 = vmatprep.mubr.bf16.mxu0 %v336
    %1502 = vmatmul.mubr.bf16.gmra.mrb[0].mxu0 %v335
    %v1503 = vpop.f32.mrb[0].mxu0
    %v1504 = vadd.f32 %v307, %v1503
    %v1505 = vpop.f32.mrb[0].mxu0
    %v1506 = vadd.f32 %v311, %v1505
    %v1507 = vpop.f32.mrb[0].mxu0
    %v1508 = vpop.f32.mrb[0].mxu0
    %1509 = vdwg.mxu0
    %1510 = vmatprep.subr.bf16.mxu0 %v1086
    %1511 = vmatpush1.bf16.msra.mxu0 %v1085
    %1512 = vmatprep.subr.bf16.mxu0 %v1090
    %1513 = vmatpush1.bf16.msra.mxu0 %v1089
    %1514 = vmatprep.subr.bf16.mxu0 %v1094
    %1515 = vmatpush1.bf16.msra.mxu0 %v1093
    %1516 = vmatprep.subr.bf16.mxu0 %v1098
    %1517 = vmatpush1.bf16.msra.mxu0 %v1097
    %1518 = vmatprep.subr.bf16.mxu0 %v1102
    %1519 = vmatpush1.bf16.msra.mxu0 %v1101
    %1520 = vmatprep.subr.bf16.mxu0 %v1106
    %1521 = vmatpush1.bf16.msra.mxu0 %v1105
    %1522 = vmatprep.subr.bf16.mxu0 %v1110
    %1523 = vmatpush1.bf16.msra.mxu0 %v1109
    %1524 = vmatprep.subr.bf16.mxu0 %v1114
    %1525 = vmatpush1.bf16.msra.mxu0 %v1113
    %1526 = vmatprep.subr.bf16.mxu0 %v1118
    %1527 = vmatpush1.bf16.msra.mxu0 %v1117
    %1528 = vmatprep.subr.bf16.mxu0 %v1122
    %1529 = vmatpush1.bf16.msra.mxu0 %v1121
    %1530 = vmatprep.subr.bf16.mxu0 %v1126
    %1531 = vmatpush1.bf16.msra.mxu0 %v1125
    %1532 = vmatprep.subr.bf16.mxu0 %v1130
    %1533 = vmatpush1.bf16.msra.mxu0 %v1129
    %1534 = vmatprep.subr.bf16.mxu0 %v1134
    %1535 = vmatpush1.bf16.msra.mxu0 %v1133
    %1536 = vmatprep.subr.bf16.mxu0 %v1138
    %1537 = vmatpush1.bf16.msra.mxu0 %v1137
    %1538 = vmatprep.subr.bf16.mxu0 %v1142
    %1539 = vmatpush1.bf16.msra.mxu0 %v1141
    %1540 = vmatprep.subr.bf16.mxu0 %v1146
    %1541 = vmatpush1.bf16.msra.mxu0 %v1145
    %1542 = vmatprep.mubr.bf16.mxu0 %v338
    %1543 = vmatmul.mubr.bf16.gmra.mrb[0].mxu0 %v337
    %v1544 = vpop.f32.mrb[0].mxu0
    %v1545 = vadd.f32 %v1504, %v1544
    %v1546 = vpop.f32.mrb[0].mxu0
    %v1547 = vadd.f32 %v1506, %v1546
    %v1548 = vpop.f32.mrb[0].mxu0
    %v1549 = vpop.f32.mrb[0].mxu0
    %1550 = vdwg.mxu0
    %1551 = vmatprep.subr.bf16.mxu0 %v1150
    %1552 = vmatpush1.bf16.msra.mxu0 %v1149
    %1553 = vmatprep.subr.bf16.mxu0 %v1154
    %1554 = vmatpush1.bf16.msra.mxu0 %v1153
    %1555 = vmatprep.subr.bf16.mxu0 %v1158
    %1556 = vmatpush1.bf16.msra.mxu0 %v1157
    %1557 = vmatprep.subr.bf16.mxu0 %v1162
    %1558 = vmatpush1.bf16.msra.mxu0 %v1161
    %1559 = vmatprep.subr.bf16.mxu0 %v1166
    %1560 = vmatpush1.bf16.msra.mxu0 %v1165
    %1561 = vmatprep.subr.bf16.mxu0 %v1170
    %1562 = vmatpush1.bf16.msra.mxu0 %v1169
    %1563 = vmatprep.subr.bf16.mxu0 %v1174
    %1564 = vmatpush1.bf16.msra.mxu0 %v1173
    %1565 = vmatprep.subr.bf16.mxu0 %v1178
    %1566 = vmatpush1.bf16.msra.mxu0 %v1177
    %1567 = vmatprep.subr.bf16.mxu0 %v1182
    %1568 = vmatpush1.bf16.msra.mxu0 %v1181
    %1569 = vmatprep.subr.bf16.mxu0 %v1186
    %1570 = vmatpush1.bf16.msra.mxu0 %v1185
    %1571 = vmatprep.subr.bf16.mxu0 %v1190
    %1572 = vmatpush1.bf16.msra.mxu0 %v1189
    %1573 = vmatprep.subr.bf16.mxu0 %v1194
    %1574 = vmatpush1.bf16.msra.mxu0 %v1193
    %1575 = vmatprep.subr.bf16.mxu0 %v1198
    %1576 = vmatpush1.bf16.msra.mxu0 %v1197
    %1577 = vmatprep.subr.bf16.mxu0 %v1202
    %1578 = vmatpush1.bf16.msra.mxu0 %v1201
    %1579 = vmatprep.subr.bf16.mxu0 %v1206
    %1580 = vmatpush1.bf16.msra.mxu0 %v1205
    %1581 = vmatprep.subr.bf16.mxu0 %v1210
    %1582 = vmatpush1.bf16.msra.mxu0 %v1209
    %1583 = vmatprep.mubr.bf16.mxu0 %v340
    %1584 = vmatmul.mubr.bf16.gmra.mrb[0].mxu0 %v339
    %v1585 = vpop.f32.mrb[0].mxu0
    %v1586 = vadd.f32 %v1545, %v1585
    %v1587 = vpop.f32.mrb[0].mxu0
    %v1588 = vadd.f32 %v1547, %v1587
    %v1589 = vpop.f32.mrb[0].mxu0
    %v1590 = vpop.f32.mrb[0].mxu0
    %1591 = vdwg.mxu0
    %1592 = vmatprep.subr.bf16.mxu0 %v1214
    %1593 = vmatpush1.bf16.msra.mxu0 %v1213
    %1594 = vmatprep.subr.bf16.mxu0 %v1218
    %1595 = vmatpush1.bf16.msra.mxu0 %v1217
    %1596 = vmatprep.subr.bf16.mxu0 %v1222
    %1597 = vmatpush1.bf16.msra.mxu0 %v1221
    %1598 = vmatprep.subr.bf16.mxu0 %v1226
    %1599 = vmatpush1.bf16.msra.mxu0 %v1225
    %1600 = vmatprep.subr.bf16.mxu0 %v1230
    %1601 = vmatpush1.bf16.msra.mxu0 %v1229
    %1602 = vmatprep.subr.bf16.mxu0 %v1234
    %1603 = vmatpush1.bf16.msra.mxu0 %v1233
    %1604 = vmatprep.subr.bf16.mxu0 %v1238
    %1605 = vmatpush1.bf16.msra.mxu0 %v1237
    %1606 = vmatprep.subr.bf16.mxu0 %v1242
    %1607 = vmatpush1.bf16.msra.mxu0 %v1241
    %1608 = vmatprep.subr.bf16.mxu0 0
    %1609 = vmatpush1.bf16.msra.mxu0 0
    %1610 = vmatprep.subr.bf16.mxu0 0
    %1611 = vmatpush1.bf16.msra.mxu0 0
    %1612 = vmatprep.subr.bf16.mxu0 0
    %1613 = vmatpush1.bf16.msra.mxu0 0
    %1614 = vmatprep.subr.bf16.mxu0 0
    %1615 = vmatpush1.bf16.msra.mxu0 0
    %1616 = vmatprep.subr.bf16.mxu0 0
    %1617 = vmatpush1.bf16.msra.mxu0 0
    %1618 = vmatprep.subr.bf16.mxu0 0
    %1619 = vmatpush1.bf16.msra.mxu0 0
    %1620 = vmatprep.subr.bf16.mxu0 0
    %1621 = vmatpush1.bf16.msra.mxu0 0
    %1622 = vmatprep.subr.bf16.mxu0 0
    %1623 = vmatpush1.bf16.msra.mxu0 0
    %1624 = vmatprep.mubr.bf16.mxu0 0
    %1625 = vmatmul.mubr.bf16.gmra.mrb[0].mxu0 %v341
    %v1626 = vpop.f32.mrb[0].mxu0
    %v1627 = vadd.f32 %v1586, %v1626
    %v1628 = vpop.f32.mrb[0].mxu0
    %v1629 = vadd.f32 %v1588, %v1628
    %v1630 = vpop.f32.mrb[0].mxu0
    %v1631 = vpop.f32.mrb[0].mxu0
    %1632 = vdwg.mxu0
    %1633 = vmatprep.subr.bf16.mxu0 %v1024
    %1634 = vmatpush1.bf16.msra.mxu0 %v1023
    %1635 = vmatprep.subr.bf16.mxu0 %v1028
    %1636 = vmatpush1.bf16.msra.mxu0 %v1027
    %1637 = vmatprep.subr.bf16.mxu0 %v1032
    %1638 = vmatpush1.bf16.msra.mxu0 %v1031
    %1639 = vmatprep.subr.bf16.mxu0 %v1036
    %1640 = vmatpush1.bf16.msra.mxu0 %v1035
    %1641 = vmatprep.subr.bf16.mxu0 %v1040
    %1642 = vmatpush1.bf16.msra.mxu0 %v1039
    %1643 = vmatprep.subr.bf16.mxu0 %v1044
    %1644 = vmatpush1.bf16.msra.mxu0 %v1043
    %1645 = vmatprep.subr.bf16.mxu0 %v1048
    %1646 = vmatpush1.bf16.msra.mxu0 %v1047
    %1647 = vmatprep.subr.bf16.mxu0 %v1052
    %1648 = vmatpush1.bf16.msra.mxu0 %v1051
    %1649 = vmatprep.subr.bf16.mxu0 %v1056
    %1650 = vmatpush1.bf16.msra.mxu0 %v1055
    %1651 = vmatprep.subr.bf16.mxu0 %v1060
    %1652 = vmatpush1.bf16.msra.mxu0 %v1059
    %1653 = vmatprep.subr.bf16.mxu0 %v1064
    %1654 = vmatpush1.bf16.msra.mxu0 %v1063
    %1655 = vmatprep.subr.bf16.mxu0 %v1068
    %1656 = vmatpush1.bf16.msra.mxu0 %v1067
    %1657 = vmatprep.subr.bf16.mxu0 %v1072
    %1658 = vmatpush1.bf16.msra.mxu0 %v1071
    %1659 = vmatprep.subr.bf16.mxu0 %v1076
    %1660 = vmatpush1.bf16.msra.mxu0 %v1075
    %1661 = vmatprep.subr.bf16.mxu0 %v1080
    %1662 = vmatpush1.bf16.msra.mxu0 %v1079
    %1663 = vmatprep.subr.bf16.mxu0 %v1084
    %1664 = vmatpush1.bf16.msra.mxu0 %v1083
    %1665 = vmatprep.mubr.bf16.mxu0 %v336
    %1666 = vmatmul.mubr.bf16.gmra.mrb[0].mxu0 %v335
    %v1667 = vpop.f32.mrb[0].mxu0
    %v1668 = vadd.f32 %v315, %v1667
    %v1669 = vpop.f32.mrb[0].mxu0
    %v1670 = vadd.f32 %v319, %v1669
    %v1671 = vpop.f32.mrb[0].mxu0
    %v1672 = vpop.f32.mrb[0].mxu0
    %1673 = vdwg.mxu0
    %1674 = vmatprep.subr.bf16.mxu0 %v1088
    %1675 = vmatpush1.bf16.msra.mxu0 %v1087
    %1676 = vmatprep.subr.bf16.mxu0 %v1092
    %1677 = vmatpush1.bf16.msra.mxu0 %v1091
    %1678 = vmatprep.subr.bf16.mxu0 %v1096
    %1679 = vmatpush1.bf16.msra.mxu0 %v1095
    %1680 = vmatprep.subr.bf16.mxu0 %v1100
    %1681 = vmatpush1.bf16.msra.mxu0 %v1099
    %1682 = vmatprep.subr.bf16.mxu0 %v1104
    %1683 = vmatpush1.bf16.msra.mxu0 %v1103
    %1684 = vmatprep.subr.bf16.mxu0 %v1108
    %1685 = vmatpush1.bf16.msra.mxu0 %v1107
    %1686 = vmatprep.subr.bf16.mxu0 %v1112
    %1687 = vmatpush1.bf16.msra.mxu0 %v1111
    %1688 = vmatprep.subr.bf16.mxu0 %v1116
    %1689 = vmatpush1.bf16.msra.mxu0 %v1115
    %1690 = vmatprep.subr.bf16.mxu0 %v1120
    %1691 = vmatpush1.bf16.msra.mxu0 %v1119
    %1692 = vmatprep.subr.bf16.mxu0 %v1124
    %1693 = vmatpush1.bf16.msra.mxu0 %v1123
    %1694 = vmatprep.subr.bf16.mxu0 %v1128
    %1695 = vmatpush1.bf16.msra.mxu0 %v1127
    %1696 = vmatprep.subr.bf16.mxu0 %v1132
    %1697 = vmatpush1.bf16.msra.mxu0 %v1131
    %1698 = vmatprep.subr.bf16.mxu0 %v1136
    %1699 = vmatpush1.bf16.msra.mxu0 %v1135
    %1700 = vmatprep.subr.bf16.mxu0 %v1140
    %1701 = vmatpush1.bf16.msra.mxu0 %v1139
    %1702 = vmatprep.subr.bf16.mxu0 %v1144
    %1703 = vmatpush1.bf16.msra.mxu0 %v1143
    %1704 = vmatprep.subr.bf16.mxu0 %v1148
    %1705 = vmatpush1.bf16.msra.mxu0 %v1147
    %1706 = vmatprep.mubr.bf16.mxu0 %v338
    %1707 = vmatmul.mubr.bf16.gmra.mrb[0].mxu0 %v337
    %v1708 = vpop.f32.mrb[0].mxu0
    %v1709 = vadd.f32 %v1668, %v1708
    %v1710 = vpop.f32.mrb[0].mxu0
    %v1711 = vadd.f32 %v1670, %v1710
    %v1712 = vpop.f32.mrb[0].mxu0
    %v1713 = vpop.f32.mrb[0].mxu0
    %1714 = vdwg.mxu0
    %1715 = vmatprep.subr.bf16.mxu0 %v1152
    %1716 = vmatpush1.bf16.msra.mxu0 %v1151
    %1717 = vmatprep.subr.bf16.mxu0 %v1156
    %1718 = vmatpush1.bf16.msra.mxu0 %v1155
    %1719 = vmatprep.subr.bf16.mxu0 %v1160
    %1720 = vmatpush1.bf16.msra.mxu0 %v1159
    %1721 = vmatprep.subr.bf16.mxu0 %v1164
    %1722 = vmatpush1.bf16.msra.mxu0 %v1163
    %1723 = vmatprep.subr.bf16.mxu0 %v1168
    %1724 = vmatpush1.bf16.msra.mxu0 %v1167
    %1725 = vmatprep.subr.bf16.mxu0 %v1172
    %1726 = vmatpush1.bf16.msra.mxu0 %v1171
    %1727 = vmatprep.subr.bf16.mxu0 %v1176
    %1728 = vmatpush1.bf16.msra.mxu0 %v1175
    %1729 = vmatprep.subr.bf16.mxu0 %v1180
    %1730 = vmatpush1.bf16.msra.mxu0 %v1179
    %1731 = vmatprep.subr.bf16.mxu0 %v1184
    %1732 = vmatpush1.bf16.msra.mxu0 %v1183
    %1733 = vmatprep.subr.bf16.mxu0 %v1188
    %1734 = vmatpush1.bf16.msra.mxu0 %v1187
    %1735 = vmatprep.subr.bf16.mxu0 %v1192
    %1736 = vmatpush1.bf16.msra.mxu0 %v1191
    %1737 = vmatprep.subr.bf16.mxu0 %v1196
    %1738 = vmatpush1.bf16.msra.mxu0 %v1195
    %1739 = vmatprep.subr.bf16.mxu0 %v1200
    %1740 = vmatpush1.bf16.msra.mxu0 %v1199
    %1741 = vmatprep.subr.bf16.mxu0 %v1204
    %1742 = vmatpush1.bf16.msra.mxu0 %v1203
    %1743 = vmatprep.subr.bf16.mxu0 %v1208
    %1744 = vmatpush1.bf16.msra.mxu0 %v1207
    %1745 = vmatprep.subr.bf16.mxu0 %v1212
    %1746 = vmatpush1.bf16.msra.mxu0 %v1211
    %1747 = vmatprep.mubr.bf16.mxu0 %v340
    %1748 = vmatmul.mubr.bf16.gmra.mrb[0].mxu0 %v339
    %v1749 = vpop.f32.mrb[0].mxu0
    %v1750 = vadd.f32 %v1709, %v1749
    %v1751 = vpop.f32.mrb[0].mxu0
    %v1752 = vadd.f32 %v1711, %v1751
    %v1753 = vpop.f32.mrb[0].mxu0
    %v1754 = vpop.f32.mrb[0].mxu0
    %1755 = vdwg.mxu0
    %1756 = vmatprep.subr.bf16.mxu0 %v1216
    %1757 = vmatpush1.bf16.msra.mxu0 %v1215
    %1758 = vmatprep.subr.bf16.mxu0 %v1220
    %1759 = vmatpush1.bf16.msra.mxu0 %v1219
    %1760 = vmatprep.subr.bf16.mxu0 %v1224
    %1761 = vmatpush1.bf16.msra.mxu0 %v1223
    %1762 = vmatprep.subr.bf16.mxu0 %v1228
    %1763 = vmatpush1.bf16.msra.mxu0 %v1227
    %1764 = vmatprep.subr.bf16.mxu0 %v1232
    %1765 = vmatpush1.bf16.msra.mxu0 %v1231
    %1766 = vmatprep.subr.bf16.mxu0 %v1236
    %1767 = vmatpush1.bf16.msra.mxu0 %v1235
    %1768 = vmatprep.subr.bf16.mxu0 %v1240
    %1769 = vmatpush1.bf16.msra.mxu0 %v1239
    %1770 = vmatprep.subr.bf16.mxu0 %v1244
    %1771 = vmatpush1.bf16.msra.mxu0 %v1243
    %1772 = vmatprep.subr.bf16.mxu0 0
    %1773 = vmatpush1.bf16.msra.mxu0 0
    %1774 = vmatprep.subr.bf16.mxu0 0
    %1775 = vmatpush1.bf16.msra.mxu0 0
    %1776 = vmatprep.subr.bf16.mxu0 0
    %1777 = vmatpush1.bf16.msra.mxu0 0
    %1778 = vmatprep.subr.bf16.mxu0 0
    %1779 = vmatpush1.bf16.msra.mxu0 0
    %1780 = vmatprep.subr.bf16.mxu0 0
    %1781 = vmatpush1.bf16.msra.mxu0 0
    %1782 = vmatprep.subr.bf16.mxu0 0
    %1783 = vmatpush1.bf16.msra.mxu0 0
    %1784 = vmatprep.subr.bf16.mxu0 0
    %1785 = vmatpush1.bf16.msra.mxu0 0
    %1786 = vmatprep.subr.bf16.mxu0 0
    %1787 = vmatpush1.bf16.msra.mxu0 0
    %1788 = vmatprep.mubr.bf16.mxu0 0
    %1789 = vmatmul.mubr.bf16.gmra.mrb[0].mxu0 %v341
    %v1790 = vpop.f32.mrb[0].mxu0
    %v1791 = vadd.f32 %v1750, %v1790
    %v1792 = vpop.f32.mrb[0].mxu0
    %v1793 = vadd.f32 %v1752, %v1792
    %v1794 = vpop.f32.mrb[0].mxu0
    %v1795 = vpop.f32.mrb[0].mxu0
    %1796 = vdwg.mxu0
    %v1797 = vmax.f32 %v1627, 0.0
    %v1798 = vmax.f32 %v1629, 0.0
    %v1799 = vmax.f32 %v1791, 0.0
    %v1800 = vmax.f32 %v1793, 0.0
    %v1801 = vpack.c.bf16 %v1797, %v1797
    %v1802 = vpack.c.bf16 %v1798, %v1798
    %v1803 = vpack.c.bf16 %v1799, %v1799
    %v1804 = vpack.c.bf16 %v1800, %v1800
    %v1805 = vld [vmem:[#allocation4] sm:$0xff]
    %v1806 = vld [vmem:[#allocation4 + $0x8] sm:$0xff]
    %v1807 = vld [vmem:[#allocation4 + $0x10] sm:$0xff]
    %v1808 = vld [vmem:[#allocation4 + $0x18] sm:$0xff]
    %v1809 = vld [vmem:[#allocation4 + $0x20] sm:$0xff]
    %v1810 = vld [vmem:[#allocation4 + $0x28] sm:$0xff]
    %v1811 = vld [vmem:[#allocation4 + $0x30] sm:$0xff]
    %v1812 = vld [vmem:[#allocation4 + $0x38] sm:$0xff]
    %v1813 = vld [vmem:[#allocation4 + $0x40] sm:$0xff]
    %v1814 = vld [vmem:[#allocation4 + $0x48] sm:$0xff]
    %v1815 = vld [vmem:[#allocation4 + $0x50] sm:$0xff]
    %v1816 = vld [vmem:[#allocation4 + $0x58] sm:$0xff]
    %v1817 = vld [vmem:[#allocation4 + $0x60] sm:$0xff]
    %v1818 = vld [vmem:[#allocation4 + $0x68] sm:$0xff]
    %v1819 = vld [vmem:[#allocation4 + $0x70] sm:$0xff]
    %v1820 = vld [vmem:[#allocation4 + $0x78] sm:$0xff]
    %v1821 = vld [vmem:[#allocation4 + $0x80] sm:$0xff]
    %v1822 = vld [vmem:[#allocation4 + $0x88] sm:$0xff]
    %v1823 = vld [vmem:[#allocation4 + $0x90] sm:$0xff]
    %v1824 = vld [vmem:[#allocation4 + $0x98] sm:$0xff]
    %v1825 = vld [vmem:[#allocation4 + $0xa0] sm:$0xff]
    %v1826 = vld [vmem:[#allocation4 + $0xa8] sm:$0xff]
    %v1827 = vld [vmem:[#allocation4 + $0xb0] sm:$0xff]
    %v1828 = vld [vmem:[#allocation4 + $0xb8] sm:$0xff]
    %v1829 = vld [vmem:[#allocation4 + $0xc0] sm:$0xff]
    %v1830 = vld [vmem:[#allocation4 + $0xc8] sm:$0xff]
    %v1831 = vld [vmem:[#allocation4 + $0xd0] sm:$0xff]
    %v1832 = vld [vmem:[#allocation4 + $0xd8] sm:$0xff]
    %v1833 = vld [vmem:[#allocation4 + $0xe0] sm:$0xff]
    %v1834 = vld [vmem:[#allocation4 + $0xe8] sm:$0xff]
    %v1835 = vld [vmem:[#allocation4 + $0xf0] sm:$0xff]
    %v1836 = vld [vmem:[#allocation4 + $0xf8] sm:$0xff]
    %v1837 = vld [vmem:[#allocation4 + $0x100] sm:$0xff]
    %v1838 = vld [vmem:[#allocation4 + $0x108] sm:$0xff]
    %v1839 = vld [vmem:[#allocation4 + $0x110] sm:$0xff]
    %v1840 = vld [vmem:[#allocation4 + $0x118] sm:$0xff]
    %v1841 = vld [vmem:[#allocation4 + $0x120] sm:$0xff]
    %v1842 = vld [vmem:[#allocation4 + $0x128] sm:$0xff]
    %v1843 = vld [vmem:[#allocation4 + $0x130] sm:$0xff]
    %v1844 = vld [vmem:[#allocation4 + $0x138] sm:$0xff]
    %v1845 = vld [vmem:[#allocation4 + $0x140] sm:$0xff]
    %v1846 = vld [vmem:[#allocation4 + $0x148] sm:$0xff]
    %v1847 = vld [vmem:[#allocation4 + $0x150] sm:$0xff]
    %v1848 = vld [vmem:[#allocation4 + $0x158] sm:$0xff]
    %v1849 = vld [vmem:[#allocation4 + $0x160] sm:$0xff]
    %v1850 = vld [vmem:[#allocation4 + $0x168] sm:$0xff]
    %v1851 = vld [vmem:[#allocation4 + $0x170] sm:$0xff]
    %v1852 = vld [vmem:[#allocation4 + $0x178] sm:$0xff]
    %v1853 = vld [vmem:[#allocation4 + $0x180] sm:$0xff]
    %v1854 = vld [vmem:[#allocation4 + $0x188] sm:$0xff]
    %v1855 = vld [vmem:[#allocation4 + $0x190] sm:$0xff]
    %v1856 = vld [vmem:[#allocation4 + $0x198] sm:$0xff]
    %v1857 = vld [vmem:[#allocation4 + $0x1a0] sm:$0xff]
    %v1858 = vld [vmem:[#allocation4 + $0x1a8] sm:$0xff]
    %v1859 = vld [vmem:[#allocation4 + $0x1b0] sm:$0xff]
    %v1860 = vld [vmem:[#allocation4 + $0x1b8] sm:$0xff]
    %v1861 = vld [vmem:[#allocation4 + $0x1c0] sm:$0xff]
    %v1862 = vld [vmem:[#allocation4 + $0x1c8] sm:$0xff]
    %v1863 = vld [vmem:[#allocation4 + $0x1d0] sm:$0xff]
    %v1864 = vld [vmem:[#allocation4 + $0x1d8] sm:$0xff]
    %v1865 = vld [vmem:[#allocation4 + $0x1e0] sm:$0xff]
    %v1866 = vld [vmem:[#allocation4 + $0x1e8] sm:$0xff]
    %v1867 = vld [vmem:[#allocation4 + $0x1f0] sm:$0xff]
    %v1868 = vld [vmem:[#allocation4 + $0x1f8] sm:$0xff]
    %v1869 = vld [vmem:[%s4] sm:$0x3]
    %v1871 = vlaneseq
    %v1872 = vshrl.u32 %v1871, 7
    %v1873 = vsub.s32 0, %v1872
    %v1874 = vrot.slane %v1869, %v1873
    %v1875 = vlaneseq
    %v1876 = vshrl.u32 %v1875, 7
    %v1877 = vsub.s32 1, %v1876
    %v1878 = vrot.slane %v1869, %v1877
    %v1945 = vunpack.c.l.b16 %v1805
    %v1946 = vunpack.c.h.b16 %v1805
    %v1947 = vunpack.c.l.b16 %v1806
    %v1948 = vunpack.c.h.b16 %v1806
    %v1949 = vunpack.c.l.b16 %v1807
    %v1950 = vunpack.c.h.b16 %v1807
    %v1951 = vunpack.c.l.b16 %v1808
    %v1952 = vunpack.c.h.b16 %v1808
    %v1953 = vunpack.c.l.b16 %v1809
    %v1954 = vunpack.c.h.b16 %v1809
    %v1955 = vunpack.c.l.b16 %v1810
    %v1956 = vunpack.c.h.b16 %v1810
    %v1957 = vunpack.c.l.b16 %v1811
    %v1958 = vunpack.c.h.b16 %v1811
    %v1959 = vunpack.c.l.b16 %v1812
    %v1960 = vunpack.c.h.b16 %v1812
    %v1961 = vunpack.c.l.b16 %v1813
    %v1962 = vunpack.c.h.b16 %v1813
    %v1963 = vunpack.c.l.b16 %v1814
    %v1964 = vunpack.c.h.b16 %v1814
    %v1965 = vunpack.c.l.b16 %v1815
    %v1966 = vunpack.c.h.b16 %v1815
    %v1967 = vunpack.c.l.b16 %v1816
    %v1968 = vunpack.c.h.b16 %v1816
    %v1969 = vunpack.c.l.b16 %v1817
    %v1970 = vunpack.c.h.b16 %v1817
    %v1971 = vunpack.c.l.b16 %v1818
    %v1972 = vunpack.c.h.b16 %v1818
    %v1973 = vunpack.c.l.b16 %v1819
    %v1974 = vunpack.c.h.b16 %v1819
    %v1975 = vunpack.c.l.b16 %v1820
    %v1976 = vunpack.c.h.b16 %v1820
    %v1977 = vunpack.c.l.b16 %v1821
    %v1978 = vunpack.c.h.b16 %v1821
    %v1979 = vunpack.c.l.b16 %v1822
    %v1980 = vunpack.c.h.b16 %v1822
    %v1981 = vunpack.c.l.b16 %v1823
    %v1982 = vunpack.c.h.b16 %v1823
    %v1983 = vunpack.c.l.b16 %v1824
    %v1984 = vunpack.c.h.b16 %v1824
    %v1985 = vunpack.c.l.b16 %v1825
    %v1986 = vunpack.c.h.b16 %v1825
    %v1987 = vunpack.c.l.b16 %v1826
    %v1988 = vunpack.c.h.b16 %v1826
    %v1989 = vunpack.c.l.b16 %v1827
    %v1990 = vunpack.c.h.b16 %v1827
    %v1991 = vunpack.c.l.b16 %v1828
    %v1992 = vunpack.c.h.b16 %v1828
    %v1993 = vunpack.c.l.b16 %v1829
    %v1994 = vunpack.c.h.b16 %v1829
    %v1995 = vunpack.c.l.b16 %v1830
    %v1996 = vunpack.c.h.b16 %v1830
    %v1997 = vunpack.c.l.b16 %v1831
    %v1998 = vunpack.c.h.b16 %v1831
    %v1999 = vunpack.c.l.b16 %v1832
    %v2000 = vunpack.c.h.b16 %v1832
    %v2001 = vunpack.c.l.b16 %v1833
    %v2002 = vunpack.c.h.b16 %v1833
    %v2003 = vunpack.c.l.b16 %v1834
    %v2004 = vunpack.c.h.b16 %v1834
    %v2005 = vunpack.c.l.b16 %v1835
    %v2006 = vunpack.c.h.b16 %v1835
    %v2007 = vunpack.c.l.b16 %v1836
    %v2008 = vunpack.c.h.b16 %v1836
    %v2009 = vunpack.c.l.b16 %v1837
    %v2010 = vunpack.c.h.b16 %v1837
    %v2011 = vunpack.c.l.b16 %v1838
    %v2012 = vunpack.c.h.b16 %v1838
    %v2013 = vunpack.c.l.b16 %v1839
    %v2014 = vunpack.c.h.b16 %v1839
    %v2015 = vunpack.c.l.b16 %v1840
    %v2016 = vunpack.c.h.b16 %v1840
    %v2017 = vunpack.c.l.b16 %v1841
    %v2018 = vunpack.c.h.b16 %v1841
    %v2019 = vunpack.c.l.b16 %v1842
    %v2020 = vunpack.c.h.b16 %v1842
    %v2021 = vunpack.c.l.b16 %v1843
    %v2022 = vunpack.c.h.b16 %v1843
    %v2023 = vunpack.c.l.b16 %v1844
    %v2024 = vunpack.c.h.b16 %v1844
    %v2025 = vunpack.c.l.b16 %v1845
    %v2026 = vunpack.c.h.b16 %v1845
    %v2027 = vunpack.c.l.b16 %v1846
    %v2028 = vunpack.c.h.b16 %v1846
    %v2029 = vunpack.c.l.b16 %v1847
    %v2030 = vunpack.c.h.b16 %v1847
    %v2031 = vunpack.c.l.b16 %v1848
    %v2032 = vunpack.c.h.b16 %v1848
    %v2033 = vunpack.c.l.b16 %v1849
    %v2034 = vunpack.c.h.b16 %v1849
    %v2035 = vunpack.c.l.b16 %v1850
    %v2036 = vunpack.c.h.b16 %v1850
    %v2037 = vunpack.c.l.b16 %v1851
    %v2038 = vunpack.c.h.b16 %v1851
    %v2039 = vunpack.c.l.b16 %v1852
    %v2040 = vunpack.c.h.b16 %v1852
    %v2041 = vunpack.c.l.b16 %v1853
    %v2042 = vunpack.c.h.b16 %v1853
    %v2043 = vunpack.c.l.b16 %v1854
    %v2044 = vunpack.c.h.b16 %v1854
    %v2045 = vunpack.c.l.b16 %v1855
    %v2046 = vunpack.c.h.b16 %v1855
    %v2047 = vunpack.c.l.b16 %v1856
    %v2048 = vunpack.c.h.b16 %v1856
    %v2049 = vunpack.c.l.b16 %v1857
    %v2050 = vunpack.c.h.b16 %v1857
    %v2051 = vunpack.c.l.b16 %v1858
    %v2052 = vunpack.c.h.b16 %v1858
    %v2053 = vunpack.c.l.b16 %v1859
    %v2054 = vunpack.c.h.b16 %v1859
    %v2055 = vunpack.c.l.b16 %v1860
    %v2056 = vunpack.c.h.b16 %v1860
    %v2057 = vunpack.c.l.b16 %v1861
    %v2058 = vunpack.c.h.b16 %v1861
    %v2059 = vunpack.c.l.b16 %v1862
    %v2060 = vunpack.c.h.b16 %v1862
    %v2061 = vunpack.c.l.b16 %v1863
    %v2062 = vunpack.c.h.b16 %v1863
    %v2063 = vunpack.c.l.b16 %v1864
    %v2064 = vunpack.c.h.b16 %v1864
    %v2065 = vunpack.c.l.b16 %v1865
    %v2066 = vunpack.c.h.b16 %v1865
    %v2067 = vunpack.c.l.b16 %v1866
    %v2068 = vunpack.c.h.b16 %v1866
    %v2069 = vunpack.c.l.b16 %v1867
    %v2070 = vunpack.c.h.b16 %v1867
    %v2071 = vunpack.c.l.b16 %v1868
    %v2072 = vunpack.c.h.b16 %v1868
    %v2073 = vpack.c.b16 %v1947, %v1945
    %v2074 = vpack.c.b16 %v1948, %v1946
    %v2075 = vpack.c.b16 %v1951, %v1949
    %v2076 = vpack.c.b16 %v1952, %v1950
    %v2077 = vpack.c.b16 %v1955, %v1953
    %v2078 = vpack.c.b16 %v1956, %v1954
    %v2079 = vpack.c.b16 %v1959, %v1957
    %v2080 = vpack.c.b16 %v1960, %v1958
    %v2081 = vpack.c.b16 %v1963, %v1961
    %v2082 = vpack.c.b16 %v1964, %v1962
    %v2083 = vpack.c.b16 %v1967, %v1965
    %v2084 = vpack.c.b16 %v1968, %v1966
    %v2085 = vpack.c.b16 %v1971, %v1969
    %v2086 = vpack.c.b16 %v1972, %v1970
    %v2087 = vpack.c.b16 %v1975, %v1973
    %v2088 = vpack.c.b16 %v1976, %v1974
    %v2089 = vpack.c.b16 %v1979, %v1977
    %v2090 = vpack.c.b16 %v1980, %v1978
    %v2091 = vpack.c.b16 %v1983, %v1981
    %v2092 = vpack.c.b16 %v1984, %v1982
    %v2093 = vpack.c.b16 %v1987, %v1985
    %v2094 = vpack.c.b16 %v1988, %v1986
    %v2095 = vpack.c.b16 %v1991, %v1989
    %v2096 = vpack.c.b16 %v1992, %v1990
    %v2097 = vpack.c.b16 %v1995, %v1993
    %v2098 = vpack.c.b16 %v1996, %v1994
    %v2099 = vpack.c.b16 %v1999, %v1997
    %v2100 = vpack.c.b16 %v2000, %v1998
    %v2101 = vpack.c.b16 %v2003, %v2001
    %v2102 = vpack.c.b16 %v2004, %v2002
    %v2103 = vpack.c.b16 %v2007, %v2005
    %v2104 = vpack.c.b16 %v2008, %v2006
    %v2105 = vpack.c.b16 %v2011, %v2009
    %v2106 = vpack.c.b16 %v2012, %v2010
    %v2107 = vpack.c.b16 %v2015, %v2013
    %v2108 = vpack.c.b16 %v2016, %v2014
    %v2109 = vpack.c.b16 %v2019, %v2017
    %v2110 = vpack.c.b16 %v2020, %v2018
    %v2111 = vpack.c.b16 %v2023, %v2021
    %v2112 = vpack.c.b16 %v2024, %v2022
    %v2113 = vpack.c.b16 %v2027, %v2025
    %v2114 = vpack.c.b16 %v2028, %v2026
    %v2115 = vpack.c.b16 %v2031, %v2029
    %v2116 = vpack.c.b16 %v2032, %v2030
    %v2117 = vpack.c.b16 %v2035, %v2033
    %v2118 = vpack.c.b16 %v2036, %v2034
    %v2119 = vpack.c.b16 %v2039, %v2037
    %v2120 = vpack.c.b16 %v2040, %v2038
    %v2121 = vpack.c.b16 %v2043, %v2041
    %v2122 = vpack.c.b16 %v2044, %v2042
    %v2123 = vpack.c.b16 %v2047, %v2045
    %v2124 = vpack.c.b16 %v2048, %v2046
    %v2125 = vpack.c.b16 %v2051, %v2049
    %v2126 = vpack.c.b16 %v2052, %v2050
    %v2127 = vpack.c.b16 %v2055, %v2053
    %v2128 = vpack.c.b16 %v2056, %v2054
    %v2129 = vpack.c.b16 %v2059, %v2057
    %v2130 = vpack.c.b16 %v2060, %v2058
    %v2131 = vpack.c.b16 %v2063, %v2061
    %v2132 = vpack.c.b16 %v2064, %v2062
    %v2133 = vpack.c.b16 %v2067, %v2065
    %v2134 = vpack.c.b16 %v2068, %v2066
    %v2135 = vpack.c.b16 %v2071, %v2069
    %v2136 = vpack.c.b16 %v2072, %v2070
    %2201 = vmatprep.subr.bf16.mxu0 %v2074
    %2202 = vmatpush1.bf16.msra.mxu0 %v2073
    %2203 = vmatprep.subr.bf16.mxu0 %v2076
    %2204 = vmatpush1.bf16.msra.mxu0 %v2075
    %2205 = vmatprep.subr.bf16.mxu0 %v2078
    %2206 = vmatpush1.bf16.msra.mxu0 %v2077
    %2207 = vmatprep.subr.bf16.mxu0 %v2080
    %2208 = vmatpush1.bf16.msra.mxu0 %v2079
    %2209 = vmatprep.subr.bf16.mxu0 %v2082
    %2210 = vmatpush1.bf16.msra.mxu0 %v2081
    %2211 = vmatprep.subr.bf16.mxu0 %v2084
    %2212 = vmatpush1.bf16.msra.mxu0 %v2083
    %2213 = vmatprep.subr.bf16.mxu0 %v2086
    %2214 = vmatpush1.bf16.msra.mxu0 %v2085
    %2215 = vmatprep.subr.bf16.mxu0 %v2088
    %2216 = vmatpush1.bf16.msra.mxu0 %v2087
    %2217 = vmatprep.subr.bf16.mxu0 %v2090
    %2218 = vmatpush1.bf16.msra.mxu0 %v2089
    %2219 = vmatprep.subr.bf16.mxu0 %v2092
    %2220 = vmatpush1.bf16.msra.mxu0 %v2091
    %2221 = vmatprep.subr.bf16.mxu0 %v2094
    %2222 = vmatpush1.bf16.msra.mxu0 %v2093
    %2223 = vmatprep.subr.bf16.mxu0 %v2096
    %2224 = vmatpush1.bf16.msra.mxu0 %v2095
    %2225 = vmatprep.subr.bf16.mxu0 %v2098
    %2226 = vmatpush1.bf16.msra.mxu0 %v2097
    %2227 = vmatprep.subr.bf16.mxu0 %v2100
    %2228 = vmatpush1.bf16.msra.mxu0 %v2099
    %2229 = vmatprep.subr.bf16.mxu0 %v2102
    %2230 = vmatpush1.bf16.msra.mxu0 %v2101
    %2231 = vmatprep.subr.bf16.mxu0 %v2104
    %2232 = vmatpush1.bf16.msra.mxu0 %v2103
    %2233 = vmatprep.mubr.bf16.mxu0 %v1802
    %2234 = vmatmul.mubr.bf16.gmra.mrb[0].mxu0 %v1801
    %v2235 = vpop.f32.mrb[0].mxu0
    %v2236 = vadd.f32 %v1874, %v2235
    %v2237 = vpop.f32.mrb[0].mxu0
    %v2238 = vadd.f32 %v1878, %v2237
    %v2239 = vpop.f32.mrb[0].mxu0
    %v2240 = vpop.f32.mrb[0].mxu0
    %2241 = vdwg.mxu0
    %2242 = vmatprep.subr.bf16.mxu0 %v2106
    %2243 = vmatpush1.bf16.msra.mxu0 %v2105
    %2244 = vmatprep.subr.bf16.mxu0 %v2108
    %2245 = vmatpush1.bf16.msra.mxu0 %v2107
    %2246 = vmatprep.subr.bf16.mxu0 %v2110
    %2247 = vmatpush1.bf16.msra.mxu0 %v2109
    %2248 = vmatprep.subr.bf16.mxu0 %v2112
    %2249 = vmatpush1.bf16.msra.mxu0 %v2111
    %2250 = vmatprep.subr.bf16.mxu0 %v2114
    %2251 = vmatpush1.bf16.msra.mxu0 %v2113
    %2252 = vmatprep.subr.bf16.mxu0 %v2116
    %2253 = vmatpush1.bf16.msra.mxu0 %v2115
    %2254 = vmatprep.subr.bf16.mxu0 %v2118
    %2255 = vmatpush1.bf16.msra.mxu0 %v2117
    %2256 = vmatprep.subr.bf16.mxu0 %v2120
    %2257 = vmatpush1.bf16.msra.mxu0 %v2119
    %2258 = vmatprep.subr.bf16.mxu0 %v2122
    %2259 = vmatpush1.bf16.msra.mxu0 %v2121
    %2260 = vmatprep.subr.bf16.mxu0 %v2124
    %2261 = vmatpush1.bf16.msra.mxu0 %v2123
    %2262 = vmatprep.subr.bf16.mxu0 %v2126
    %2263 = vmatpush1.bf16.msra.mxu0 %v2125
    %2264 = vmatprep.subr.bf16.mxu0 %v2128
    %2265 = vmatpush1.bf16.msra.mxu0 %v2127
    %2266 = vmatprep.subr.bf16.mxu0 %v2130
    %2267 = vmatpush1.bf16.msra.mxu0 %v2129
    %2268 = vmatprep.subr.bf16.mxu0 %v2132
    %2269 = vmatpush1.bf16.msra.mxu0 %v2131
    %2270 = vmatprep.subr.bf16.mxu0 %v2134
    %2271 = vmatpush1.bf16.msra.mxu0 %v2133
    %2272 = vmatprep.subr.bf16.mxu0 %v2136
    %2273 = vmatpush1.bf16.msra.mxu0 %v2135
    %2274 = vmatprep.mubr.bf16.mxu0 %v1804
    %2275 = vmatmul.mubr.bf16.gmra.mrb[0].mxu0 %v1803
    %v2276 = vpop.f32.mrb[0].mxu0
    %v2277 = vadd.f32 %v2236, %v2276
    %v2278 = vpop.f32.mrb[0].mxu0
    %v2279 = vadd.f32 %v2238, %v2278
    %v2280 = vpop.f32.mrb[0].mxu0
    %v2281 = vpop.f32.mrb[0].mxu0
    %2282 = vdwg.mxu0
    %v2283 = vmax.f32 %v2277, 0.0
    %v2284 = vmax.f32 %v2279, 0.0
    %v2285 = vpack.c.bf16 %v2283, %v2283
    %v2286 = vpack.c.bf16 %v2284, %v2284
    %v2287 = vld [vmem:[%s5] sm:$0xf]
    %v2288 = vld [vmem:[%s5 + $0x4] sm:$0xf]
    %v2289 = vld [vmem:[%s5 + $0x8] sm:$0xf]
    %v2290 = vld [vmem:[%s5 + $0xc] sm:$0xf]
    %v2291 = vld [vmem:[%s5 + $0x10] sm:$0xf]
    %v2292 = vld [vmem:[%s5 + $0x14] sm:$0xf]
    %v2293 = vld [vmem:[%s5 + $0x18] sm:$0xf]
    %v2294 = vld [vmem:[%s5 + $0x1c] sm:$0xf]
    %v2295 = vld [vmem:[%s5 + $0x20] sm:$0xf]
    %v2296 = vld [vmem:[%s5 + $0x24] sm:$0xf]
    %v2297 = vld [vmem:[%s5 + $0x28] sm:$0xf]
    %v2298 = vld [vmem:[%s5 + $0x2c] sm:$0xf]
    %v2299 = vld [vmem:[%s5 + $0x30] sm:$0xf]
    %v2300 = vld [vmem:[%s5 + $0x34] sm:$0xf]
    %v2301 = vld [vmem:[%s5 + $0x38] sm:$0xf]
    %v2302 = vld [vmem:[%s5 + $0x3c] sm:$0xf]
    %v2303 = vld [vmem:[%s5 + $0x40] sm:$0xf]
    %v2304 = vld [vmem:[%s5 + $0x44] sm:$0xf]
    %v2305 = vld [vmem:[%s5 + $0x48] sm:$0xf]
    %v2306 = vld [vmem:[%s5 + $0x4c] sm:$0xf]
    %v2307 = vld [vmem:[%s5 + $0x50] sm:$0xf]
    %v2308 = vld [vmem:[%s5 + $0x54] sm:$0xf]
    %v2309 = vld [vmem:[%s5 + $0x58] sm:$0xf]
    %v2310 = vld [vmem:[%s5 + $0x5c] sm:$0xf]
    %v2311 = vld [vmem:[%s5 + $0x60] sm:$0xf]
    %v2312 = vld [vmem:[%s5 + $0x64] sm:$0xf]
    %v2313 = vld [vmem:[%s5 + $0x68] sm:$0xf]
    %v2314 = vld [vmem:[%s5 + $0x6c] sm:$0xf]
    %v2315 = vld [vmem:[%s5 + $0x70] sm:$0xf]
    %v2316 = vld [vmem:[%s5 + $0x74] sm:$0xf]
    %v2317 = vld [vmem:[%s5 + $0x78] sm:$0xf]
    %v2318 = vld [vmem:[%s5 + $0x7c] sm:$0xf]
    %v2319 = vld [vmem:[%s6] sm:$0x1]
    %v2321 = vlaneseq
    %v2322 = vshrl.u32 %v2321, 7
    %v2323 = vsub.s32 0, %v2322
    %v2324 = vrot.slane %v2319, %v2323
    %v2358 = vunpack.c.l.b16 %v2287
    %v2359 = vunpack.c.l.b16 %v2288
    %v2360 = vunpack.c.l.b16 %v2289
    %v2361 = vunpack.c.l.b16 %v2290
    %v2362 = vunpack.c.l.b16 %v2291
    %v2363 = vunpack.c.l.b16 %v2292
    %v2364 = vunpack.c.l.b16 %v2293
    %v2365 = vunpack.c.l.b16 %v2294
    %v2366 = vunpack.c.l.b16 %v2295
    %v2367 = vunpack.c.l.b16 %v2296
    %v2368 = vunpack.c.l.b16 %v2297
    %v2369 = vunpack.c.l.b16 %v2298
    %v2370 = vunpack.c.l.b16 %v2299
    %v2371 = vunpack.c.l.b16 %v2300
    %v2372 = vunpack.c.l.b16 %v2301
    %v2373 = vunpack.c.l.b16 %v2302
    %v2374 = vunpack.c.l.b16 %v2303
    %v2375 = vunpack.c.l.b16 %v2304
    %v2376 = vunpack.c.l.b16 %v2305
    %v2377 = vunpack.c.l.b16 %v2306
    %v2378 = vunpack.c.l.b16 %v2307
    %v2379 = vunpack.c.l.b16 %v2308
    %v2380 = vunpack.c.l.b16 %v2309
    %v2381 = vunpack.c.l.b16 %v2310
    %v2382 = vunpack.c.l.b16 %v2311
    %v2383 = vunpack.c.l.b16 %v2312
    %v2384 = vunpack.c.l.b16 %v2313
    %v2385 = vunpack.c.l.b16 %v2314
    %v2386 = vunpack.c.l.b16 %v2315
    %v2387 = vunpack.c.l.b16 %v2316
    %v2388 = vunpack.c.l.b16 %v2317
    %v2389 = vunpack.c.l.b16 %v2318
    %v2390 = vpack.c.b16 %v2359, %v2358
    %v2391 = vpack.c.b16 %v2361, %v2360
    %v2392 = vpack.c.b16 %v2363, %v2362
    %v2393 = vpack.c.b16 %v2365, %v2364
    %v2394 = vpack.c.b16 %v2367, %v2366
    %v2395 = vpack.c.b16 %v2369, %v2368
    %v2396 = vpack.c.b16 %v2371, %v2370
    %v2397 = vpack.c.b16 %v2373, %v2372
    %v2398 = vpack.c.b16 %v2375, %v2374
    %v2399 = vpack.c.b16 %v2377, %v2376
    %v2400 = vpack.c.b16 %v2379, %v2378
    %v2401 = vpack.c.b16 %v2381, %v2380
    %v2402 = vpack.c.b16 %v2383, %v2382
    %v2403 = vpack.c.b16 %v2385, %v2384
    %v2404 = vpack.c.b16 %v2387, %v2386
    %v2405 = vpack.c.b16 %v2389, %v2388
    %2422 = vmatprep.subr.bf16.mxu0 0
    %2423 = vmatpush1.bf16.msra.mxu0 %v2390
    %2424 = vmatprep.subr.bf16.mxu0 0
    %2425 = vmatpush1.bf16.msra.mxu0 %v2391
    %2426 = vmatprep.subr.bf16.mxu0 0
    %2427 = vmatpush1.bf16.msra.mxu0 %v2392
    %2428 = vmatprep.subr.bf16.mxu0 0
    %2429 = vmatpush1.bf16.msra.mxu0 %v2393
    %2430 = vmatprep.subr.bf16.mxu0 0
    %2431 = vmatpush1.bf16.msra.mxu0 %v2394
    %2432 = vmatprep.subr.bf16.mxu0 0
    %2433 = vmatpush1.bf16.msra.mxu0 %v2395
    %2434 = vmatprep.subr.bf16.mxu0 0
    %2435 = vmatpush1.bf16.msra.mxu0 %v2396
    %2436 = vmatprep.subr.bf16.mxu0 0
    %2437 = vmatpush1.bf16.msra.mxu0 %v2397
    %2438 = vmatprep.subr.bf16.mxu0 0
    %2439 = vmatpush1.bf16.msra.mxu0 %v2398
    %2440 = vmatprep.subr.bf16.mxu0 0
    %2441 = vmatpush1.bf16.msra.mxu0 %v2399
    %2442 = vmatprep.subr.bf16.mxu0 0
    %2443 = vmatpush1.bf16.msra.mxu0 %v2400
    %2444 = vmatprep.subr.bf16.mxu0 0
    %2445 = vmatpush1.bf16.msra.mxu0 %v2401
    %2446 = vmatprep.subr.bf16.mxu0 0
    %2447 = vmatpush1.bf16.msra.mxu0 %v2402
    %2448 = vmatprep.subr.bf16.mxu0 0
    %2449 = vmatpush1.bf16.msra.mxu0 %v2403
    %2450 = vmatprep.subr.bf16.mxu0 0
    %2451 = vmatpush1.bf16.msra.mxu0 %v2404
    %2452 = vmatprep.subr.bf16.mxu0 0
    %2453 = vmatpush1.bf16.msra.mxu0 %v2405
    %2454 = vmatprep.mubr.bf16.mxu0 %v2286
    %2455 = vmatmul.mubr.bf16.gmra.mrb[0].mxu0 %v2285
    %v2456 = vpop.f32.mrb[0].mxu0
    %v2457 = vadd.f32 %v2324, %v2456
    %v2458 = vpop.f32.mrb[0].mxu0
    %v2459 = vpop.f32.mrb[0].mxu0
    %v2460 = vpop.f32.mrb[0].mxu0
    %2461 = vdwg.mxu0
    %v2462 = vmax.f32 %v2457, 0.0
    %v2463 = vpack.c.bf16 %v2462, %v2462
    %v2464 = vld [vmem:[#allocation6] sm:$0xf]
    %v2465 = vld [vmem:[#allocation6 + $0x4] sm:$0xf]
    %v2466 = vld [vmem:[#allocation6 + $0x8] sm:$0xf]
    %v2467 = vld [vmem:[#allocation6 + $0xc] sm:$0xf]
    %v2468 = vld [vmem:[#allocation6 + $0x10] sm:$0xf]
    %v2469 = vld [vmem:[#allocation6 + $0x14] sm:$0xf]
    %v2470 = vld [vmem:[#allocation6 + $0x18] sm:$0xf]
    %v2471 = vld [vmem:[#allocation6 + $0x1c] sm:$0xf]
    %v2472 = vld [vmem:[#allocation6 + $0x20] sm:$0xf]
    %v2473 = vld [vmem:[#allocation6 + $0x24] sm:$0xf]
    %v2474 = vld [vmem:[#allocation6 + $0x28] sm:$0xf]
    %v2475 = vld [vmem:[#allocation6 + $0x2c] sm:$0xf]
    %v2476 = vld [vmem:[#allocation6 + $0x30] sm:$0xf]
    %v2477 = vld [vmem:[#allocation6 + $0x34] sm:$0xf]
    %v2478 = vld [vmem:[#allocation6 + $0x38] sm:$0xf]
    %v2479 = vld [vmem:[#allocation6 + $0x3c] sm:$0xf]
    %v2480 = vld [vmem:[%s8] sm:$0x1]
    %v2482 = vlaneseq
    %v2483 = vshrl.u32 %v2482, 7
    %v2484 = vsub.s32 0, %v2483
    %v2485 = vrot.slane %v2480, %v2484
    %v2503 = vunpack.c.l.b16 %v2464
    %v2504 = vunpack.c.l.b16 %v2465
    %v2505 = vunpack.c.l.b16 %v2466
    %v2506 = vunpack.c.l.b16 %v2467
    %v2507 = vunpack.c.l.b16 %v2468
    %v2508 = vunpack.c.l.b16 %v2469
    %v2509 = vunpack.c.l.b16 %v2470
    %v2510 = vunpack.c.l.b16 %v2471
    %v2511 = vunpack.c.l.b16 %v2472
    %v2512 = vunpack.c.l.b16 %v2473
    %v2513 = vunpack.c.l.b16 %v2474
    %v2514 = vunpack.c.l.b16 %v2475
    %v2515 = vunpack.c.l.b16 %v2476
    %v2516 = vunpack.c.l.b16 %v2477
    %v2517 = vunpack.c.l.b16 %v2478
    %v2518 = vunpack.c.l.b16 %v2479
    %v2519 = vpack.c.b16 %v2504, %v2503
    %v2520 = vpack.c.b16 %v2506, %v2505
    %v2521 = vpack.c.b16 %v2508, %v2507
    %v2522 = vpack.c.b16 %v2510, %v2509
    %v2523 = vpack.c.b16 %v2512, %v2511
    %v2524 = vpack.c.b16 %v2514, %v2513
    %v2525 = vpack.c.b16 %v2516, %v2515
    %v2526 = vpack.c.b16 %v2518, %v2517
    %2535 = vmatprep.subr.bf16.mxu0 0
    %2536 = vmatpush1.bf16.msra.mxu0 %v2519
    %2537 = vmatprep.subr.bf16.mxu0 0
    %2538 = vmatpush1.bf16.msra.mxu0 %v2520
    %2539 = vmatprep.subr.bf16.mxu0 0
    %2540 = vmatpush1.bf16.msra.mxu0 %v2521
    %2541 = vmatprep.subr.bf16.mxu0 0
    %2542 = vmatpush1.bf16.msra.mxu0 %v2522
    %2543 = vmatprep.subr.bf16.mxu0 0
    %2544 = vmatpush1.bf16.msra.mxu0 %v2523
    %2545 = vmatprep.subr.bf16.mxu0 0
    %2546 = vmatpush1.bf16.msra.mxu0 %v2524
    %2547 = vmatprep.subr.bf16.mxu0 0
    %2548 = vmatpush1.bf16.msra.mxu0 %v2525
    %2549 = vmatprep.subr.bf16.mxu0 0
    %2550 = vmatpush1.bf16.msra.mxu0 %v2526
    %2551 = vmatprep.subr.bf16.mxu0 0
    %2552 = vmatpush1.bf16.msra.mxu0 0
    %2553 = vmatprep.subr.bf16.mxu0 0
    %2554 = vmatpush1.bf16.msra.mxu0 0
    %2555 = vmatprep.subr.bf16.mxu0 0
    %2556 = vmatpush1.bf16.msra.mxu0 0
    %2557 = vmatprep.subr.bf16.mxu0 0
    %2558 = vmatpush1.bf16.msra.mxu0 0
    %2559 = vmatprep.subr.bf16.mxu0 0
    %2560 = vmatpush1.bf16.msra.mxu0 0
    %2561 = vmatprep.subr.bf16.mxu0 0
    %2562 = vmatpush1.bf16.msra.mxu0 0
    %2563 = vmatprep.subr.bf16.mxu0 0
    %2564 = vmatpush1.bf16.msra.mxu0 0
    %2565 = vmatprep.subr.bf16.mxu0 0
    %2566 = vmatpush1.bf16.msra.mxu0 0
    %2567 = vmatprep.mubr.bf16.mxu0 0
    %2568 = vmatmul.mubr.bf16.gmra.mrb[0].mxu0 %v2463
    %v2569 = vpop.f32.mrb[0].mxu0
    %v2570 = vadd.f32 %v2485, %v2569
    %v2571 = vpop.f32.mrb[0].mxu0
    %v2572 = vpop.f32.mrb[0].mxu0
    %v2573 = vpop.f32.mrb[0].mxu0
    %2574 = vdwg.mxu0
    %2575 = vst [vmem:[%s9] sm:$0xff] %v2570
    // Predicated region
    $region50: #{deep_forward.1} parent=1 // pred_check
      _
    $region51: #{deep_forward.1} parent=1 // pred_check_branch
      %2577 = sbr.rel (0) target = $region53
    $region52: #{deep_forward.1} parent=1 // pred_region
      _
    $region53: #{deep_forward.1} parent=1 // pred_fallthru
      _
    // Predicated region
    $region54: #{deep_forward.1} parent=1 // pred_check
      _
    $region55: #{deep_forward.1} parent=1 // pred_check_branch
      %2579 = sbr.rel (0) target = $region57
    $region56: #{deep_forward.1} parent=1 // pred_region
      _
    $region57: #{deep_forward.1} parent=1 // pred_fallthru
      _
    %2580 = vsyncpa [#allocation3], 1
    %2581 = vsyncpa [#allocation5], 1

// kernel: _lambda_.1
$region0: #{_lambda_.1}
  #allocation0 [shape = 'u32[]', space=smem, size = 0x4, offset = 0x4, fixed_abs, tag = 'smem constant byte address 0x4 - core index']
  #allocation1 [shape = 'u32[144,128]{1,0:T(1,128)}', space=vmem, size = 0x12000, scoped, tag = 'internal scratch']
  %s0 = inlined_call_operand.vmem [shape: bf16[8,896], index: 0, kind: input, shape index: {}]
  %s1 = inlined_call_operand.hbm [shape: bf16[896,512], index: 1, kind: input, shape index: {}]
  %s2 = inlined_call_operand.vmem [shape: f32[1,512], index: 2, kind: input, shape index: {}]
  %s3 = inlined_call_operand.hbm [shape: bf16[512,256], index: 3, kind: input, shape index: {}]
  %s4 = inlined_call_operand.vmem [shape: f32[1,256], index: 4, kind: input, shape index: {}]
  %s5 = inlined_call_operand.vmem [shape: bf16[256,128], index: 5, kind: input, shape index: {}]
  %s6 = inlined_call_operand.vmem [shape: f32[1,128], index: 6, kind: input, shape index: {}]
  %s7 = inlined_call_operand.hbm [shape: bf16[128,128], index: 7, kind: input, shape index: {}]
  %s8 = inlined_call_operand.vmem [shape: f32[1,128], index: 8, kind: input, shape index: {}]
  %s9 = inlined_call_operand.vmem [shape: f32[8,128], index: 9, kind: output, shape index: {}]
  %s10 = sld [smem:[#allocation0]]
  $region58: #{_lambda_.1} parent=0
    _
  %s12 = ssub.s32 1, %s10
  %s13 = scalar_select 0, %s12, %s10
  $region1: #{_lambda_.1} parent=0
    #allocation2 [shape = 'u8[917504]{0}', space=vmem, size = 0xe0000, scoped, tag = 'input window, operand 1, single buffered']
    #allocation3 [shape = 's32[1]{0}', space=sflag, size = 0x4, scoped, tag = 'scoped memory for _lambda_.1']
    #allocation4 [shape = 'u8[262144]{0}', space=vmem, size = 0x40000, scoped, tag = 'input window, operand 3, single buffered']
    #allocation5 [shape = 's32[1]{0}', space=sflag, size = 0x4, scoped, tag = 'scoped memory for _lambda_.1']
    #allocation6 [shape = 'u8[32768]{0}', space=vmem, size = 0x8000, scoped, tag = 'input window, operand 7, single buffered']
    %14 = vsyncpa [#allocation3], 0
    %15 = vsyncpa [#allocation5], 0
    // Predicated region
    $region2: #{_lambda_.1} parent=1 // pred_check
      _
    $region3: #{_lambda_.1} parent=1 // pred_check_branch
      %17 = sbr.rel (0) target = $region5
    $region4: #{_lambda_.1} parent=1 // pred_region
      _
    $region5: #{_lambda_.1} parent=1 // pred_fallthru
      _
    // Predicated region
    $region6: #{_lambda_.1} parent=1 // pred_check
      _
    $region7: #{_lambda_.1} parent=1 // pred_check_branch
      %19 = sbr.rel (0) target = $region9
    $region8: #{_lambda_.1} parent=1 // pred_region
      %s21 = ssub.s32 28672, 28672
      %22 = vsyncadd [#allocation3], %s21
      %s23 = sshll.u32 [#allocation2], 4
      %s24 = int_to_ptr.vmem [resolvable:$true] %s23
      %29 = dma.hbm_to_vmem [thread:$0]  %s1, 28672, %s24, [#allocation3], 256, 256, 16
    $region9: #{_lambda_.1} parent=1 // pred_fallthru
      _
    // Predicated region
    $region10: #{_lambda_.1} parent=1 // pred_check
      _
    $region11: #{_lambda_.1} parent=1 // pred_check_branch
      %31 = sbr.rel (0) target = $region13
    $region12: #{_lambda_.1} parent=1 // pred_region
      _
    $region13: #{_lambda_.1} parent=1 // pred_fallthru
      _
    // Predicated region
    $region14: #{_lambda_.1} parent=1 // pred_check
      _
    $region15: #{_lambda_.1} parent=1 // pred_check_branch
      %33 = sbr.rel (0) target = $region17
    $region16: #{_lambda_.1} parent=1 // pred_region
      %s35 = ssub.s32 8192, 8192
      %36 = vsyncadd [#allocation5], %s35
      %s37 = sshll.u32 [#allocation4], 4
      %s38 = int_to_ptr.vmem [resolvable:$true] %s37
      %43 = dma.hbm_to_vmem [thread:$0]  %s3, 8192, %s38, [#allocation5], 128, 128, 8
    $region17: #{_lambda_.1} parent=1 // pred_fallthru
      _
    // Predicated region
    $region18: #{_lambda_.1} parent=1 // pred_check
      _
    $region19: #{_lambda_.1} parent=1 // pred_check_branch
      %45 = sbr.rel (0) target = $region21
    $region20: #{_lambda_.1} parent=1 // pred_region
      _
    $region21: #{_lambda_.1} parent=1 // pred_fallthru
      _
    // Predicated region
    $region22: #{_lambda_.1} parent=1 // pred_check
      _
    $region23: #{_lambda_.1} parent=1 // pred_check_branch
      %47 = sbr.rel (0) target = $region25
    $region24: #{_lambda_.1} parent=1 // pred_region
      _
    $region25: #{_lambda_.1} parent=1 // pred_fallthru
      _
    // Predicated region
    $region26: #{_lambda_.1} parent=1 // pred_check
      _
    $region27: #{_lambda_.1} parent=1 // pred_check_branch
      %49 = sbr.rel (0) target = $region29
    $region28: #{_lambda_.1} parent=1 // pred_region
      _
    $region29: #{_lambda_.1} parent=1 // pred_fallthru
      _
    // Predicated region
    $region30: #{_lambda_.1} parent=1 // pred_check
      _
    $region31: #{_lambda_.1} parent=1 // pred_check_branch
      %51 = sbr.rel (0) target = $region33
    $region32: #{_lambda_.1} parent=1 // pred_region
      %s53 = ssub.s32 1024, 1024
      %54 = vsyncadd [#allocation5], %s53
      %s55 = sshll.u32 [#allocation6], 4
      %s56 = int_to_ptr.vmem [resolvable:$true] %s55
      %61 = dma.hbm_to_vmem [thread:$0]  %s7, 1024, %s56, [#allocation5], 64, 64, 4
    $region33: #{_lambda_.1} parent=1 // pred_fallthru
      _
    // Predicated region
    $region34: #{_lambda_.1} parent=1 // pred_check
      _
    $region35: #{_lambda_.1} parent=1 // pred_check_branch
      %63 = sbr.rel (0) target = $region37
    $region36: #{_lambda_.1} parent=1 // pred_region
      _
    $region37: #{_lambda_.1} parent=1 // pred_fallthru
      _
    // Predicated region
    $region38: #{_lambda_.1} parent=1 // pred_check
      _
    $region39: #{_lambda_.1} parent=1 // pred_check_branch
      %65 = sbr.rel (0) target = $region41
    $region40: #{_lambda_.1} parent=1 // pred_region
      %66 = dma.done [#allocation3], 28672
    $region41: #{_lambda_.1} parent=1 // pred_fallthru
      _
    // Predicated region
    $region42: #{_lambda_.1} parent=1 // pred_check
      _
    $region43: #{_lambda_.1} parent=1 // pred_check_branch
      %68 = sbr.rel (0) target = $region45
    $region44: #{_lambda_.1} parent=1 // pred_region
      %69 = dma.done [#allocation5], 8192
    $region45: #{_lambda_.1} parent=1 // pred_fallthru
      _
    // Predicated region
    $region46: #{_lambda_.1} parent=1 // pred_check
      _
    $region47: #{_lambda_.1} parent=1 // pred_check_branch
      %71 = sbr.rel (0) target = $region49
    $region48: #{_lambda_.1} parent=1 // pred_region
      %72 = dma.done [#allocation5], 1024
    $region49: #{_lambda_.1} parent=1 // pred_fallthru
      _
    %v74 = vld [vmem:[%s0] sm:$0xff]
    %v75 = vld [vmem:[%s0 + $0x8] sm:$0xff]
    %v76 = vld [vmem:[%s0 + $0x10] sm:$0xff]
    %v77 = vld [vmem:[%s0 + $0x18] sm:$0xf]
    %v78 = vld [vmem:[#allocation2] sm:$0xff]
    %v79 = vld [vmem:[#allocation2 + $0x8] sm:$0xff]
    %v80 = vld [vmem:[#allocation2 + $0x10] sm:$0xff]
    %v81 = vld [vmem:[#allocation2 + $0x18] sm:$0xff]
    %v82 = vld [vmem:[#allocation2 + $0x20] sm:$0xff]
    %v83 = vld [vmem:[#allocation2 + $0x28] sm:$0xff]
    %v84 = vld [vmem:[#allocation2 + $0x30] sm:$0xff]
    %v85 = vld [vmem:[#allocation2 + $0x38] sm:$0xff]
    %v86 = vld [vmem:[#allocation2 + $0x40] sm:$0xff]
    %v87 = vld [vmem:[#allocation2 + $0x48] sm:$0xff]
    %v88 = vld [vmem:[#allocation2 + $0x50] sm:$0xff]
    %v89 = vld [vmem:[#allocation2 + $0x58] sm:$0xff]
    %v90 = vld [vmem:[#allocation2 + $0x60] sm:$0xff]
    %v91 = vld [vmem:[#allocation2 + $0x68] sm:$0xff]
    %v92 = vld [vmem:[#allocation2 + $0x70] sm:$0xff]
    %v93 = vld [vmem:[#allocation2 + $0x78] sm:$0xff]
    %v94 = vld [vmem:[#allocation2 + $0x80] sm:$0xff]
    %v95 = vld [vmem:[#allocation2 + $0x88] sm:$0xff]
    %v96 = vld [vmem:[#allocation2 + $0x90] sm:$0xff]
    %v97 = vld [vmem:[#allocation2 + $0x98] sm:$0xff]
    %v98 = vld [vmem:[#allocation2 + $0xa0] sm:$0xff]
    %v99 = vld [vmem:[#allocation2 + $0xa8] sm:$0xff]
    %v100 = vld [vmem:[#allocation2 + $0xb0] sm:$0xff]
    %v101 = vld [vmem:[#allocation2 + $0xb8] sm:$0xff]
    %v102 = vld [vmem:[#allocation2 + $0xc0] sm:$0xff]
    %v103 = vld [vmem:[#allocation2 + $0xc8] sm:$0xff]
    %v104 = vld [vmem:[#allocation2 + $0xd0] sm:$0xff]
    %v105 = vld [vmem:[#allocation2 + $0xd8] sm:$0xff]
    %v106 = vld [vmem:[#allocation2 + $0xe0] sm:$0xff]
    %v107 = vld [vmem:[#allocation2 + $0xe8] sm:$0xff]
    %v108 = vld [vmem:[#allocation2 + $0xf0] sm:$0xff]
    %v109 = vld [vmem:[#allocation2 + $0xf8] sm:$0xff]
    %v110 = vld [vmem:[#allocation2 + $0x100] sm:$0xff]
    %v111 = vld [vmem:[#allocation2 + $0x108] sm:$0xff]
    %v112 = vld [vmem:[#allocation2 + $0x110] sm:$0xff]
    %v113 = vld [vmem:[#allocation2 + $0x118] sm:$0xff]
    %v114 = vld [vmem:[#allocation2 + $0x120] sm:$0xff]
    %v115 = vld [vmem:[#allocation2 + $0x128] sm:$0xff]
    %v116 = vld [vmem:[#allocation2 + $0x130] sm:$0xff]
    %v117 = vld [vmem:[#allocation2 + $0x138] sm:$0xff]
    %v118 = vld [vmem:[#allocation2 + $0x140] sm:$0xff]
    %v119 = vld [vmem:[#allocation2 + $0x148] sm:$0xff]
    %v120 = vld [vmem:[#allocation2 + $0x150] sm:$0xff]
    %v121 = vld [vmem:[#allocation2 + $0x158] sm:$0xff]
    %v122 = vld [vmem:[#allocation2 + $0x160] sm:$0xff]
    %v123 = vld [vmem:[#allocation2 + $0x168] sm:$0xff]
    %v124 = vld [vmem:[#allocation2 + $0x170] sm:$0xff]
    %v125 = vld [vmem:[#allocation2 + $0x178] sm:$0xff]
    %v126 = vld [vmem:[#allocation2 + $0x180] sm:$0xff]
    %v127 = vld [vmem:[#allocation2 + $0x188] sm:$0xff]
    %v128 = vld [vmem:[#allocation2 + $0x190] sm:$0xff]
    %v129 = vld [vmem:[#allocation2 + $0x198] sm:$0xff]
    %v130 = vld [vmem:[#allocation2 + $0x1a0] sm:$0xff]
    %v131 = vld [vmem:[#allocation2 + $0x1a8] sm:$0xff]
    %v132 = vld [vmem:[#allocation2 + $0x1b0] sm:$0xff]
    %v133 = vld [vmem:[#allocation2 + $0x1b8] sm:$0xff]
    %v134 = vld [vmem:[#allocation2 + $0x1c0] sm:$0xff]
    %v135 = vld [vmem:[#allocation2 + $0x1c8] sm:$0xff]
    %v136 = vld [vmem:[#allocation2 + $0x1d0] sm:$0xff]
    %v137 = vld [vmem:[#allocation2 + $0x1d8] sm:$0xff]
    %v138 = vld [vmem:[#allocation2 + $0x1e0] sm:$0xff]
    %v139 = vld [vmem:[#allocation2 + $0x1e8] sm:$0xff]
    %v140 = vld [vmem:[#allocation2 + $0x1f0] sm:$0xff]
    %v141 = vld [vmem:[#allocation2 + $0x1f8] sm:$0xff]
    %v142 = vld [vmem:[#allocation2 + $0x200] sm:$0xff]
    %v143 = vld [vmem:[#allocation2 + $0x208] sm:$0xff]
    %v144 = vld [vmem:[#allocation2 + $0x210] sm:$0xff]
    %v145 = vld [vmem:[#allocation2 + $0x218] sm:$0xff]
    %v146 = vld [vmem:[#allocation2 + $0x220] sm:$0xff]
    %v147 = vld [vmem:[#allocation2 + $0x228] sm:$0xff]
    %v148 = vld [vmem:[#allocation2 + $0x230] sm:$0xff]
    %v149 = vld [vmem:[#allocation2 + $0x238] sm:$0xff]
    %v150 = vld [vmem:[#allocation2 + $0x240] sm:$0xff]
    %v151 = vld [vmem:[#allocation2 + $0x248] sm:$0xff]
    %v152 = vld [vmem:[#allocation2 + $0x250] sm:$0xff]
    %v153 = vld [vmem:[#allocation2 + $0x258] sm:$0xff]
    %v154 = vld [vmem:[#allocation2 + $0x260] sm:$0xff]
    %v155 = vld [vmem:[#allocation2 + $0x268] sm:$0xff]
    %v156 = vld [vmem:[#allocation2 + $0x270] sm:$0xff]
    %v157 = vld [vmem:[#allocation2 + $0x278] sm:$0xff]
    %v158 = vld [vmem:[#allocation2 + $0x280] sm:$0xff]
    %v159 = vld [vmem:[#allocation2 + $0x288] sm:$0xff]
    %v160 = vld [vmem:[#allocation2 + $0x290] sm:$0xff]
    %v161 = vld [vmem:[#allocation2 + $0x298] sm:$0xff]
    %v162 = vld [vmem:[#allocation2 + $0x2a0] sm:$0xff]
    %v163 = vld [vmem:[#allocation2 + $0x2a8] sm:$0xff]
    %v164 = vld [vmem:[#allocation2 + $0x2b0] sm:$0xff]
    %v165 = vld [vmem:[#allocation2 + $0x2b8] sm:$0xff]
    %v166 = vld [vmem:[#allocation2 + $0x2c0] sm:$0xff]
    %v167 = vld [vmem:[#allocation2 + $0x2c8] sm:$0xff]
    %v168 = vld [vmem:[#allocation2 + $0x2d0] sm:$0xff]
    %v169 = vld [vmem:[#allocation2 + $0x2d8] sm:$0xff]
    %v170 = vld [vmem:[#allocation2 + $0x2e0] sm:$0xff]
    %v171 = vld [vmem:[#allocation2 + $0x2e8] sm:$0xff]
    %v172 = vld [vmem:[#allocation2 + $0x2f0] sm:$0xff]
    %v173 = vld [vmem:[#allocation2 + $0x2f8] sm:$0xff]
    %v174 = vld [vmem:[#allocation2 + $0x300] sm:$0xff]
    %v175 = vld [vmem:[#allocation2 + $0x308] sm:$0xff]
    %v176 = vld [vmem:[#allocation2 + $0x310] sm:$0xff]
    %v177 = vld [vmem:[#allocation2 + $0x318] sm:$0xff]
    %v178 = vld [vmem:[#allocation2 + $0x320] sm:$0xff]
    %v179 = vld [vmem:[#allocation2 + $0x328] sm:$0xff]
    %v180 = vld [vmem:[#allocation2 + $0x330] sm:$0xff]
    %v181 = vld [vmem:[#allocation2 + $0x338] sm:$0xff]
    %v182 = vld [vmem:[#allocation2 + $0x340] sm:$0xff]
    %v183 = vld [vmem:[#allocation2 + $0x348] sm:$0xff]
    %v184 = vld [vmem:[#allocation2 + $0x350] sm:$0xff]
    %v185 = vld [vmem:[#allocation2 + $0x358] sm:$0xff]
    %v186 = vld [vmem:[#allocation2 + $0x360] sm:$0xff]
    %v187 = vld [vmem:[#allocation2 + $0x368] sm:$0xff]
    %v188 = vld [vmem:[#allocation2 + $0x370] sm:$0xff]
    %v189 = vld [vmem:[#allocation2 + $0x378] sm:$0xff]
    %v190 = vld [vmem:[#allocation2 + $0x380] sm:$0xff]
    %v191 = vld [vmem:[#allocation2 + $0x388] sm:$0xff]
    %v192 = vld [vmem:[#allocation2 + $0x390] sm:$0xff]
    %v193 = vld [vmem:[#allocation2 + $0x398] sm:$0xff]
    %v194 = vld [vmem:[#allocation2 + $0x3a0] sm:$0xff]
    %v195 = vld [vmem:[#allocation2 + $0x3a8] sm:$0xff]
    %v196 = vld [vmem:[#allocation2 + $0x3b0] sm:$0xff]
    %v197 = vld [vmem:[#allocation2 + $0x3b8] sm:$0xff]
    %v198 = vld [vmem:[#allocation2 + $0x3c0] sm:$0xff]
    %v199 = vld [vmem:[#allocation2 + $0x3c8] sm:$0xff]
    %v200 = vld [vmem:[#allocation2 + $0x3d0] sm:$0xff]
    %v201 = vld [vmem:[#allocation2 + $0x3d8] sm:$0xff]
    %v202 = vld [vmem:[#allocation2 + $0x3e0] sm:$0xff]
    %v203 = vld [vmem:[#allocation2 + $0x3e8] sm:$0xff]
    %v204 = vld [vmem:[#allocation2 + $0x3f0] sm:$0xff]
    %v205 = vld [vmem:[#allocation2 + $0x3f8] sm:$0xff]
    %v206 = vld [vmem:[#allocation2 + $0x400] sm:$0xff]
    %v207 = vld [vmem:[#allocation2 + $0x408] sm:$0xff]
    %v208 = vld [vmem:[#allocation2 + $0x410] sm:$0xff]
    %v209 = vld [vmem:[#allocation2 + $0x418] sm:$0xff]
    %v210 = vld [vmem:[#allocation2 + $0x420] sm:$0xff]
    %v211 = vld [vmem:[#allocation2 + $0x428] sm:$0xff]
    %v212 = vld [vmem:[#allocation2 + $0x430] sm:$0xff]
    %v213 = vld [vmem:[#allocation2 + $0x438] sm:$0xff]
    %v214 = vld [vmem:[#allocation2 + $0x440] sm:$0xff]
    %v215 = vld [vmem:[#allocation2 + $0x448] sm:$0xff]
    %v216 = vld [vmem:[#allocation2 + $0x450] sm:$0xff]
    %v217 = vld [vmem:[#allocation2 + $0x458] sm:$0xff]
    %v218 = vld [vmem:[#allocation2 + $0x460] sm:$0xff]
    %v219 = vld [vmem:[#allocation2 + $0x468] sm:$0xff]
    %v220 = vld [vmem:[#allocation2 + $0x470] sm:$0xff]
    %v221 = vld [vmem:[#allocation2 + $0x478] sm:$0xff]
    %v222 = vld [vmem:[#allocation2 + $0x480] sm:$0xff]
    %v223 = vld [vmem:[#allocation2 + $0x488] sm:$0xff]
    %v224 = vld [vmem:[#allocation2 + $0x490] sm:$0xff]
    %v225 = vld [vmem:[#allocation2 + $0x498] sm:$0xff]
    %v226 = vld [vmem:[#allocation2 + $0x4a0] sm:$0xff]
    %v227 = vld [vmem:[#allocation2 + $0x4a8] sm:$0xff]
    %v228 = vld [vmem:[#allocation2 + $0x4b0] sm:$0xff]
    %v229 = vld [vmem:[#allocation2 + $0x4b8] sm:$0xff]
    %v230 = vld [vmem:[#allocation2 + $0x4c0] sm:$0xff]
    %v231 = vld [vmem:[#allocation2 + $0x4c8] sm:$0xff]
    %v232 = vld [vmem:[#allocation2 + $0x4d0] sm:$0xff]
    %v233 = vld [vmem:[#allocation2 + $0x4d8] sm:$0xff]
    %v234 = vld [vmem:[#allocation2 + $0x4e0] sm:$0xff]
    %v235 = vld [vmem:[#allocation2 + $0x4e8] sm:$0xff]
    %v236 = vld [vmem:[#allocation2 + $0x4f0] sm:$0xff]
    %v237 = vld [vmem:[#allocation2 + $0x4f8] sm:$0xff]
    %v238 = vld [vmem:[#allocation2 + $0x500] sm:$0xff]
    %v239 = vld [vmem:[#allocation2 + $0x508] sm:$0xff]
    %v240 = vld [vmem:[#allocation2 + $0x510] sm:$0xff]
    %v241 = vld [vmem:[#allocation2 + $0x518] sm:$0xff]
    %v242 = vld [vmem:[#allocation2 + $0x520] sm:$0xff]
    %v243 = vld [vmem:[#allocation2 + $0x528] sm:$0xff]
    %v244 = vld [vmem:[#allocation2 + $0x530] sm:$0xff]
    %v245 = vld [vmem:[#allocation2 + $0x538] sm:$0xff]
    %v246 = vld [vmem:[#allocation2 + $0x540] sm:$0xff]
    %v247 = vld [vmem:[#allocation2 + $0x548] sm:$0xff]
    %v248 = vld [vmem:[#allocation2 + $0x550] sm:$0xff]
    %v249 = vld [vmem:[#allocation2 + $0x558] sm:$0xff]
    %v250 = vld [vmem:[#allocation2 + $0x560] sm:$0xff]
    %v251 = vld [vmem:[#allocation2 + $0x568] sm:$0xff]
    %v252 = vld [vmem:[#allocation2 + $0x570] sm:$0xff]
    %v253 = vld [vmem:[#allocation2 + $0x578] sm:$0xff]
    %v254 = vld [vmem:[#allocation2 + $0x580] sm:$0xff]
    %v255 = vld [vmem:[#allocation2 + $0x588] sm:$0xff]
    %v256 = vld [vmem:[#allocation2 + $0x590] sm:$0xff]
    %v257 = vld [vmem:[#allocation2 + $0x598] sm:$0xff]
    %v258 = vld [vmem:[#allocation2 + $0x5a0] sm:$0xff]
    %v259 = vld [vmem:[#allocation2 + $0x5a8] sm:$0xff]
    %v260 = vld [vmem:[#allocation2 + $0x5b0] sm:$0xff]
    %v261 = vld [vmem:[#allocation2 + $0x5b8] sm:$0xff]
    %v262 = vld [vmem:[#allocation2 + $0x5c0] sm:$0xff]
    %v263 = vld [vmem:[#allocation2 + $0x5c8] sm:$0xff]
    %v264 = vld [vmem:[#allocation2 + $0x5d0] sm:$0xff]
    %v265 = vld [vmem:[#allocation2 + $0x5d8] sm:$0xff]
    %v266 = vld [vmem:[#allocation2 + $0x5e0] sm:$0xff]
    %v267 = vld [vmem:[#allocation2 + $0x5e8] sm:$0xff]
    %v268 = vld [vmem:[#allocation2 + $0x5f0] sm:$0xff]
    %v269 = vld [vmem:[#allocation2 + $0x5f8] sm:$0xff]
    %v270 = vld [vmem:[#allocation2 + $0x600] sm:$0xff]
    %v271 = vld [vmem:[#allocation2 + $0x608] sm:$0xff]
    %v272 = vld [vmem:[#allocation2 + $0x610] sm:$0xff]
    %v273 = vld [vmem:[#allocation2 + $0x618] sm:$0xff]
    %v274 = vld [vmem:[#allocation2 + $0x620] sm:$0xff]
    %v275 = vld [vmem:[#allocation2 + $0x628] sm:$0xff]
    %v276 = vld [vmem:[#allocation2 + $0x630] sm:$0xff]
    %v277 = vld [vmem:[#allocation2 + $0x638] sm:$0xff]
    %v278 = vld [vmem:[#allocation2 + $0x640] sm:$0xff]
    %v279 = vld [vmem:[#allocation2 + $0x648] sm:$0xff]
    %v280 = vld [vmem:[#allocation2 + $0x650] sm:$0xff]
    %v281 = vld [vmem:[#allocation2 + $0x658] sm:$0xff]
    %v282 = vld [vmem:[#allocation2 + $0x660] sm:$0xff]
    %v283 = vld [vmem:[#allocation2 + $0x668] sm:$0xff]
    %v284 = vld [vmem:[#allocation2 + $0x670] sm:$0xff]
    %v285 = vld [vmem:[#allocation2 + $0x678] sm:$0xff]
    %v286 = vld [vmem:[#allocation2 + $0x680] sm:$0xff]
    %v287 = vld [vmem:[#allocation2 + $0x688] sm:$0xff]
    %v288 = vld [vmem:[#allocation2 + $0x690] sm:$0xff]
    %v289 = vld [vmem:[#allocation2 + $0x698] sm:$0xff]
    %v290 = vld [vmem:[#allocation2 + $0x6a0] sm:$0xff]
    %v291 = vld [vmem:[#allocation2 + $0x6a8] sm:$0xff]
    %v292 = vld [vmem:[#allocation2 + $0x6b0] sm:$0xff]
    %v293 = vld [vmem:[#allocation2 + $0x6b8] sm:$0xff]
    %v294 = vld [vmem:[#allocation2 + $0x6c0] sm:$0xff]
    %v295 = vld [vmem:[#allocation2 + $0x6c8] sm:$0xff]
    %v296 = vld [vmem:[#allocation2 + $0x6d0] sm:$0xff]
    %v297 = vld [vmem:[#allocation2 + $0x6d8] sm:$0xff]
    %v298 = vld [vmem:[#allocation2 + $0x6e0] sm:$0xff]
    %v299 = vld [vmem:[#allocation2 + $0x6e8] sm:$0xff]
    %v300 = vld [vmem:[#allocation2 + $0x6f0] sm:$0xff]
    %v301 = vld [vmem:[#allocation2 + $0x6f8] sm:$0xff]
    %v302 = vld [vmem:[%s2] sm:$0xf]
    %v304 = vlaneseq
    %v305 = vshrl.u32 %v304, 7
    %v306 = vsub.s32 0, %v305
    %v307 = vrot.slane %v302, %v306
    %v308 = vlaneseq
    %v309 = vshrl.u32 %v308, 7
    %v310 = vsub.s32 1, %v309
    %v311 = vrot.slane %v302, %v310
    %v312 = vlaneseq
    %v313 = vshrl.u32 %v312, 7
    %v314 = vsub.s32 2, %v313
    %v315 = vrot.slane %v302, %v314
    %v316 = vlaneseq
    %v317 = vshrl.u32 %v316, 7
    %v318 = vsub.s32 3, %v317
    %v319 = vrot.slane %v302, %v318
    %v328 = vunpack.c.l.b16 %v74
    %v329 = vunpack.c.h.b16 %v74
    %v330 = vunpack.c.l.b16 %v75
    %v331 = vunpack.c.h.b16 %v75
    %v332 = vunpack.c.l.b16 %v76
    %v333 = vunpack.c.h.b16 %v76
    %v334 = vunpack.c.l.b16 %v77
    %v335 = vpack.c.b16 %v328, %v328
    %v336 = vpack.c.b16 %v329, %v329
    %v337 = vpack.c.b16 %v330, %v330
    %v338 = vpack.c.b16 %v331, %v331
    %v339 = vpack.c.b16 %v332, %v332
    %v340 = vpack.c.b16 %v333, %v333
    %v341 = vpack.c.b16 %v334, %v334
    %v573 = vunpack.c.l.b16 %v78
    %v574 = vunpack.c.h.b16 %v78
    %v575 = vunpack.c.l.b16 %v79
    %v576 = vunpack.c.h.b16 %v79
    %v577 = vunpack.c.l.b16 %v80
    %v578 = vunpack.c.h.b16 %v80
    %v579 = vunpack.c.l.b16 %v81
    %v580 = vunpack.c.h.b16 %v81
    %v581 = vunpack.c.l.b16 %v82
    %v582 = vunpack.c.h.b16 %v82
    %v583 = vunpack.c.l.b16 %v83
    %v584 = vunpack.c.h.b16 %v83
    %v585 = vunpack.c.l.b16 %v84
    %v586 = vunpack.c.h.b16 %v84
    %v587 = vunpack.c.l.b16 %v85
    %v588 = vunpack.c.h.b16 %v85
    %v589 = vunpack.c.l.b16 %v86
    %v590 = vunpack.c.h.b16 %v86
    %v591 = vunpack.c.l.b16 %v87
    %v592 = vunpack.c.h.b16 %v87
    %v593 = vunpack.c.l.b16 %v88
    %v594 = vunpack.c.h.b16 %v88
    %v595 = vunpack.c.l.b16 %v89
    %v596 = vunpack.c.h.b16 %v89
    %v597 = vunpack.c.l.b16 %v90
    %v598 = vunpack.c.h.b16 %v90
    %v599 = vunpack.c.l.b16 %v91
    %v600 = vunpack.c.h.b16 %v91
    %v601 = vunpack.c.l.b16 %v92
    %v602 = vunpack.c.h.b16 %v92
    %v603 = vunpack.c.l.b16 %v93
    %v604 = vunpack.c.h.b16 %v93
    %v605 = vunpack.c.l.b16 %v94
    %v606 = vunpack.c.h.b16 %v94
    %v607 = vunpack.c.l.b16 %v95
    %v608 = vunpack.c.h.b16 %v95
    %v609 = vunpack.c.l.b16 %v96
    %v610 = vunpack.c.h.b16 %v96
    %v611 = vunpack.c.l.b16 %v97
    %v612 = vunpack.c.h.b16 %v97
    %v613 = vunpack.c.l.b16 %v98
    %v614 = vunpack.c.h.b16 %v98
    %v615 = vunpack.c.l.b16 %v99
    %v616 = vunpack.c.h.b16 %v99
    %v617 = vunpack.c.l.b16 %v100
    %v618 = vunpack.c.h.b16 %v100
    %v619 = vunpack.c.l.b16 %v101
    %v620 = vunpack.c.h.b16 %v101
    %v621 = vunpack.c.l.b16 %v102
    %v622 = vunpack.c.h.b16 %v102
    %v623 = vunpack.c.l.b16 %v103
    %v624 = vunpack.c.h.b16 %v103
    %v625 = vunpack.c.l.b16 %v104
    %v626 = vunpack.c.h.b16 %v104
    %v627 = vunpack.c.l.b16 %v105
    %v628 = vunpack.c.h.b16 %v105
    %v629 = vunpack.c.l.b16 %v106
    %v630 = vunpack.c.h.b16 %v106
    %v631 = vunpack.c.l.b16 %v107
    %v632 = vunpack.c.h.b16 %v107
    %v633 = vunpack.c.l.b16 %v108
    %v634 = vunpack.c.h.b16 %v108
    %v635 = vunpack.c.l.b16 %v109
    %v636 = vunpack.c.h.b16 %v109
    %v637 = vunpack.c.l.b16 %v110
    %v638 = vunpack.c.h.b16 %v110
    %v639 = vunpack.c.l.b16 %v111
    %v640 = vunpack.c.h.b16 %v111
    %v641 = vunpack.c.l.b16 %v112
    %v642 = vunpack.c.h.b16 %v112
    %v643 = vunpack.c.l.b16 %v113
    %v644 = vunpack.c.h.b16 %v113
    %v645 = vunpack.c.l.b16 %v114
    %v646 = vunpack.c.h.b16 %v114
    %v647 = vunpack.c.l.b16 %v115
    %v648 = vunpack.c.h.b16 %v115
    %v649 = vunpack.c.l.b16 %v116
    %v650 = vunpack.c.h.b16 %v116
    %v651 = vunpack.c.l.b16 %v117
    %v652 = vunpack.c.h.b16 %v117
    %v653 = vunpack.c.l.b16 %v118
    %v654 = vunpack.c.h.b16 %v118
    %v655 = vunpack.c.l.b16 %v119
    %v656 = vunpack.c.h.b16 %v119
    %v657 = vunpack.c.l.b16 %v120
    %v658 = vunpack.c.h.b16 %v120
    %v659 = vunpack.c.l.b16 %v121
    %v660 = vunpack.c.h.b16 %v121
    %v661 = vunpack.c.l.b16 %v122
    %v662 = vunpack.c.h.b16 %v122
    %v663 = vunpack.c.l.b16 %v123
    %v664 = vunpack.c.h.b16 %v123
    %v665 = vunpack.c.l.b16 %v124
    %v666 = vunpack.c.h.b16 %v124
    %v667 = vunpack.c.l.b16 %v125
    %v668 = vunpack.c.h.b16 %v125
    %v669 = vunpack.c.l.b16 %v126
    %v670 = vunpack.c.h.b16 %v126
    %v671 = vunpack.c.l.b16 %v127
    %v672 = vunpack.c.h.b16 %v127
    %v673 = vunpack.c.l.b16 %v128
    %v674 = vunpack.c.h.b16 %v128
    %v675 = vunpack.c.l.b16 %v129
    %v676 = vunpack.c.h.b16 %v129
    %v677 = vunpack.c.l.b16 %v130
    %v678 = vunpack.c.h.b16 %v130
    %v679 = vunpack.c.l.b16 %v131
    %v680 = vunpack.c.h.b16 %v131
    %v681 = vunpack.c.l.b16 %v132
    %v682 = vunpack.c.h.b16 %v132
    %v683 = vunpack.c.l.b16 %v133
    %v684 = vunpack.c.h.b16 %v133
    %v685 = vunpack.c.l.b16 %v134
    %v686 = vunpack.c.h.b16 %v134
    %v687 = vunpack.c.l.b16 %v135
    %v688 = vunpack.c.h.b16 %v135
    %v689 = vunpack.c.l.b16 %v136
    %v690 = vunpack.c.h.b16 %v136
    %v691 = vunpack.c.l.b16 %v137
    %v692 = vunpack.c.h.b16 %v137
    %v693 = vunpack.c.l.b16 %v138
    %v694 = vunpack.c.h.b16 %v138
    %v695 = vunpack.c.l.b16 %v139
    %v696 = vunpack.c.h.b16 %v139
    %v697 = vunpack.c.l.b16 %v140
    %v698 = vunpack.c.h.b16 %v140
    %v699 = vunpack.c.l.b16 %v141
    %v700 = vunpack.c.h.b16 %v141
    %v701 = vunpack.c.l.b16 %v142
    %v702 = vunpack.c.h.b16 %v142
    %v703 = vunpack.c.l.b16 %v143
    %v704 = vunpack.c.h.b16 %v143
    %v705 = vunpack.c.l.b16 %v144
    %v706 = vunpack.c.h.b16 %v144
    %v707 = vunpack.c.l.b16 %v145
    %v708 = vunpack.c.h.b16 %v145
    %v709 = vunpack.c.l.b16 %v146
    %v710 = vunpack.c.h.b16 %v146
    %v711 = vunpack.c.l.b16 %v147
    %v712 = vunpack.c.h.b16 %v147
    %v713 = vunpack.c.l.b16 %v148
    %v714 = vunpack.c.h.b16 %v148
    %v715 = vunpack.c.l.b16 %v149
    %v716 = vunpack.c.h.b16 %v149
    %v717 = vunpack.c.l.b16 %v150
    %v718 = vunpack.c.h.b16 %v150
    %v719 = vunpack.c.l.b16 %v151
    %v720 = vunpack.c.h.b16 %v151
    %v721 = vunpack.c.l.b16 %v152
    %v722 = vunpack.c.h.b16 %v152
    %v723 = vunpack.c.l.b16 %v153
    %v724 = vunpack.c.h.b16 %v153
    %v725 = vunpack.c.l.b16 %v154
    %v726 = vunpack.c.h.b16 %v154
    %v727 = vunpack.c.l.b16 %v155
    %v728 = vunpack.c.h.b16 %v155
    %v729 = vunpack.c.l.b16 %v156
    %v730 = vunpack.c.h.b16 %v156
    %v731 = vunpack.c.l.b16 %v157
    %v732 = vunpack.c.h.b16 %v157
    %v733 = vunpack.c.l.b16 %v158
    %v734 = vunpack.c.h.b16 %v158
    %v735 = vunpack.c.l.b16 %v159
    %v736 = vunpack.c.h.b16 %v159
    %v737 = vunpack.c.l.b16 %v160
    %v738 = vunpack.c.h.b16 %v160
    %v739 = vunpack.c.l.b16 %v161
    %v740 = vunpack.c.h.b16 %v161
    %v741 = vunpack.c.l.b16 %v162
    %v742 = vunpack.c.h.b16 %v162
    %v743 = vunpack.c.l.b16 %v163
    %v744 = vunpack.c.h.b16 %v163
    %v745 = vunpack.c.l.b16 %v164
    %v746 = vunpack.c.h.b16 %v164
    %v747 = vunpack.c.l.b16 %v165
    %v748 = vunpack.c.h.b16 %v165
    %v749 = vunpack.c.l.b16 %v166
    %v750 = vunpack.c.h.b16 %v166
    %v751 = vunpack.c.l.b16 %v167
    %v752 = vunpack.c.h.b16 %v167
    %v753 = vunpack.c.l.b16 %v168
    %v754 = vunpack.c.h.b16 %v168
    %v755 = vunpack.c.l.b16 %v169
    %v756 = vunpack.c.h.b16 %v169
    %v757 = vunpack.c.l.b16 %v170
    %v758 = vunpack.c.h.b16 %v170
    %v759 = vunpack.c.l.b16 %v171
    %v760 = vunpack.c.h.b16 %v171
    %v761 = vunpack.c.l.b16 %v172
    %v762 = vunpack.c.h.b16 %v172
    %v763 = vunpack.c.l.b16 %v173
    %v764 = vunpack.c.h.b16 %v173
    %v765 = vunpack.c.l.b16 %v174
    %v766 = vunpack.c.h.b16 %v174
    %v767 = vunpack.c.l.b16 %v175
    %v768 = vunpack.c.h.b16 %v175
    %v769 = vunpack.c.l.b16 %v176
    %v770 = vunpack.c.h.b16 %v176
    %v771 = vunpack.c.l.b16 %v177
    %v772 = vunpack.c.h.b16 %v177
    %v773 = vunpack.c.l.b16 %v178
    %v774 = vunpack.c.h.b16 %v178
    %v775 = vunpack.c.l.b16 %v179
    %v776 = vunpack.c.h.b16 %v179
    %v777 = vunpack.c.l.b16 %v180
    %v778 = vunpack.c.h.b16 %v180
    %v779 = vunpack.c.l.b16 %v181
    %v780 = vunpack.c.h.b16 %v181
    %v781 = vunpack.c.l.b16 %v182
    %v782 = vunpack.c.h.b16 %v182
    %v783 = vunpack.c.l.b16 %v183
    %v784 = vunpack.c.h.b16 %v183
    %v785 = vunpack.c.l.b16 %v184
    %v786 = vunpack.c.h.b16 %v184
    %v787 = vunpack.c.l.b16 %v185
    %v788 = vunpack.c.h.b16 %v185
    %v789 = vunpack.c.l.b16 %v186
    %v790 = vunpack.c.h.b16 %v186
    %v791 = vunpack.c.l.b16 %v187
    %v792 = vunpack.c.h.b16 %v187
    %v793 = vunpack.c.l.b16 %v188
    %v794 = vunpack.c.h.b16 %v188
    %v795 = vunpack.c.l.b16 %v189
    %v796 = vunpack.c.h.b16 %v189
    %v797 = vunpack.c.l.b16 %v190
    %v798 = vunpack.c.h.b16 %v190
    %v799 = vunpack.c.l.b16 %v191
    %v800 = vunpack.c.h.b16 %v191
    %v801 = vunpack.c.l.b16 %v192
    %v802 = vunpack.c.h.b16 %v192
    %v803 = vunpack.c.l.b16 %v193
    %v804 = vunpack.c.h.b16 %v193
    %v805 = vunpack.c.l.b16 %v194
    %v806 = vunpack.c.h.b16 %v194
    %v807 = vunpack.c.l.b16 %v195
    %v808 = vunpack.c.h.b16 %v195
    %v809 = vunpack.c.l.b16 %v196
    %v810 = vunpack.c.h.b16 %v196
    %v811 = vunpack.c.l.b16 %v197
    %v812 = vunpack.c.h.b16 %v197
    %v813 = vunpack.c.l.b16 %v198
    %v814 = vunpack.c.h.b16 %v198
    %v815 = vunpack.c.l.b16 %v199
    %v816 = vunpack.c.h.b16 %v199
    %v817 = vunpack.c.l.b16 %v200
    %v818 = vunpack.c.h.b16 %v200
    %v819 = vunpack.c.l.b16 %v201
    %v820 = vunpack.c.h.b16 %v201
    %v821 = vunpack.c.l.b16 %v202
    %v822 = vunpack.c.h.b16 %v202
    %v823 = vunpack.c.l.b16 %v203
    %v824 = vunpack.c.h.b16 %v203
    %v825 = vunpack.c.l.b16 %v204
    %v826 = vunpack.c.h.b16 %v204
    %v827 = vunpack.c.l.b16 %v205
    %v828 = vunpack.c.h.b16 %v205
    %v829 = vunpack.c.l.b16 %v206
    %v830 = vunpack.c.h.b16 %v206
    %v831 = vunpack.c.l.b16 %v207
    %v832 = vunpack.c.h.b16 %v207
    %v833 = vunpack.c.l.b16 %v208
    %v834 = vunpack.c.h.b16 %v208
    %v835 = vunpack.c.l.b16 %v209
    %v836 = vunpack.c.h.b16 %v209
    %v837 = vunpack.c.l.b16 %v210
    %v838 = vunpack.c.h.b16 %v210
    %v839 = vunpack.c.l.b16 %v211
    %v840 = vunpack.c.h.b16 %v211
    %v841 = vunpack.c.l.b16 %v212
    %v842 = vunpack.c.h.b16 %v212
    %v843 = vunpack.c.l.b16 %v213
    %v844 = vunpack.c.h.b16 %v213
    %v845 = vunpack.c.l.b16 %v214
    %v846 = vunpack.c.h.b16 %v214
    %v847 = vunpack.c.l.b16 %v215
    %v848 = vunpack.c.h.b16 %v215
    %v849 = vunpack.c.l.b16 %v216
    %v850 = vunpack.c.h.b16 %v216
    %v851 = vunpack.c.l.b16 %v217
    %v852 = vunpack.c.h.b16 %v217
    %v853 = vunpack.c.l.b16 %v218
    %v854 = vunpack.c.h.b16 %v218
    %v855 = vunpack.c.l.b16 %v219
    %v856 = vunpack.c.h.b16 %v219
    %v857 = vunpack.c.l.b16 %v220
    %v858 = vunpack.c.h.b16 %v220
    %v859 = vunpack.c.l.b16 %v221
    %v860 = vunpack.c.h.b16 %v221
    %v861 = vunpack.c.l.b16 %v222
    %v862 = vunpack.c.h.b16 %v222
    %v863 = vunpack.c.l.b16 %v223
    %v864 = vunpack.c.h.b16 %v223
    %v865 = vunpack.c.l.b16 %v224
    %v866 = vunpack.c.h.b16 %v224
    %v867 = vunpack.c.l.b16 %v225
    %v868 = vunpack.c.h.b16 %v225
    %v869 = vunpack.c.l.b16 %v226
    %v870 = vunpack.c.h.b16 %v226
    %v871 = vunpack.c.l.b16 %v227
    %v872 = vunpack.c.h.b16 %v227
    %v873 = vunpack.c.l.b16 %v228
    %v874 = vunpack.c.h.b16 %v228
    %v875 = vunpack.c.l.b16 %v229
    %v876 = vunpack.c.h.b16 %v229
    %v877 = vunpack.c.l.b16 %v230
    %v878 = vunpack.c.h.b16 %v230
    %v879 = vunpack.c.l.b16 %v231
    %v880 = vunpack.c.h.b16 %v231
    %v881 = vunpack.c.l.b16 %v232
    %v882 = vunpack.c.h.b16 %v232
    %v883 = vunpack.c.l.b16 %v233
    %v884 = vunpack.c.h.b16 %v233
    %v885 = vunpack.c.l.b16 %v234
    %v886 = vunpack.c.h.b16 %v234
    %v887 = vunpack.c.l.b16 %v235
    %v888 = vunpack.c.h.b16 %v235
    %v889 = vunpack.c.l.b16 %v236
    %v890 = vunpack.c.h.b16 %v236
    %v891 = vunpack.c.l.b16 %v237
    %v892 = vunpack.c.h.b16 %v237
    %v893 = vunpack.c.l.b16 %v238
    %v894 = vunpack.c.h.b16 %v238
    %v895 = vunpack.c.l.b16 %v239
    %v896 = vunpack.c.h.b16 %v239
    %v897 = vunpack.c.l.b16 %v240
    %v898 = vunpack.c.h.b16 %v240
    %v899 = vunpack.c.l.b16 %v241
    %v900 = vunpack.c.h.b16 %v241
    %v901 = vunpack.c.l.b16 %v242
    %v902 = vunpack.c.h.b16 %v242
    %v903 = vunpack.c.l.b16 %v243
    %v904 = vunpack.c.h.b16 %v243
    %v905 = vunpack.c.l.b16 %v244
    %v906 = vunpack.c.h.b16 %v244
    %v907 = vunpack.c.l.b16 %v245
    %v908 = vunpack.c.h.b16 %v245
    %v909 = vunpack.c.l.b16 %v246
    %v910 = vunpack.c.h.b16 %v246
    %v911 = vunpack.c.l.b16 %v247
    %v912 = vunpack.c.h.b16 %v247
    %v913 = vunpack.c.l.b16 %v248
    %v914 = vunpack.c.h.b16 %v248
    %v915 = vunpack.c.l.b16 %v249
    %v916 = vunpack.c.h.b16 %v249
    %v917 = vunpack.c.l.b16 %v250
    %v918 = vunpack.c.h.b16 %v250
    %v919 = vunpack.c.l.b16 %v251
    %v920 = vunpack.c.h.b16 %v251
    %v921 = vunpack.c.l.b16 %v252
    %v922 = vunpack.c.h.b16 %v252
    %v923 = vunpack.c.l.b16 %v253
    %v924 = vunpack.c.h.b16 %v253
    %v925 = vunpack.c.l.b16 %v254
    %v926 = vunpack.c.h.b16 %v254
    %v927 = vunpack.c.l.b16 %v255
    %v928 = vunpack.c.h.b16 %v255
    %v929 = vunpack.c.l.b16 %v256
    %v930 = vunpack.c.h.b16 %v256
    %v931 = vunpack.c.l.b16 %v257
    %v932 = vunpack.c.h.b16 %v257
    %v933 = vunpack.c.l.b16 %v258
    %v934 = vunpack.c.h.b16 %v258
    %v935 = vunpack.c.l.b16 %v259
    %v936 = vunpack.c.h.b16 %v259
    %v937 = vunpack.c.l.b16 %v260
    %v938 = vunpack.c.h.b16 %v260
    %v939 = vunpack.c.l.b16 %v261
    %v940 = vunpack.c.h.b16 %v261
    %v941 = vunpack.c.l.b16 %v262
    %v942 = vunpack.c.h.b16 %v262
    %v943 = vunpack.c.l.b16 %v263
    %v944 = vunpack.c.h.b16 %v263
    %v945 = vunpack.c.l.b16 %v264
    %v946 = vunpack.c.h.b16 %v264
    %v947 = vunpack.c.l.b16 %v265
    %v948 = vunpack.c.h.b16 %v265
    %v949 = vunpack.c.l.b16 %v266
    %v950 = vunpack.c.h.b16 %v266
    %v951 = vunpack.c.l.b16 %v267
    %v952 = vunpack.c.h.b16 %v267
    %v953 = vunpack.c.l.b16 %v268
    %v954 = vunpack.c.h.b16 %v268
    %v955 = vunpack.c.l.b16 %v269
    %v956 = vunpack.c.h.b16 %v269
    %v957 = vunpack.c.l.b16 %v270
    %v958 = vunpack.c.h.b16 %v270
    %v959 = vunpack.c.l.b16 %v271
    %v960 = vunpack.c.h.b16 %v271
    %v961 = vunpack.c.l.b16 %v272
    %v962 = vunpack.c.h.b16 %v272
    %v963 = vunpack.c.l.b16 %v273
    %v964 = vunpack.c.h.b16 %v273
    %v965 = vunpack.c.l.b16 %v274
    %v966 = vunpack.c.h.b16 %v274
    %v967 = vunpack.c.l.b16 %v275
    %v968 = vunpack.c.h.b16 %v275
    %v969 = vunpack.c.l.b16 %v276
    %v970 = vunpack.c.h.b16 %v276
    %v971 = vunpack.c.l.b16 %v277
    %v972 = vunpack.c.h.b16 %v277
    %v973 = vunpack.c.l.b16 %v278
    %v974 = vunpack.c.h.b16 %v278
    %v975 = vunpack.c.l.b16 %v279
    %v976 = vunpack.c.h.b16 %v279
    %v977 = vunpack.c.l.b16 %v280
    %v978 = vunpack.c.h.b16 %v280
    %v979 = vunpack.c.l.b16 %v281
    %v980 = vunpack.c.h.b16 %v281
    %v981 = vunpack.c.l.b16 %v282
    %v982 = vunpack.c.h.b16 %v282
    %v983 = vunpack.c.l.b16 %v283
    %v984 = vunpack.c.h.b16 %v283
    %v985 = vunpack.c.l.b16 %v284
    %v986 = vunpack.c.h.b16 %v284
    %v987 = vunpack.c.l.b16 %v285
    %v988 = vunpack.c.h.b16 %v285
    %v989 = vunpack.c.l.b16 %v286
    %v990 = vunpack.c.h.b16 %v286
    %v991 = vunpack.c.l.b16 %v287
    %v992 = vunpack.c.h.b16 %v287
    %v993 = vunpack.c.l.b16 %v288
    %v994 = vunpack.c.h.b16 %v288
    %v995 = vunpack.c.l.b16 %v289
    %v996 = vunpack.c.h.b16 %v289
    %v997 = vunpack.c.l.b16 %v290
    %v998 = vunpack.c.h.b16 %v290
    %v999 = vunpack.c.l.b16 %v291
    %v1000 = vunpack.c.h.b16 %v291
    %v1001 = vunpack.c.l.b16 %v292
    %v1002 = vunpack.c.h.b16 %v292
    %v1003 = vunpack.c.l.b16 %v293
    %v1004 = vunpack.c.h.b16 %v293
    %v1005 = vunpack.c.l.b16 %v294
    %v1006 = vunpack.c.h.b16 %v294
    %v1007 = vunpack.c.l.b16 %v295
    %v1008 = vunpack.c.h.b16 %v295
    %v1009 = vunpack.c.l.b16 %v296
    %v1010 = vunpack.c.h.b16 %v296
    %v1011 = vunpack.c.l.b16 %v297
    %v1012 = vunpack.c.h.b16 %v297
    %v1013 = vunpack.c.l.b16 %v298
    %v1014 = vunpack.c.h.b16 %v298
    %v1015 = vunpack.c.l.b16 %v299
    %v1016 = vunpack.c.h.b16 %v299
    %v1017 = vunpack.c.l.b16 %v300
    %v1018 = vunpack.c.h.b16 %v300
    %v1019 = vunpack.c.l.b16 %v301
    %v1020 = vunpack.c.h.b16 %v301
    %v1021 = vpack.c.b16 %v577, %v573
    %v1022 = vpack.c.b16 %v578, %v574
    %v1023 = vpack.c.b16 %v579, %v575
    %v1024 = vpack.c.b16 %v580, %v576
    %v1025 = vpack.c.b16 %v585, %v581
    %v1026 = vpack.c.b16 %v586, %v582
    %v1027 = vpack.c.b16 %v587, %v583
    %v1028 = vpack.c.b16 %v588, %v584
    %v1029 = vpack.c.b16 %v593, %v589
    %v1030 = vpack.c.b16 %v594, %v590
    %v1031 = vpack.c.b16 %v595, %v591
    %v1032 = vpack.c.b16 %v596, %v592
    %v1033 = vpack.c.b16 %v601, %v597
    %v1034 = vpack.c.b16 %v602, %v598
    %v1035 = vpack.c.b16 %v603, %v599
    %v1036 = vpack.c.b16 %v604, %v600
    %v1037 = vpack.c.b16 %v609, %v605
    %v1038 = vpack.c.b16 %v610, %v606
    %v1039 = vpack.c.b16 %v611, %v607
    %v1040 = vpack.c.b16 %v612, %v608
    %v1041 = vpack.c.b16 %v617, %v613
    %v1042 = vpack.c.b16 %v618, %v614
    %v1043 = vpack.c.b16 %v619, %v615
    %v1044 = vpack.c.b16 %v620, %v616
    %v1045 = vpack.c.b16 %v625, %v621
    %v1046 = vpack.c.b16 %v626, %v622
    %v1047 = vpack.c.b16 %v627, %v623
    %v1048 = vpack.c.b16 %v628, %v624
    %v1049 = vpack.c.b16 %v633, %v629
    %v1050 = vpack.c.b16 %v634, %v630
    %v1051 = vpack.c.b16 %v635, %v631
    %v1052 = vpack.c.b16 %v636, %v632
    %v1053 = vpack.c.b16 %v641, %v637
    %v1054 = vpack.c.b16 %v642, %v638
    %v1055 = vpack.c.b16 %v643, %v639
    %v1056 = vpack.c.b16 %v644, %v640
    %v1057 = vpack.c.b16 %v649, %v645
    %v1058 = vpack.c.b16 %v650, %v646
    %v1059 = vpack.c.b16 %v651, %v647
    %v1060 = vpack.c.b16 %v652, %v648
    %v1061 = vpack.c.b16 %v657, %v653
    %v1062 = vpack.c.b16 %v658, %v654
    %v1063 = vpack.c.b16 %v659, %v655
    %v1064 = vpack.c.b16 %v660, %v656
    %v1065 = vpack.c.b16 %v665, %v661
    %v1066 = vpack.c.b16 %v666, %v662
    %v1067 = vpack.c.b16 %v667, %v663
    %v1068 = vpack.c.b16 %v668, %v664
    %v1069 = vpack.c.b16 %v673, %v669
    %v1070 = vpack.c.b16 %v674, %v670
    %v1071 = vpack.c.b16 %v675, %v671
    %v1072 = vpack.c.b16 %v676, %v672
    %v1073 = vpack.c.b16 %v681, %v677
    %v1074 = vpack.c.b16 %v682, %v678
    %v1075 = vpack.c.b16 %v683, %v679
    %v1076 = vpack.c.b16 %v684, %v680
    %v1077 = vpack.c.b16 %v689, %v685
    %v1078 = vpack.c.b16 %v690, %v686
    %v1079 = vpack.c.b16 %v691, %v687
    %v1080 = vpack.c.b16 %v692, %v688
    %v1081 = vpack.c.b16 %v697, %v693
    %v1082 = vpack.c.b16 %v698, %v694
    %v1083 = vpack.c.b16 %v699, %v695
    %v1084 = vpack.c.b16 %v700, %v696
    %v1085 = vpack.c.b16 %v705, %v701
    %v1086 = vpack.c.b16 %v706, %v702
    %v1087 = vpack.c.b16 %v707, %v703
    %v1088 = vpack.c.b16 %v708, %v704
    %v1089 = vpack.c.b16 %v713, %v709
    %v1090 = vpack.c.b16 %v714, %v710
    %v1091 = vpack.c.b16 %v715, %v711
    %v1092 = vpack.c.b16 %v716, %v712
    %v1093 = vpack.c.b16 %v721, %v717
    %v1094 = vpack.c.b16 %v722, %v718
    %v1095 = vpack.c.b16 %v723, %v719
    %v1096 = vpack.c.b16 %v724, %v720
    %v1097 = vpack.c.b16 %v729, %v725
    %v1098 = vpack.c.b16 %v730, %v726
    %v1099 = vpack.c.b16 %v731, %v727
    %v1100 = vpack.c.b16 %v732, %v728
    %v1101 = vpack.c.b16 %v737, %v733
    %v1102 = vpack.c.b16 %v738, %v734
    %v1103 = vpack.c.b16 %v739, %v735
    %v1104 = vpack.c.b16 %v740, %v736
    %v1105 = vpack.c.b16 %v745, %v741
    %v1106 = vpack.c.b16 %v746, %v742
    %v1107 = vpack.c.b16 %v747, %v743
    %v1108 = vpack.c.b16 %v748, %v744
    %v1109 = vpack.c.b16 %v753, %v749
    %v1110 = vpack.c.b16 %v754, %v750
    %v1111 = vpack.c.b16 %v755, %v751
    %v1112 = vpack.c.b16 %v756, %v752
    %v1113 = vpack.c.b16 %v761, %v757
    %v1114 = vpack.c.b16 %v762, %v758
    %v1115 = vpack.c.b16 %v763, %v759
    %v1116 = vpack.c.b16 %v764, %v760
    %v1117 = vpack.c.b16 %v769, %v765
    %v1118 = vpack.c.b16 %v770, %v766
    %v1119 = vpack.c.b16 %v771, %v767
    %v1120 = vpack.c.b16 %v772, %v768
    %v1121 = vpack.c.b16 %v777, %v773
    %v1122 = vpack.c.b16 %v778, %v774
    %v1123 = vpack.c.b16 %v779, %v775
    %v1124 = vpack.c.b16 %v780, %v776
    %v1125 = vpack.c.b16 %v785, %v781
    %v1126 = vpack.c.b16 %v786, %v782
    %v1127 = vpack.c.b16 %v787, %v783
    %v1128 = vpack.c.b16 %v788, %v784
    %v1129 = vpack.c.b16 %v793, %v789
    %v1130 = vpack.c.b16 %v794, %v790
    %v1131 = vpack.c.b16 %v795, %v791
    %v1132 = vpack.c.b16 %v796, %v792
    %v1133 = vpack.c.b16 %v801, %v797
    %v1134 = vpack.c.b16 %v802, %v798
    %v1135 = vpack.c.b16 %v803, %v799
    %v1136 = vpack.c.b16 %v804, %v800
    %v1137 = vpack.c.b16 %v809, %v805
    %v1138 = vpack.c.b16 %v810, %v806
    %v1139 = vpack.c.b16 %v811, %v807
    %v1140 = vpack.c.b16 %v812, %v808
    %v1141 = vpack.c.b16 %v817, %v813
    %v1142 = vpack.c.b16 %v818, %v814
    %v1143 = vpack.c.b16 %v819, %v815
    %v1144 = vpack.c.b16 %v820, %v816
    %v1145 = vpack.c.b16 %v825, %v821
    %v1146 = vpack.c.b16 %v826, %v822
    %v1147 = vpack.c.b16 %v827, %v823
    %v1148 = vpack.c.b16 %v828, %v824
    %v1149 = vpack.c.b16 %v833, %v829
    %v1150 = vpack.c.b16 %v834, %v830
    %v1151 = vpack.c.b16 %v835, %v831
    %v1152 = vpack.c.b16 %v836, %v832
    %v1153 = vpack.c.b16 %v841, %v837
    %v1154 = vpack.c.b16 %v842, %v838
    %v1155 = vpack.c.b16 %v843, %v839
    %v1156 = vpack.c.b16 %v844, %v840
    %v1157 = vpack.c.b16 %v849, %v845
    %v1158 = vpack.c.b16 %v850, %v846
    %v1159 = vpack.c.b16 %v851, %v847
    %v1160 = vpack.c.b16 %v852, %v848
    %v1161 = vpack.c.b16 %v857, %v853
    %v1162 = vpack.c.b16 %v858, %v854
    %v1163 = vpack.c.b16 %v859, %v855
    %v1164 = vpack.c.b16 %v860, %v856
    %v1165 = vpack.c.b16 %v865, %v861
    %v1166 = vpack.c.b16 %v866, %v862
    %v1167 = vpack.c.b16 %v867, %v863
    %v1168 = vpack.c.b16 %v868, %v864
    %v1169 = vpack.c.b16 %v873, %v869
    %v1170 = vpack.c.b16 %v874, %v870
    %v1171 = vpack.c.b16 %v875, %v871
    %v1172 = vpack.c.b16 %v876, %v872
    %v1173 = vpack.c.b16 %v881, %v877
    %v1174 = vpack.c.b16 %v882, %v878
    %v1175 = vpack.c.b16 %v883, %v879
    %v1176 = vpack.c.b16 %v884, %v880
    %v1177 = vpack.c.b16 %v889, %v885
    %v1178 = vpack.c.b16 %v890, %v886
    %v1179 = vpack.c.b16 %v891, %v887
    %v1180 = vpack.c.b16 %v892, %v888
    %v1181 = vpack.c.b16 %v897, %v893
    %v1182 = vpack.c.b16 %v898, %v894
    %v1183 = vpack.c.b16 %v899, %v895
    %v1184 = vpack.c.b16 %v900, %v896
    %v1185 = vpack.c.b16 %v905, %v901
    %v1186 = vpack.c.b16 %v906, %v902
    %v1187 = vpack.c.b16 %v907, %v903
    %v1188 = vpack.c.b16 %v908, %v904
    %v1189 = vpack.c.b16 %v913, %v909
    %v1190 = vpack.c.b16 %v914, %v910
    %v1191 = vpack.c.b16 %v915, %v911
    %v1192 = vpack.c.b16 %v916, %v912
    %v1193 = vpack.c.b16 %v921, %v917
    %v1194 = vpack.c.b16 %v922, %v918
    %v1195 = vpack.c.b16 %v923, %v919
    %v1196 = vpack.c.b16 %v924, %v920
    %v1197 = vpack.c.b16 %v929, %v925
    %v1198 = vpack.c.b16 %v930, %v926
    %v1199 = vpack.c.b16 %v931, %v927
    %v1200 = vpack.c.b16 %v932, %v928
    %v1201 = vpack.c.b16 %v937, %v933
    %v1202 = vpack.c.b16 %v938, %v934
    %v1203 = vpack.c.b16 %v939, %v935
    %v1204 = vpack.c.b16 %v940, %v936
    %v1205 = vpack.c.b16 %v945, %v941
    %v1206 = vpack.c.b16 %v946, %v942
    %v1207 = vpack.c.b16 %v947, %v943
    %v1208 = vpack.c.b16 %v948, %v944
    %v1209 = vpack.c.b16 %v953, %v949
    %v1210 = vpack.c.b16 %v954, %v950
    %v1211 = vpack.c.b16 %v955, %v951
    %v1212 = vpack.c.b16 %v956, %v952
    %v1213 = vpack.c.b16 %v961, %v957
    %v1214 = vpack.c.b16 %v962, %v958
    %v1215 = vpack.c.b16 %v963, %v959
    %v1216 = vpack.c.b16 %v964, %v960
    %v1217 = vpack.c.b16 %v969, %v965
    %v1218 = vpack.c.b16 %v970, %v966
    %v1219 = vpack.c.b16 %v971, %v967
    %v1220 = vpack.c.b16 %v972, %v968
    %v1221 = vpack.c.b16 %v977, %v973
    %v1222 = vpack.c.b16 %v978, %v974
    %v1223 = vpack.c.b16 %v979, %v975
    %v1224 = vpack.c.b16 %v980, %v976
    %v1225 = vpack.c.b16 %v985, %v981
    %v1226 = vpack.c.b16 %v986, %v982
    %v1227 = vpack.c.b16 %v987, %v983
    %v1228 = vpack.c.b16 %v988, %v984
    %v1229 = vpack.c.b16 %v993, %v989
    %v1230 = vpack.c.b16 %v994, %v990
    %v1231 = vpack.c.b16 %v995, %v991
    %v1232 = vpack.c.b16 %v996, %v992
    %v1233 = vpack.c.b16 %v1001, %v997
    %v1234 = vpack.c.b16 %v1002, %v998
    %v1235 = vpack.c.b16 %v1003, %v999
    %v1236 = vpack.c.b16 %v1004, %v1000
    %v1237 = vpack.c.b16 %v1009, %v1005
    %v1238 = vpack.c.b16 %v1010, %v1006
    %v1239 = vpack.c.b16 %v1011, %v1007
    %v1240 = vpack.c.b16 %v1012, %v1008
    %v1241 = vpack.c.b16 %v1017, %v1013
    %v1242 = vpack.c.b16 %v1018, %v1014
    %v1243 = vpack.c.b16 %v1019, %v1015
    %v1244 = vpack.c.b16 %v1020, %v1016
    %1469 = vmatprep.subr.bf16.mxu0 %v1022
    %1470 = vmatpush1.bf16.msra.mxu0 %v1021
    %1471 = vmatprep.subr.bf16.mxu0 %v1026
    %1472 = vmatpush1.bf16.msra.mxu0 %v1025
    %1473 = vmatprep.subr.bf16.mxu0 %v1030
    %1474 = vmatpush1.bf16.msra.mxu0 %v1029
    %1475 = vmatprep.subr.bf16.mxu0 %v1034
    %1476 = vmatpush1.bf16.msra.mxu0 %v1033
    %1477 = vmatprep.subr.bf16.mxu0 %v1038
    %1478 = vmatpush1.bf16.msra.mxu0 %v1037
    %1479 = vmatprep.subr.bf16.mxu0 %v1042
    %1480 = vmatpush1.bf16.msra.mxu0 %v1041
    %1481 = vmatprep.subr.bf16.mxu0 %v1046
    %1482 = vmatpush1.bf16.msra.mxu0 %v1045
    %1483 = vmatprep.subr.bf16.mxu0 %v1050
    %1484 = vmatpush1.bf16.msra.mxu0 %v1049
    %1485 = vmatprep.subr.bf16.mxu0 %v1054
    %1486 = vmatpush1.bf16.msra.mxu0 %v1053
    %1487 = vmatprep.subr.bf16.mxu0 %v1058
    %1488 = vmatpush1.bf16.msra.mxu0 %v1057
    %1489 = vmatprep.subr.bf16.mxu0 %v1062
    %1490 = vmatpush1.bf16.msra.mxu0 %v1061
    %1491 = vmatprep.subr.bf16.mxu0 %v1066
    %1492 = vmatpush1.bf16.msra.mxu0 %v1065
    %1493 = vmatprep.subr.bf16.mxu0 %v1070
    %1494 = vmatpush1.bf16.msra.mxu0 %v1069
    %1495 = vmatprep.subr.bf16.mxu0 %v1074
    %1496 = vmatpush1.bf16.msra.mxu0 %v1073
    %1497 = vmatprep.subr.bf16.mxu0 %v1078
    %1498 = vmatpush1.bf16.msra.mxu0 %v1077
    %1499 = vmatprep.subr.bf16.mxu0 %v1082
    %1500 = vmatpush1.bf16.msra.mxu0 %v1081
    %1501 = vmatprep.mubr.bf16.mxu0 %v336
    %1502 = vmatmul.mubr.bf16.gmra.mrb[0].mxu0 %v335
    %v1503 = vpop.f32.mrb[0].mxu0
    %v1504 = vadd.f32 %v307, %v1503
    %v1505 = vpop.f32.mrb[0].mxu0
    %v1506 = vadd.f32 %v311, %v1505
    %v1507 = vpop.f32.mrb[0].mxu0
    %v1508 = vpop.f32.mrb[0].mxu0
    %1509 = vdwg.mxu0
    %1510 = vmatprep.subr.bf16.mxu0 %v1086
    %1511 = vmatpush1.bf16.msra.mxu0 %v1085
    %1512 = vmatprep.subr.bf16.mxu0 %v1090
    %1513 = vmatpush1.bf16.msra.mxu0 %v1089
    %1514 = vmatprep.subr.bf16.mxu0 %v1094
    %1515 = vmatpush1.bf16.msra.mxu0 %v1093
    %1516 = vmatprep.subr.bf16.mxu0 %v1098
    %1517 = vmatpush1.bf16.msra.mxu0 %v1097
    %1518 = vmatprep.subr.bf16.mxu0 %v1102
    %1519 = vmatpush1.bf16.msra.mxu0 %v1101
    %1520 = vmatprep.subr.bf16.mxu0 %v1106
    %1521 = vmatpush1.bf16.msra.mxu0 %v1105
    %1522 = vmatprep.subr.bf16.mxu0 %v1110
    %1523 = vmatpush1.bf16.msra.mxu0 %v1109
    %1524 = vmatprep.subr.bf16.mxu0 %v1114
    %1525 = vmatpush1.bf16.msra.mxu0 %v1113
    %1526 = vmatprep.subr.bf16.mxu0 %v1118
    %1527 = vmatpush1.bf16.msra.mxu0 %v1117
    %1528 = vmatprep.subr.bf16.mxu0 %v1122
    %1529 = vmatpush1.bf16.msra.mxu0 %v1121
    %1530 = vmatprep.subr.bf16.mxu0 %v1126
    %1531 = vmatpush1.bf16.msra.mxu0 %v1125
    %1532 = vmatprep.subr.bf16.mxu0 %v1130
    %1533 = vmatpush1.bf16.msra.mxu0 %v1129
    %1534 = vmatprep.subr.bf16.mxu0 %v1134
    %1535 = vmatpush1.bf16.msra.mxu0 %v1133
    %1536 = vmatprep.subr.bf16.mxu0 %v1138
    %1537 = vmatpush1.bf16.msra.mxu0 %v1137
    %1538 = vmatprep.subr.bf16.mxu0 %v1142
    %1539 = vmatpush1.bf16.msra.mxu0 %v1141
    %1540 = vmatprep.subr.bf16.mxu0 %v1146
    %1541 = vmatpush1.bf16.msra.mxu0 %v1145
    %1542 = vmatprep.mubr.bf16.mxu0 %v338
    %1543 = vmatmul.mubr.bf16.gmra.mrb[0].mxu0 %v337
    %v1544 = vpop.f32.mrb[0].mxu0
    %v1545 = vadd.f32 %v1504, %v1544
    %v1546 = vpop.f32.mrb[0].mxu0
    %v1547 = vadd.f32 %v1506, %v1546
    %v1548 = vpop.f32.mrb[0].mxu0
    %v1549 = vpop.f32.mrb[0].mxu0
    %1550 = vdwg.mxu0
    %1551 = vmatprep.subr.bf16.mxu0 %v1150
    %1552 = vmatpush1.bf16.msra.mxu0 %v1149
    %1553 = vmatprep.subr.bf16.mxu0 %v1154
    %1554 = vmatpush1.bf16.msra.mxu0 %v1153
    %1555 = vmatprep.subr.bf16.mxu0 %v1158
    %1556 = vmatpush1.bf16.msra.mxu0 %v1157
    %1557 = vmatprep.subr.bf16.mxu0 %v1162
    %1558 = vmatpush1.bf16.msra.mxu0 %v1161
    %1559 = vmatprep.subr.bf16.mxu0 %v1166
    %1560 = vmatpush1.bf16.msra.mxu0 %v1165
    %1561 = vmatprep.subr.bf16.mxu0 %v1170
    %1562 = vmatpush1.bf16.msra.mxu0 %v1169
    %1563 = vmatprep.subr.bf16.mxu0 %v1174
    %1564 = vmatpush1.bf16.msra.mxu0 %v1173
    %1565 = vmatprep.subr.bf16.mxu0 %v1178
    %1566 = vmatpush1.bf16.msra.mxu0 %v1177
    %1567 = vmatprep.subr.bf16.mxu0 %v1182
    %1568 = vmatpush1.bf16.msra.mxu0 %v1181
    %1569 = vmatprep.subr.bf16.mxu0 %v1186
    %1570 = vmatpush1.bf16.msra.mxu0 %v1185
    %1571 = vmatprep.subr.bf16.mxu0 %v1190
    %1572 = vmatpush1.bf16.msra.mxu0 %v1189
    %1573 = vmatprep.subr.bf16.mxu0 %v1194
    %1574 = vmatpush1.bf16.msra.mxu0 %v1193
    %1575 = vmatprep.subr.bf16.mxu0 %v1198
    %1576 = vmatpush1.bf16.msra.mxu0 %v1197
    %1577 = vmatprep.subr.bf16.mxu0 %v1202
    %1578 = vmatpush1.bf16.msra.mxu0 %v1201
    %1579 = vmatprep.subr.bf16.mxu0 %v1206
    %1580 = vmatpush1.bf16.msra.mxu0 %v1205
    %1581 = vmatprep.subr.bf16.mxu0 %v1210
    %1582 = vmatpush1.bf16.msra.mxu0 %v1209
    %1583 = vmatprep.mubr.bf16.mxu0 %v340
    %1584 = vmatmul.mubr.bf16.gmra.mrb[0].mxu0 %v339
    %v1585 = vpop.f32.mrb[0].mxu0
    %v1586 = vadd.f32 %v1545, %v1585
    %v1587 = vpop.f32.mrb[0].mxu0
    %v1588 = vadd.f32 %v1547, %v1587
    %v1589 = vpop.f32.mrb[0].mxu0
    %v1590 = vpop.f32.mrb[0].mxu0
    %1591 = vdwg.mxu0
    %1592 = vmatprep.subr.bf16.mxu0 %v1214
    %1593 = vmatpush1.bf16.msra.mxu0 %v1213
    %1594 = vmatprep.subr.bf16.mxu0 %v1218
    %1595 = vmatpush1.bf16.msra.mxu0 %v1217
    %1596 = vmatprep.subr.bf16.mxu0 %v1222
    %1597 = vmatpush1.bf16.msra.mxu0 %v1221
    %1598 = vmatprep.subr.bf16.mxu0 %v1226
    %1599 = vmatpush1.bf16.msra.mxu0 %v1225
    %1600 = vmatprep.subr.bf16.mxu0 %v1230
    %1601 = vmatpush1.bf16.msra.mxu0 %v1229
    %1602 = vmatprep.subr.bf16.mxu0 %v1234
    %1603 = vmatpush1.bf16.msra.mxu0 %v1233
    %1604 = vmatprep.subr.bf16.mxu0 %v1238
    %1605 = vmatpush1.bf16.msra.mxu0 %v1237
    %1606 = vmatprep.subr.bf16.mxu0 %v1242
    %1607 = vmatpush1.bf16.msra.mxu0 %v1241
    %1608 = vmatprep.subr.bf16.mxu0 0
    %1609 = vmatpush1.bf16.msra.mxu0 0
    %1610 = vmatprep.subr.bf16.mxu0 0
    %1611 = vmatpush1.bf16.msra.mxu0 0
    %1612 = vmatprep.subr.bf16.mxu0 0
    %1613 = vmatpush1.bf16.msra.mxu0 0
    %1614 = vmatprep.subr.bf16.mxu0 0
    %1615 = vmatpush1.bf16.msra.mxu0 0
    %1616 = vmatprep.subr.bf16.mxu0 0
    %1617 = vmatpush1.bf16.msra.mxu0 0
    %1618 = vmatprep.subr.bf16.mxu0 0
    %1619 = vmatpush1.bf16.msra.mxu0 0
    %1620 = vmatprep.subr.bf16.mxu0 0
    %1621 = vmatpush1.bf16.msra.mxu0 0
    %1622 = vmatprep.subr.bf16.mxu0 0
    %1623 = vmatpush1.bf16.msra.mxu0 0
    %1624 = vmatprep.mubr.bf16.mxu0 0
    %1625 = vmatmul.mubr.bf16.gmra.mrb[0].mxu0 %v341
    %v1626 = vpop.f32.mrb[0].mxu0
    %v1627 = vadd.f32 %v1586, %v1626
    %v1628 = vpop.f32.mrb[0].mxu0
    %v1629 = vadd.f32 %v1588, %v1628
    %v1630 = vpop.f32.mrb[0].mxu0
    %v1631 = vpop.f32.mrb[0].mxu0
    %1632 = vdwg.mxu0
    %1633 = vmatprep.subr.bf16.mxu0 %v1024
    %1634 = vmatpush1.bf16.msra.mxu0 %v1023
    %1635 = vmatprep.subr.bf16.mxu0 %v1028
    %1636 = vmatpush1.bf16.msra.mxu0 %v1027
    %1637 = vmatprep.subr.bf16.mxu0 %v1032
    %1638 = vmatpush1.bf16.msra.mxu0 %v1031
    %1639 = vmatprep.subr.bf16.mxu0 %v1036
    %1640 = vmatpush1.bf16.msra.mxu0 %v1035
    %1641 = vmatprep.subr.bf16.mxu0 %v1040
    %1642 = vmatpush1.bf16.msra.mxu0 %v1039
    %1643 = vmatprep.subr.bf16.mxu0 %v1044
    %1644 = vmatpush1.bf16.msra.mxu0 %v1043
    %1645 = vmatprep.subr.bf16.mxu0 %v1048
    %1646 = vmatpush1.bf16.msra.mxu0 %v1047
    %1647 = vmatprep.subr.bf16.mxu0 %v1052
    %1648 = vmatpush1.bf16.msra.mxu0 %v1051
    %1649 = vmatprep.subr.bf16.mxu0 %v1056
    %1650 = vmatpush1.bf16.msra.mxu0 %v1055
    %1651 = vmatprep.subr.bf16.mxu0 %v1060
    %1652 = vmatpush1.bf16.msra.mxu0 %v1059
    %1653 = vmatprep.subr.bf16.mxu0 %v1064
    %1654 = vmatpush1.bf16.msra.mxu0 %v1063
    %1655 = vmatprep.subr.bf16.mxu0 %v1068
    %1656 = vmatpush1.bf16.msra.mxu0 %v1067
    %1657 = vmatprep.subr.bf16.mxu0 %v1072
    %1658 = vmatpush1.bf16.msra.mxu0 %v1071
    %1659 = vmatprep.subr.bf16.mxu0 %v1076
    %1660 = vmatpush1.bf16.msra.mxu0 %v1075
    %1661 = vmatprep.subr.bf16.mxu0 %v1080
    %1662 = vmatpush1.bf16.msra.mxu0 %v1079
    %1663 = vmatprep.subr.bf16.mxu0 %v1084
    %1664 = vmatpush1.bf16.msra.mxu0 %v1083
    %1665 = vmatprep.mubr.bf16.mxu0 %v336
    %1666 = vmatmul.mubr.bf16.gmra.mrb[0].mxu0 %v335
    %v1667 = vpop.f32.mrb[0].mxu0
    %v1668 = vadd.f32 %v315, %v1667
    %v1669 = vpop.f32.mrb[0].mxu0
    %v1670 = vadd.f32 %v319, %v1669
    %v1671 = vpop.f32.mrb[0].mxu0
    %v1672 = vpop.f32.mrb[0].mxu0
    %1673 = vdwg.mxu0
    %1674 = vmatprep.subr.bf16.mxu0 %v1088
    %1675 = vmatpush1.bf16.msra.mxu0 %v1087
    %1676 = vmatprep.subr.bf16.mxu0 %v1092
    %1677 = vmatpush1.bf16.msra.mxu0 %v1091
    %1678 = vmatprep.subr.bf16.mxu0 %v1096
    %1679 = vmatpush1.bf16.msra.mxu0 %v1095
    %1680 = vmatprep.subr.bf16.mxu0 %v1100
    %1681 = vmatpush1.bf16.msra.mxu0 %v1099
    %1682 = vmatprep.subr.bf16.mxu0 %v1104
    %1683 = vmatpush1.bf16.msra.mxu0 %v1103
    %1684 = vmatprep.subr.bf16.mxu0 %v1108
    %1685 = vmatpush1.bf16.msra.mxu0 %v1107
    %1686 = vmatprep.subr.bf16.mxu0 %v1112
    %1687 = vmatpush1.bf16.msra.mxu0 %v1111
    %1688 = vmatprep.subr.bf16.mxu0 %v1116
    %1689 = vmatpush1.bf16.msra.mxu0 %v1115
    %1690 = vmatprep.subr.bf16.mxu0 %v1120
    %1691 = vmatpush1.bf16.msra.mxu0 %v1119
    %1692 = vmatprep.subr.bf16.mxu0 %v1124
    %1693 = vmatpush1.bf16.msra.mxu0 %v1123
    %1694 = vmatprep.subr.bf16.mxu0 %v1128
    %1695 = vmatpush1.bf16.msra.mxu0 %v1127
    %1696 = vmatprep.subr.bf16.mxu0 %v1132
    %1697 = vmatpush1.bf16.msra.mxu0 %v1131
    %1698 = vmatprep.subr.bf16.mxu0 %v1136
    %1699 = vmatpush1.bf16.msra.mxu0 %v1135
    %1700 = vmatprep.subr.bf16.mxu0 %v1140
    %1701 = vmatpush1.bf16.msra.mxu0 %v1139
    %1702 = vmatprep.subr.bf16.mxu0 %v1144
    %1703 = vmatpush1.bf16.msra.mxu0 %v1143
    %1704 = vmatprep.subr.bf16.mxu0 %v1148
    %1705 = vmatpush1.bf16.msra.mxu0 %v1147
    %1706 = vmatprep.mubr.bf16.mxu0 %v338
    %1707 = vmatmul.mubr.bf16.gmra.mrb[0].mxu0 %v337
    %v1708 = vpop.f32.mrb[0].mxu0
    %v1709 = vadd.f32 %v1668, %v1708
    %v1710 = vpop.f32.mrb[0].mxu0
    %v1711 = vadd.f32 %v1670, %v1710
    %v1712 = vpop.f32.mrb[0].mxu0
    %v1713 = vpop.f32.mrb[0].mxu0
    %1714 = vdwg.mxu0
    %1715 = vmatprep.subr.bf16.mxu0 %v1152
    %1716 = vmatpush1.bf16.msra.mxu0 %v1151
    %1717 = vmatprep.subr.bf16.mxu0 %v1156
    %1718 = vmatpush1.bf16.msra.mxu0 %v1155
    %1719 = vmatprep.subr.bf16.mxu0 %v1160
    %1720 = vmatpush1.bf16.msra.mxu0 %v1159
    %1721 = vmatprep.subr.bf16.mxu0 %v1164
    %1722 = vmatpush1.bf16.msra.mxu0 %v1163
    %1723 = vmatprep.subr.bf16.mxu0 %v1168
    %1724 = vmatpush1.bf16.msra.mxu0 %v1167
    %1725 = vmatprep.subr.bf16.mxu0 %v1172
    %1726 = vmatpush1.bf16.msra.mxu0 %v1171
    %1727 = vmatprep.subr.bf16.mxu0 %v1176
    %1728 = vmatpush1.bf16.msra.mxu0 %v1175
    %1729 = vmatprep.subr.bf16.mxu0 %v1180
    %1730 = vmatpush1.bf16.msra.mxu0 %v1179
    %1731 = vmatprep.subr.bf16.mxu0 %v1184
    %1732 = vmatpush1.bf16.msra.mxu0 %v1183
    %1733 = vmatprep.subr.bf16.mxu0 %v1188
    %1734 = vmatpush1.bf16.msra.mxu0 %v1187
    %1735 = vmatprep.subr.bf16.mxu0 %v1192
    %1736 = vmatpush1.bf16.msra.mxu0 %v1191
    %1737 = vmatprep.subr.bf16.mxu0 %v1196
    %1738 = vmatpush1.bf16.msra.mxu0 %v1195
    %1739 = vmatprep.subr.bf16.mxu0 %v1200
    %1740 = vmatpush1.bf16.msra.mxu0 %v1199
    %1741 = vmatprep.subr.bf16.mxu0 %v1204
    %1742 = vmatpush1.bf16.msra.mxu0 %v1203
    %1743 = vmatprep.subr.bf16.mxu0 %v1208
    %1744 = vmatpush1.bf16.msra.mxu0 %v1207
    %1745 = vmatprep.subr.bf16.mxu0 %v1212
    %1746 = vmatpush1.bf16.msra.mxu0 %v1211
    %1747 = vmatprep.mubr.bf16.mxu0 %v340
    %1748 = vmatmul.mubr.bf16.gmra.mrb[0].mxu0 %v339
    %v1749 = vpop.f32.mrb[0].mxu0
    %v1750 = vadd.f32 %v1709, %v1749
    %v1751 = vpop.f32.mrb[0].mxu0
    %v1752 = vadd.f32 %v1711, %v1751
    %v1753 = vpop.f32.mrb[0].mxu0
    %v1754 = vpop.f32.mrb[0].mxu0
    %1755 = vdwg.mxu0
    %1756 = vmatprep.subr.bf16.mxu0 %v1216
    %1757 = vmatpush1.bf16.msra.mxu0 %v1215
    %1758 = vmatprep.subr.bf16.mxu0 %v1220
    %1759 = vmatpush1.bf16.msra.mxu0 %v1219
    %1760 = vmatprep.subr.bf16.mxu0 %v1224
    %1761 = vmatpush1.bf16.msra.mxu0 %v1223
    %1762 = vmatprep.subr.bf16.mxu0 %v1228
    %1763 = vmatpush1.bf16.msra.mxu0 %v1227
    %1764 = vmatprep.subr.bf16.mxu0 %v1232
    %1765 = vmatpush1.bf16.msra.mxu0 %v1231
    %1766 = vmatprep.subr.bf16.mxu0 %v1236
    %1767 = vmatpush1.bf16.msra.mxu0 %v1235
    %1768 = vmatprep.subr.bf16.mxu0 %v1240
    %1769 = vmatpush1.bf16.msra.mxu0 %v1239
    %1770 = vmatprep.subr.bf16.mxu0 %v1244
    %1771 = vmatpush1.bf16.msra.mxu0 %v1243
    %1772 = vmatprep.subr.bf16.mxu0 0
    %1773 = vmatpush1.bf16.msra.mxu0 0
    %1774 = vmatprep.subr.bf16.mxu0 0
    %1775 = vmatpush1.bf16.msra.mxu0 0
    %1776 = vmatprep.subr.bf16.mxu0 0
    %1777 = vmatpush1.bf16.msra.mxu0 0
    %1778 = vmatprep.subr.bf16.mxu0 0
    %1779 = vmatpush1.bf16.msra.mxu0 0
    %1780 = vmatprep.subr.bf16.mxu0 0
    %1781 = vmatpush1.bf16.msra.mxu0 0
    %1782 = vmatprep.subr.bf16.mxu0 0
    %1783 = vmatpush1.bf16.msra.mxu0 0
    %1784 = vmatprep.subr.bf16.mxu0 0
    %1785 = vmatpush1.bf16.msra.mxu0 0
    %1786 = vmatprep.subr.bf16.mxu0 0
    %1787 = vmatpush1.bf16.msra.mxu0 0
    %1788 = vmatprep.mubr.bf16.mxu0 0
    %1789 = vmatmul.mubr.bf16.gmra.mrb[0].mxu0 %v341
    %v1790 = vpop.f32.mrb[0].mxu0
    %v1791 = vadd.f32 %v1750, %v1790
    %v1792 = vpop.f32.mrb[0].mxu0
    %v1793 = vadd.f32 %v1752, %v1792
    %v1794 = vpop.f32.mrb[0].mxu0
    %v1795 = vpop.f32.mrb[0].mxu0
    %1796 = vdwg.mxu0
    %v1797 = vmax.f32 %v1627, 0.0
    %v1798 = vmax.f32 %v1629, 0.0
    %v1799 = vmax.f32 %v1791, 0.0
    %v1800 = vmax.f32 %v1793, 0.0
    %v1801 = vpack.c.bf16 %v1797, %v1797
    %v1802 = vpack.c.bf16 %v1798, %v1798
    %v1803 = vpack.c.bf16 %v1799, %v1799
    %v1804 = vpack.c.bf16 %v1800, %v1800
    %v1805 = vld [vmem:[#allocation4] sm:$0xff]
    %v1806 = vld [vmem:[#allocation4 + $0x8] sm:$0xff]
    %v1807 = vld [vmem:[#allocation4 + $0x10] sm:$0xff]
    %v1808 = vld [vmem:[#allocation4 + $0x18] sm:$0xff]
    %v1809 = vld [vmem:[#allocation4 + $0x20] sm:$0xff]
    %v1810 = vld [vmem:[#allocation4 + $0x28] sm:$0xff]
    %v1811 = vld [vmem:[#allocation4 + $0x30] sm:$0xff]
    %v1812 = vld [vmem:[#allocation4 + $0x38] sm:$0xff]
    %v1813 = vld [vmem:[#allocation4 + $0x40] sm:$0xff]
    %v1814 = vld [vmem:[#allocation4 + $0x48] sm:$0xff]
    %v1815 = vld [vmem:[#allocation4 + $0x50] sm:$0xff]
    %v1816 = vld [vmem:[#allocation4 + $0x58] sm:$0xff]
    %v1817 = vld [vmem:[#allocation4 + $0x60] sm:$0xff]
    %v1818 = vld [vmem:[#allocation4 + $0x68] sm:$0xff]
    %v1819 = vld [vmem:[#allocation4 + $0x70] sm:$0xff]
    %v1820 = vld [vmem:[#allocation4 + $0x78] sm:$0xff]
    %v1821 = vld [vmem:[#allocation4 + $0x80] sm:$0xff]
    %v1822 = vld [vmem:[#allocation4 + $0x88] sm:$0xff]
    %v1823 = vld [vmem:[#allocation4 + $0x90] sm:$0xff]
    %v1824 = vld [vmem:[#allocation4 + $0x98] sm:$0xff]
    %v1825 = vld [vmem:[#allocation4 + $0xa0] sm:$0xff]
    %v1826 = vld [vmem:[#allocation4 + $0xa8] sm:$0xff]
    %v1827 = vld [vmem:[#allocation4 + $0xb0] sm:$0xff]
    %v1828 = vld [vmem:[#allocation4 + $0xb8] sm:$0xff]
    %v1829 = vld [vmem:[#allocation4 + $0xc0] sm:$0xff]
    %v1830 = vld [vmem:[#allocation4 + $0xc8] sm:$0xff]
    %v1831 = vld [vmem:[#allocation4 + $0xd0] sm:$0xff]
    %v1832 = vld [vmem:[#allocation4 + $0xd8] sm:$0xff]
    %v1833 = vld [vmem:[#allocation4 + $0xe0] sm:$0xff]
    %v1834 = vld [vmem:[#allocation4 + $0xe8] sm:$0xff]
    %v1835 = vld [vmem:[#allocation4 + $0xf0] sm:$0xff]
    %v1836 = vld [vmem:[#allocation4 + $0xf8] sm:$0xff]
    %v1837 = vld [vmem:[#allocation4 + $0x100] sm:$0xff]
    %v1838 = vld [vmem:[#allocation4 + $0x108] sm:$0xff]
    %v1839 = vld [vmem:[#allocation4 + $0x110] sm:$0xff]
    %v1840 = vld [vmem:[#allocation4 + $0x118] sm:$0xff]
    %v1841 = vld [vmem:[#allocation4 + $0x120] sm:$0xff]
    %v1842 = vld [vmem:[#allocation4 + $0x128] sm:$0xff]
    %v1843 = vld [vmem:[#allocation4 + $0x130] sm:$0xff]
    %v1844 = vld [vmem:[#allocation4 + $0x138] sm:$0xff]
    %v1845 = vld [vmem:[#allocation4 + $0x140] sm:$0xff]
    %v1846 = vld [vmem:[#allocation4 + $0x148] sm:$0xff]
    %v1847 = vld [vmem:[#allocation4 + $0x150] sm:$0xff]
    %v1848 = vld [vmem:[#allocation4 + $0x158] sm:$0xff]
    %v1849 = vld [vmem:[#allocation4 + $0x160] sm:$0xff]
    %v1850 = vld [vmem:[#allocation4 + $0x168] sm:$0xff]
    %v1851 = vld [vmem:[#allocation4 + $0x170] sm:$0xff]
    %v1852 = vld [vmem:[#allocation4 + $0x178] sm:$0xff]
    %v1853 = vld [vmem:[#allocation4 + $0x180] sm:$0xff]
    %v1854 = vld [vmem:[#allocation4 + $0x188] sm:$0xff]
    %v1855 = vld [vmem:[#allocation4 + $0x190] sm:$0xff]
    %v1856 = vld [vmem:[#allocation4 + $0x198] sm:$0xff]
    %v1857 = vld [vmem:[#allocation4 + $0x1a0] sm:$0xff]
    %v1858 = vld [vmem:[#allocation4 + $0x1a8] sm:$0xff]
    %v1859 = vld [vmem:[#allocation4 + $0x1b0] sm:$0xff]
    %v1860 = vld [vmem:[#allocation4 + $0x1b8] sm:$0xff]
    %v1861 = vld [vmem:[#allocation4 + $0x1c0] sm:$0xff]
    %v1862 = vld [vmem:[#allocation4 + $0x1c8] sm:$0xff]
    %v1863 = vld [vmem:[#allocation4 + $0x1d0] sm:$0xff]
    %v1864 = vld [vmem:[#allocation4 + $0x1d8] sm:$0xff]
    %v1865 = vld [vmem:[#allocation4 + $0x1e0] sm:$0xff]
    %v1866 = vld [vmem:[#allocation4 + $0x1e8] sm:$0xff]
    %v1867 = vld [vmem:[#allocation4 + $0x1f0] sm:$0xff]
    %v1868 = vld [vmem:[#allocation4 + $0x1f8] sm:$0xff]
    %v1869 = vld [vmem:[%s4] sm:$0x3]
    %v1871 = vlaneseq
    %v1872 = vshrl.u32 %v1871, 7
    %v1873 = vsub.s32 0, %v1872
    %v1874 = vrot.slane %v1869, %v1873
    %v1875 = vlaneseq
    %v1876 = vshrl.u32 %v1875, 7
    %v1877 = vsub.s32 1, %v1876
    %v1878 = vrot.slane %v1869, %v1877
    %v1945 = vunpack.c.l.b16 %v1805
    %v1946 = vunpack.c.h.b16 %v1805
    %v1947 = vunpack.c.l.b16 %v1806
    %v1948 = vunpack.c.h.b16 %v1806
    %v1949 = vunpack.c.l.b16 %v1807
    %v1950 = vunpack.c.h.b16 %v1807
    %v1951 = vunpack.c.l.b16 %v1808
    %v1952 = vunpack.c.h.b16 %v1808
    %v1953 = vunpack.c.l.b16 %v1809
    %v1954 = vunpack.c.h.b16 %v1809
    %v1955 = vunpack.c.l.b16 %v1810
    %v1956 = vunpack.c.h.b16 %v1810
    %v1957 = vunpack.c.l.b16 %v1811
    %v1958 = vunpack.c.h.b16 %v1811
    %v1959 = vunpack.c.l.b16 %v1812
    %v1960 = vunpack.c.h.b16 %v1812
    %v1961 = vunpack.c.l.b16 %v1813
    %v1962 = vunpack.c.h.b16 %v1813
    %v1963 = vunpack.c.l.b16 %v1814
    %v1964 = vunpack.c.h.b16 %v1814
    %v1965 = vunpack.c.l.b16 %v1815
    %v1966 = vunpack.c.h.b16 %v1815
    %v1967 = vunpack.c.l.b16 %v1816
    %v1968 = vunpack.c.h.b16 %v1816
    %v1969 = vunpack.c.l.b16 %v1817
    %v1970 = vunpack.c.h.b16 %v1817
    %v1971 = vunpack.c.l.b16 %v1818
    %v1972 = vunpack.c.h.b16 %v1818
    %v1973 = vunpack.c.l.b16 %v1819
    %v1974 = vunpack.c.h.b16 %v1819
    %v1975 = vunpack.c.l.b16 %v1820
    %v1976 = vunpack.c.h.b16 %v1820
    %v1977 = vunpack.c.l.b16 %v1821
    %v1978 = vunpack.c.h.b16 %v1821
    %v1979 = vunpack.c.l.b16 %v1822
    %v1980 = vunpack.c.h.b16 %v1822
    %v1981 = vunpack.c.l.b16 %v1823
    %v1982 = vunpack.c.h.b16 %v1823
    %v1983 = vunpack.c.l.b16 %v1824
    %v1984 = vunpack.c.h.b16 %v1824
    %v1985 = vunpack.c.l.b16 %v1825
    %v1986 = vunpack.c.h.b16 %v1825
    %v1987 = vunpack.c.l.b16 %v1826
    %v1988 = vunpack.c.h.b16 %v1826
    %v1989 = vunpack.c.l.b16 %v1827
    %v1990 = vunpack.c.h.b16 %v1827
    %v1991 = vunpack.c.l.b16 %v1828
    %v1992 = vunpack.c.h.b16 %v1828
    %v1993 = vunpack.c.l.b16 %v1829
    %v1994 = vunpack.c.h.b16 %v1829
    %v1995 = vunpack.c.l.b16 %v1830
    %v1996 = vunpack.c.h.b16 %v1830
    %v1997 = vunpack.c.l.b16 %v1831
    %v1998 = vunpack.c.h.b16 %v1831
    %v1999 = vunpack.c.l.b16 %v1832
    %v2000 = vunpack.c.h.b16 %v1832
    %v2001 = vunpack.c.l.b16 %v1833
    %v2002 = vunpack.c.h.b16 %v1833
    %v2003 = vunpack.c.l.b16 %v1834
    %v2004 = vunpack.c.h.b16 %v1834
    %v2005 = vunpack.c.l.b16 %v1835
    %v2006 = vunpack.c.h.b16 %v1835
    %v2007 = vunpack.c.l.b16 %v1836
    %v2008 = vunpack.c.h.b16 %v1836
    %v2009 = vunpack.c.l.b16 %v1837
    %v2010 = vunpack.c.h.b16 %v1837
    %v2011 = vunpack.c.l.b16 %v1838
    %v2012 = vunpack.c.h.b16 %v1838
    %v2013 = vunpack.c.l.b16 %v1839
    %v2014 = vunpack.c.h.b16 %v1839
    %v2015 = vunpack.c.l.b16 %v1840
    %v2016 = vunpack.c.h.b16 %v1840
    %v2017 = vunpack.c.l.b16 %v1841
    %v2018 = vunpack.c.h.b16 %v1841
    %v2019 = vunpack.c.l.b16 %v1842
    %v2020 = vunpack.c.h.b16 %v1842
    %v2021 = vunpack.c.l.b16 %v1843
    %v2022 = vunpack.c.h.b16 %v1843
    %v2023 = vunpack.c.l.b16 %v1844
    %v2024 = vunpack.c.h.b16 %v1844
    %v2025 = vunpack.c.l.b16 %v1845
    %v2026 = vunpack.c.h.b16 %v1845
    %v2027 = vunpack.c.l.b16 %v1846
    %v2028 = vunpack.c.h.b16 %v1846
    %v2029 = vunpack.c.l.b16 %v1847
    %v2030 = vunpack.c.h.b16 %v1847
    %v2031 = vunpack.c.l.b16 %v1848
    %v2032 = vunpack.c.h.b16 %v1848
    %v2033 = vunpack.c.l.b16 %v1849
    %v2034 = vunpack.c.h.b16 %v1849
    %v2035 = vunpack.c.l.b16 %v1850
    %v2036 = vunpack.c.h.b16 %v1850
    %v2037 = vunpack.c.l.b16 %v1851
    %v2038 = vunpack.c.h.b16 %v1851
    %v2039 = vunpack.c.l.b16 %v1852
    %v2040 = vunpack.c.h.b16 %v1852
    %v2041 = vunpack.c.l.b16 %v1853
    %v2042 = vunpack.c.h.b16 %v1853
    %v2043 = vunpack.c.l.b16 %v1854
    %v2044 = vunpack.c.h.b16 %v1854
    %v2045 = vunpack.c.l.b16 %v1855
    %v2046 = vunpack.c.h.b16 %v1855
    %v2047 = vunpack.c.l.b16 %v1856
    %v2048 = vunpack.c.h.b16 %v1856
    %v2049 = vunpack.c.l.b16 %v1857
    %v2050 = vunpack.c.h.b16 %v1857
    %v2051 = vunpack.c.l.b16 %v1858
    %v2052 = vunpack.c.h.b16 %v1858
    %v2053 = vunpack.c.l.b16 %v1859
    %v2054 = vunpack.c.h.b16 %v1859
    %v2055 = vunpack.c.l.b16 %v1860
    %v2056 = vunpack.c.h.b16 %v1860
    %v2057 = vunpack.c.l.b16 %v1861
    %v2058 = vunpack.c.h.b16 %v1861
    %v2059 = vunpack.c.l.b16 %v1862
    %v2060 = vunpack.c.h.b16 %v1862
    %v2061 = vunpack.c.l.b16 %v1863
    %v2062 = vunpack.c.h.b16 %v1863
    %v2063 = vunpack.c.l.b16 %v1864
    %v2064 = vunpack.c.h.b16 %v1864
    %v2065 = vunpack.c.l.b16 %v1865
    %v2066 = vunpack.c.h.b16 %v1865
    %v2067 = vunpack.c.l.b16 %v1866
    %v2068 = vunpack.c.h.b16 %v1866
    %v2069 = vunpack.c.l.b16 %v1867
    %v2070 = vunpack.c.h.b16 %v1867
    %v2071 = vunpack.c.l.b16 %v1868
    %v2072 = vunpack.c.h.b16 %v1868
    %v2073 = vpack.c.b16 %v1947, %v1945
    %v2074 = vpack.c.b16 %v1948, %v1946
    %v2075 = vpack.c.b16 %v1951, %v1949
    %v2076 = vpack.c.b16 %v1952, %v1950
    %v2077 = vpack.c.b16 %v1955, %v1953
    %v2078 = vpack.c.b16 %v1956, %v1954
    %v2079 = vpack.c.b16 %v1959, %v1957
    %v2080 = vpack.c.b16 %v1960, %v1958
    %v2081 = vpack.c.b16 %v1963, %v1961
    %v2082 = vpack.c.b16 %v1964, %v1962
    %v2083 = vpack.c.b16 %v1967, %v1965
    %v2084 = vpack.c.b16 %v1968, %v1966
    %v2085 = vpack.c.b16 %v1971, %v1969
    %v2086 = vpack.c.b16 %v1972, %v1970
    %v2087 = vpack.c.b16 %v1975, %v1973
    %v2088 = vpack.c.b16 %v1976, %v1974
    %v2089 = vpack.c.b16 %v1979, %v1977
    %v2090 = vpack.c.b16 %v1980, %v1978
    %v2091 = vpack.c.b16 %v1983, %v1981
    %v2092 = vpack.c.b16 %v1984, %v1982
    %v2093 = vpack.c.b16 %v1987, %v1985
    %v2094 = vpack.c.b16 %v1988, %v1986
    %v2095 = vpack.c.b16 %v1991, %v1989
    %v2096 = vpack.c.b16 %v1992, %v1990
    %v2097 = vpack.c.b16 %v1995, %v1993
    %v2098 = vpack.c.b16 %v1996, %v1994
    %v2099 = vpack.c.b16 %v1999, %v1997
    %v2100 = vpack.c.b16 %v2000, %v1998
    %v2101 = vpack.c.b16 %v2003, %v2001
    %v2102 = vpack.c.b16 %v2004, %v2002
    %v2103 = vpack.c.b16 %v2007, %v2005
    %v2104 = vpack.c.b16 %v2008, %v2006
    %v2105 = vpack.c.b16 %v2011, %v2009
    %v2106 = vpack.c.b16 %v2012, %v2010
    %v2107 = vpack.c.b16 %v2015, %v2013
    %v2108 = vpack.c.b16 %v2016, %v2014
    %v2109 = vpack.c.b16 %v2019, %v2017
    %v2110 = vpack.c.b16 %v2020, %v2018
    %v2111 = vpack.c.b16 %v2023, %v2021
    %v2112 = vpack.c.b16 %v2024, %v2022
    %v2113 = vpack.c.b16 %v2027, %v2025
    %v2114 = vpack.c.b16 %v2028, %v2026
    %v2115 = vpack.c.b16 %v2031, %v2029
    %v2116 = vpack.c.b16 %v2032, %v2030
    %v2117 = vpack.c.b16 %v2035, %v2033
    %v2118 = vpack.c.b16 %v2036, %v2034
    %v2119 = vpack.c.b16 %v2039, %v2037
    %v2120 = vpack.c.b16 %v2040, %v2038
    %v2121 = vpack.c.b16 %v2043, %v2041
    %v2122 = vpack.c.b16 %v2044, %v2042
    %v2123 = vpack.c.b16 %v2047, %v2045
    %v2124 = vpack.c.b16 %v2048, %v2046
    %v2125 = vpack.c.b16 %v2051, %v2049
    %v2126 = vpack.c.b16 %v2052, %v2050
    %v2127 = vpack.c.b16 %v2055, %v2053
    %v2128 = vpack.c.b16 %v2056, %v2054
    %v2129 = vpack.c.b16 %v2059, %v2057
    %v2130 = vpack.c.b16 %v2060, %v2058
    %v2131 = vpack.c.b16 %v2063, %v2061
    %v2132 = vpack.c.b16 %v2064, %v2062
    %v2133 = vpack.c.b16 %v2067, %v2065
    %v2134 = vpack.c.b16 %v2068, %v2066
    %v2135 = vpack.c.b16 %v2071, %v2069
    %v2136 = vpack.c.b16 %v2072, %v2070
    %2201 = vmatprep.subr.bf16.mxu0 %v2074
    %2202 = vmatpush1.bf16.msra.mxu0 %v2073
    %2203 = vmatprep.subr.bf16.mxu0 %v2076
    %2204 = vmatpush1.bf16.msra.mxu0 %v2075
    %2205 = vmatprep.subr.bf16.mxu0 %v2078
    %2206 = vmatpush1.bf16.msra.mxu0 %v2077
    %2207 = vmatprep.subr.bf16.mxu0 %v2080
    %2208 = vmatpush1.bf16.msra.mxu0 %v2079
    %2209 = vmatprep.subr.bf16.mxu0 %v2082
    %2210 = vmatpush1.bf16.msra.mxu0 %v2081
    %2211 = vmatprep.subr.bf16.mxu0 %v2084
    %2212 = vmatpush1.bf16.msra.mxu0 %v2083
    %2213 = vmatprep.subr.bf16.mxu0 %v2086
    %2214 = vmatpush1.bf16.msra.mxu0 %v2085
    %2215 = vmatprep.subr.bf16.mxu0 %v2088
    %2216 = vmatpush1.bf16.msra.mxu0 %v2087
    %2217 = vmatprep.subr.bf16.mxu0 %v2090
    %2218 = vmatpush1.bf16.msra.mxu0 %v2089
    %2219 = vmatprep.subr.bf16.mxu0 %v2092
    %2220 = vmatpush1.bf16.msra.mxu0 %v2091
    %2221 = vmatprep.subr.bf16.mxu0 %v2094
    %2222 = vmatpush1.bf16.msra.mxu0 %v2093
    %2223 = vmatprep.subr.bf16.mxu0 %v2096
    %2224 = vmatpush1.bf16.msra.mxu0 %v2095
    %2225 = vmatprep.subr.bf16.mxu0 %v2098
    %2226 = vmatpush1.bf16.msra.mxu0 %v2097
    %2227 = vmatprep.subr.bf16.mxu0 %v2100
    %2228 = vmatpush1.bf16.msra.mxu0 %v2099
    %2229 = vmatprep.subr.bf16.mxu0 %v2102
    %2230 = vmatpush1.bf16.msra.mxu0 %v2101
    %2231 = vmatprep.subr.bf16.mxu0 %v2104
    %2232 = vmatpush1.bf16.msra.mxu0 %v2103
    %2233 = vmatprep.mubr.bf16.mxu0 %v1802
    %2234 = vmatmul.mubr.bf16.gmra.mrb[0].mxu0 %v1801
    %v2235 = vpop.f32.mrb[0].mxu0
    %v2236 = vadd.f32 %v1874, %v2235
    %v2237 = vpop.f32.mrb[0].mxu0
    %v2238 = vadd.f32 %v1878, %v2237
    %v2239 = vpop.f32.mrb[0].mxu0
    %v2240 = vpop.f32.mrb[0].mxu0
    %2241 = vdwg.mxu0
    %2242 = vmatprep.subr.bf16.mxu0 %v2106
    %2243 = vmatpush1.bf16.msra.mxu0 %v2105
    %2244 = vmatprep.subr.bf16.mxu0 %v2108
    %2245 = vmatpush1.bf16.msra.mxu0 %v2107
    %2246 = vmatprep.subr.bf16.mxu0 %v2110
    %2247 = vmatpush1.bf16.msra.mxu0 %v2109
    %2248 = vmatprep.subr.bf16.mxu0 %v2112
    %2249 = vmatpush1.bf16.msra.mxu0 %v2111
    %2250 = vmatprep.subr.bf16.mxu0 %v2114
    %2251 = vmatpush1.bf16.msra.mxu0 %v2113
    %2252 = vmatprep.subr.bf16.mxu0 %v2116
    %2253 = vmatpush1.bf16.msra.mxu0 %v2115
    %2254 = vmatprep.subr.bf16.mxu0 %v2118
    %2255 = vmatpush1.bf16.msra.mxu0 %v2117
    %2256 = vmatprep.subr.bf16.mxu0 %v2120
    %2257 = vmatpush1.bf16.msra.mxu0 %v2119
    %2258 = vmatprep.subr.bf16.mxu0 %v2122
    %2259 = vmatpush1.bf16.msra.mxu0 %v2121
    %2260 = vmatprep.subr.bf16.mxu0 %v2124
    %2261 = vmatpush1.bf16.msra.mxu0 %v2123
    %2262 = vmatprep.subr.bf16.mxu0 %v2126
    %2263 = vmatpush1.bf16.msra.mxu0 %v2125
    %2264 = vmatprep.subr.bf16.mxu0 %v2128
    %2265 = vmatpush1.bf16.msra.mxu0 %v2127
    %2266 = vmatprep.subr.bf16.mxu0 %v2130
    %2267 = vmatpush1.bf16.msra.mxu0 %v2129
    %2268 = vmatprep.subr.bf16.mxu0 %v2132
    %2269 = vmatpush1.bf16.msra.mxu0 %v2131
    %2270 = vmatprep.subr.bf16.mxu0 %v2134
    %2271 = vmatpush1.bf16.msra.mxu0 %v2133
    %2272 = vmatprep.subr.bf16.mxu0 %v2136
    %2273 = vmatpush1.bf16.msra.mxu0 %v2135
    %2274 = vmatprep.mubr.bf16.mxu0 %v1804
    %2275 = vmatmul.mubr.bf16.gmra.mrb[0].mxu0 %v1803
    %v2276 = vpop.f32.mrb[0].mxu0
    %v2277 = vadd.f32 %v2236, %v2276
    %v2278 = vpop.f32.mrb[0].mxu0
    %v2279 = vadd.f32 %v2238, %v2278
    %v2280 = vpop.f32.mrb[0].mxu0
    %v2281 = vpop.f32.mrb[0].mxu0
    %2282 = vdwg.mxu0
    %v2283 = vmax.f32 %v2277, 0.0
    %v2284 = vmax.f32 %v2279, 0.0
    %v2285 = vpack.c.bf16 %v2283, %v2283
    %v2286 = vpack.c.bf16 %v2284, %v2284
    %v2287 = vld [vmem:[%s5] sm:$0xf]
    %v2288 = vld [vmem:[%s5 + $0x4] sm:$0xf]
    %v2289 = vld [vmem:[%s5 + $0x8] sm:$0xf]
    %v2290 = vld [vmem:[%s5 + $0xc] sm:$0xf]
    %v2291 = vld [vmem:[%s5 + $0x10] sm:$0xf]
    %v2292 = vld [vmem:[%s5 + $0x14] sm:$0xf]
    %v2293 = vld [vmem:[%s5 + $0x18] sm:$0xf]
    %v2294 = vld [vmem:[%s5 + $0x1c] sm:$0xf]
    %v2295 = vld [vmem:[%s5 + $0x20] sm:$0xf]
    %v2296 = vld [vmem:[%s5 + $0x24] sm:$0xf]
    %v2297 = vld [vmem:[%s5 + $0x28] sm:$0xf]
    %v2298 = vld [vmem:[%s5 + $0x2c] sm:$0xf]
    %v2299 = vld [vmem:[%s5 + $0x30] sm:$0xf]
    %v2300 = vld [vmem:[%s5 + $0x34] sm:$0xf]
    %v2301 = vld [vmem:[%s5 + $0x38] sm:$0xf]
    %v2302 = vld [vmem:[%s5 + $0x3c] sm:$0xf]
    %v2303 = vld [vmem:[%s5 + $0x40] sm:$0xf]
    %v2304 = vld [vmem:[%s5 + $0x44] sm:$0xf]
    %v2305 = vld [vmem:[%s5 + $0x48] sm:$0xf]
    %v2306 = vld [vmem:[%s5 + $0x4c] sm:$0xf]
    %v2307 = vld [vmem:[%s5 + $0x50] sm:$0xf]
    %v2308 = vld [vmem:[%s5 + $0x54] sm:$0xf]
    %v2309 = vld [vmem:[%s5 + $0x58] sm:$0xf]
    %v2310 = vld [vmem:[%s5 + $0x5c] sm:$0xf]
    %v2311 = vld [vmem:[%s5 + $0x60] sm:$0xf]
    %v2312 = vld [vmem:[%s5 + $0x64] sm:$0xf]
    %v2313 = vld [vmem:[%s5 + $0x68] sm:$0xf]
    %v2314 = vld [vmem:[%s5 + $0x6c] sm:$0xf]
    %v2315 = vld [vmem:[%s5 + $0x70] sm:$0xf]
    %v2316 = vld [vmem:[%s5 + $0x74] sm:$0xf]
    %v2317 = vld [vmem:[%s5 + $0x78] sm:$0xf]
    %v2318 = vld [vmem:[%s5 + $0x7c] sm:$0xf]
    %v2319 = vld [vmem:[%s6] sm:$0x1]
    %v2321 = vlaneseq
    %v2322 = vshrl.u32 %v2321, 7
    %v2323 = vsub.s32 0, %v2322
    %v2324 = vrot.slane %v2319, %v2323
    %v2358 = vunpack.c.l.b16 %v2287
    %v2359 = vunpack.c.l.b16 %v2288
    %v2360 = vunpack.c.l.b16 %v2289
    %v2361 = vunpack.c.l.b16 %v2290
    %v2362 = vunpack.c.l.b16 %v2291
    %v2363 = vunpack.c.l.b16 %v2292
    %v2364 = vunpack.c.l.b16 %v2293
    %v2365 = vunpack.c.l.b16 %v2294
    %v2366 = vunpack.c.l.b16 %v2295
    %v2367 = vunpack.c.l.b16 %v2296
    %v2368 = vunpack.c.l.b16 %v2297
    %v2369 = vunpack.c.l.b16 %v2298
    %v2370 = vunpack.c.l.b16 %v2299
    %v2371 = vunpack.c.l.b16 %v2300
    %v2372 = vunpack.c.l.b16 %v2301
    %v2373 = vunpack.c.l.b16 %v2302
    %v2374 = vunpack.c.l.b16 %v2303
    %v2375 = vunpack.c.l.b16 %v2304
    %v2376 = vunpack.c.l.b16 %v2305
    %v2377 = vunpack.c.l.b16 %v2306
    %v2378 = vunpack.c.l.b16 %v2307
    %v2379 = vunpack.c.l.b16 %v2308
    %v2380 = vunpack.c.l.b16 %v2309
    %v2381 = vunpack.c.l.b16 %v2310
    %v2382 = vunpack.c.l.b16 %v2311
    %v2383 = vunpack.c.l.b16 %v2312
    %v2384 = vunpack.c.l.b16 %v2313
    %v2385 = vunpack.c.l.b16 %v2314
    %v2386 = vunpack.c.l.b16 %v2315
    %v2387 = vunpack.c.l.b16 %v2316
    %v2388 = vunpack.c.l.b16 %v2317
    %v2389 = vunpack.c.l.b16 %v2318
    %v2390 = vpack.c.b16 %v2359, %v2358
    %v2391 = vpack.c.b16 %v2361, %v2360
    %v2392 = vpack.c.b16 %v2363, %v2362
    %v2393 = vpack.c.b16 %v2365, %v2364
    %v2394 = vpack.c.b16 %v2367, %v2366
    %v2395 = vpack.c.b16 %v2369, %v2368
    %v2396 = vpack.c.b16 %v2371, %v2370
    %v2397 = vpack.c.b16 %v2373, %v2372
    %v2398 = vpack.c.b16 %v2375, %v2374
    %v2399 = vpack.c.b16 %v2377, %v2376
    %v2400 = vpack.c.b16 %v2379, %v2378
    %v2401 = vpack.c.b16 %v2381, %v2380
    %v2402 = vpack.c.b16 %v2383, %v2382
    %v2403 = vpack.c.b16 %v2385, %v2384
    %v2404 = vpack.c.b16 %v2387, %v2386
    %v2405 = vpack.c.b16 %v2389, %v2388
    %2422 = vmatprep.subr.bf16.mxu0 0
    %2423 = vmatpush1.bf16.msra.mxu0 %v2390
    %2424 = vmatprep.subr.bf16.mxu0 0
    %2425 = vmatpush1.bf16.msra.mxu0 %v2391
    %2426 = vmatprep.subr.bf16.mxu0 0
    %2427 = vmatpush1.bf16.msra.mxu0 %v2392
    %2428 = vmatprep.subr.bf16.mxu0 0
    %2429 = vmatpush1.bf16.msra.mxu0 %v2393
    %2430 = vmatprep.subr.bf16.mxu0 0
    %2431 = vmatpush1.bf16.msra.mxu0 %v2394
    %2432 = vmatprep.subr.bf16.mxu0 0
    %2433 = vmatpush1.bf16.msra.mxu0 %v2395
    %2434 = vmatprep.subr.bf16.mxu0 0
    %2435 = vmatpush1.bf16.msra.mxu0 %v2396
    %2436 = vmatprep.subr.bf16.mxu0 0
    %2437 = vmatpush1.bf16.msra.mxu0 %v2397
    %2438 = vmatprep.subr.bf16.mxu0 0
    %2439 = vmatpush1.bf16.msra.mxu0 %v2398
    %2440 = vmatprep.subr.bf16.mxu0 0
    %2441 = vmatpush1.bf16.msra.mxu0 %v2399
    %2442 = vmatprep.subr.bf16.mxu0 0
    %2443 = vmatpush1.bf16.msra.mxu0 %v2400
    %2444 = vmatprep.subr.bf16.mxu0 0
    %2445 = vmatpush1.bf16.msra.mxu0 %v2401
    %2446 = vmatprep.subr.bf16.mxu0 0
    %2447 = vmatpush1.bf16.msra.mxu0 %v2402
    %2448 = vmatprep.subr.bf16.mxu0 0
    %2449 = vmatpush1.bf16.msra.mxu0 %v2403
    %2450 = vmatprep.subr.bf16.mxu0 0
    %2451 = vmatpush1.bf16.msra.mxu0 %v2404
    %2452 = vmatprep.subr.bf16.mxu0 0
    %2453 = vmatpush1.bf16.msra.mxu0 %v2405
    %2454 = vmatprep.mubr.bf16.mxu0 %v2286
    %2455 = vmatmul.mubr.bf16.gmra.mrb[0].mxu0 %v2285
    %v2456 = vpop.f32.mrb[0].mxu0
    %v2457 = vadd.f32 %v2324, %v2456
    %v2458 = vpop.f32.mrb[0].mxu0
    %v2459 = vpop.f32.mrb[0].mxu0
    %v2460 = vpop.f32.mrb[0].mxu0
    %2461 = vdwg.mxu0
    %v2462 = vmax.f32 %v2457, 0.0
    %v2463 = vpack.c.bf16 %v2462, %v2462
    %v2464 = vld [vmem:[#allocation6] sm:$0xf]
    %v2465 = vld [vmem:[#allocation6 + $0x4] sm:$0xf]
    %v2466 = vld [vmem:[#allocation6 + $0x8] sm:$0xf]
    %v2467 = vld [vmem:[#allocation6 + $0xc] sm:$0xf]
    %v2468 = vld [vmem:[#allocation6 + $0x10] sm:$0xf]
    %v2469 = vld [vmem:[#allocation6 + $0x14] sm:$0xf]
    %v2470 = vld [vmem:[#allocation6 + $0x18] sm:$0xf]
    %v2471 = vld [vmem:[#allocation6 + $0x1c] sm:$0xf]
    %v2472 = vld [vmem:[#allocation6 + $0x20] sm:$0xf]
    %v2473 = vld [vmem:[#allocation6 + $0x24] sm:$0xf]
    %v2474 = vld [vmem:[#allocation6 + $0x28] sm:$0xf]
    %v2475 = vld [vmem:[#allocation6 + $0x2c] sm:$0xf]
    %v2476 = vld [vmem:[#allocation6 + $0x30] sm:$0xf]
    %v2477 = vld [vmem:[#allocation6 + $0x34] sm:$0xf]
    %v2478 = vld [vmem:[#allocation6 + $0x38] sm:$0xf]
    %v2479 = vld [vmem:[#allocation6 + $0x3c] sm:$0xf]
    %v2480 = vld [vmem:[%s8] sm:$0x1]
    %v2482 = vlaneseq
    %v2483 = vshrl.u32 %v2482, 7
    %v2484 = vsub.s32 0, %v2483
    %v2485 = vrot.slane %v2480, %v2484
    %v2503 = vunpack.c.l.b16 %v2464
    %v2504 = vunpack.c.l.b16 %v2465
    %v2505 = vunpack.c.l.b16 %v2466
    %v2506 = vunpack.c.l.b16 %v2467
    %v2507 = vunpack.c.l.b16 %v2468
    %v2508 = vunpack.c.l.b16 %v2469
    %v2509 = vunpack.c.l.b16 %v2470
    %v2510 = vunpack.c.l.b16 %v2471
    %v2511 = vunpack.c.l.b16 %v2472
    %v2512 = vunpack.c.l.b16 %v2473
    %v2513 = vunpack.c.l.b16 %v2474
    %v2514 = vunpack.c.l.b16 %v2475
    %v2515 = vunpack.c.l.b16 %v2476
    %v2516 = vunpack.c.l.b16 %v2477
    %v2517 = vunpack.c.l.b16 %v2478
    %v2518 = vunpack.c.l.b16 %v2479
    %v2519 = vpack.c.b16 %v2504, %v2503
    %v2520 = vpack.c.b16 %v2506, %v2505
    %v2521 = vpack.c.b16 %v2508, %v2507
    %v2522 = vpack.c.b16 %v2510, %v2509
    %v2523 = vpack.c.b16 %v2512, %v2511
    %v2524 = vpack.c.b16 %v2514, %v2513
    %v2525 = vpack.c.b16 %v2516, %v2515
    %v2526 = vpack.c.b16 %v2518, %v2517
    %2535 = vmatprep.subr.bf16.mxu0 0
    %2536 = vmatpush1.bf16.msra.mxu0 %v2519
    %2537 = vmatprep.subr.bf16.mxu0 0
    %2538 = vmatpush1.bf16.msra.mxu0 %v2520
    %2539 = vmatprep.subr.bf16.mxu0 0
    %2540 = vmatpush1.bf16.msra.mxu0 %v2521
    %2541 = vmatprep.subr.bf16.mxu0 0
    %2542 = vmatpush1.bf16.msra.mxu0 %v2522
    %2543 = vmatprep.subr.bf16.mxu0 0
    %2544 = vmatpush1.bf16.msra.mxu0 %v2523
    %2545 = vmatprep.subr.bf16.mxu0 0
    %2546 = vmatpush1.bf16.msra.mxu0 %v2524
    %2547 = vmatprep.subr.bf16.mxu0 0
    %2548 = vmatpush1.bf16.msra.mxu0 %v2525
    %2549 = vmatprep.subr.bf16.mxu0 0
    %2550 = vmatpush1.bf16.msra.mxu0 %v2526
    %2551 = vmatprep.subr.bf16.mxu0 0
    %2552 = vmatpush1.bf16.msra.mxu0 0
    %2553 = vmatprep.subr.bf16.mxu0 0
    %2554 = vmatpush1.bf16.msra.mxu0 0
    %2555 = vmatprep.subr.bf16.mxu0 0
    %2556 = vmatpush1.bf16.msra.mxu0 0
    %2557 = vmatprep.subr.bf16.mxu0 0
    %2558 = vmatpush1.bf16.msra.mxu0 0
    %2559 = vmatprep.subr.bf16.mxu0 0
    %2560 = vmatpush1.bf16.msra.mxu0 0
    %2561 = vmatprep.subr.bf16.mxu0 0
    %2562 = vmatpush1.bf16.msra.mxu0 0
    %2563 = vmatprep.subr.bf16.mxu0 0
    %2564 = vmatpush1.bf16.msra.mxu0 0
    %2565 = vmatprep.subr.bf16.mxu0 0
    %2566 = vmatpush1.bf16.msra.mxu0 0
    %2567 = vmatprep.mubr.bf16.mxu0 0
    %2568 = vmatmul.mubr.bf16.gmra.mrb[0].mxu0 %v2463
    %v2569 = vpop.f32.mrb[0].mxu0
    %v2570 = vadd.f32 %v2485, %v2569
    %v2571 = vpop.f32.mrb[0].mxu0
    %v2572 = vpop.f32.mrb[0].mxu0
    %v2573 = vpop.f32.mrb[0].mxu0
    %2574 = vdwg.mxu0
    %2575 = vst [vmem:[%s9] sm:$0xff] %v2570
    // Predicated region
    $region50: #{_lambda_.1} parent=1 // pred_check
      _
    $region51: #{_lambda_.1} parent=1 // pred_check_branch
      %2577 = sbr.rel (0) target = $region53
    $region52: #{_lambda_.1} parent=1 // pred_region
      _
    $region53: #{_lambda_.1} parent=1 // pred_fallthru
      _
    // Predicated region
    $region54: #{_lambda_.1} parent=1 // pred_check
      _
    $region55: #{_lambda_.1} parent=1 // pred_check_branch
      %2579 = sbr.rel (0) target = $region57
    $region56: #{_lambda_.1} parent=1 // pred_region
      _
    $region57: #{_lambda_.1} parent=1 // pred_fallthru
      _
    %2580 = vsyncpa [#allocation3], 1
    %2581 = vsyncpa [#allocation5], 1

</llo_original>
